<compile_context>
chip_gen: v7x
topology: tpu7x:2x2x1
jax: 0.10.0
libtpu: 0.0.40
codegen_flags: <defaults>
</compile_context>

<pallas_src>
import numpy as np
import jax
import jax.numpy as jnp
from jax import lax
from jax.experimental import pallas as pl
from jax.experimental.pallas import tpu as pltpu


def _round_up(n, m):
    return ((n + m - 1) // m) * m


# ----------------------------------------------------------------------------
# Pallas kernel: one (batch-tile, time-chunk) grid step of a bidirectional
# masked GRU (packed-sequence semantics, h0 = 0) fused with the topic-code
# matmul. Hidden states carry across the "arbitrary" time-chunk axis in VMEM.
# ----------------------------------------------------------------------------
def encoder_kernel(emb_f_ref, emb_b_ref, lens_ref,
                   wif_ref, wib_ref, whbd_ref,
                   bif_ref, bib_ref, bh_ref,
                   feat_ref, topicsT_ref,
                   out_f_ref, out_b_ref, hid_ref, codes_ref,
                   gif_scr, gib_scr, hf_scr, hb_scr):
    Tc, Bt, Hp = out_f_ref.shape
    G = 3 * Hp
    c = pl.program_id(1)
    nc = pl.num_programs(1)

    # ---- per-batch-tile init (first time chunk) ----------------------------
    @pl.when(c == 0)
    def _():
        hf_scr[...] = jnp.zeros_like(hf_scr)
        hb_scr[...] = jnp.zeros_like(hb_scr)
        # Topic codes: feat @ topics^T — folded in to reuse MXU slack.
        codes_ref[...] = jnp.dot(feat_ref[...], topicsT_ref[...],
                                 preferred_element_type=jnp.float32)

    # ---- hoisted per-chunk input projections (both directions) -------------
    # One MXU matmul per direction over the whole chunk, written straight into
    # bf16 scratch (no split copy of a fused result).
    emb_f = emb_f_ref[...].reshape(Tc * Bt, Hp).astype(jnp.bfloat16)
    emb_b = emb_b_ref[...].reshape(Tc * Bt, Hp).astype(jnp.bfloat16)
    gif_scr[...] = (jnp.dot(emb_f, wif_ref[...],
                            preferred_element_type=jnp.float32)
                    + bif_ref[...]).astype(jnp.bfloat16).reshape(Tc, Bt, G)
    gib_scr[...] = (jnp.dot(emb_b, wib_ref[...],
                            preferred_element_type=jnp.float32)
                    + bib_ref[...]).astype(jnp.bfloat16).reshape(Tc, Bt, G)

    # Hoist loop-invariant operands out of the recurrence.
    wh = whbd_ref[...]            # (2*Hp, 2*G) bf16 block-diagonal fwd|bwd
    bh = bh_ref[...]              # (1, 2*G)    f32
    lens = lens_ref[...]          # (Bt, 1)     int32
    t0_f = c * Tc                 # global time offset of the forward chunk
    t0_b = (nc - 1 - c) * Tc      # global time offset of the backward chunk

    def gru_update(gi, gh, h):
        r = jax.nn.sigmoid(gi[:, :Hp] + gh[:, :Hp])
        z = jax.nn.sigmoid(gi[:, Hp:2 * Hp] + gh[:, Hp:2 * Hp])
        n = jnp.tanh(gi[:, 2 * Hp:] + r * gh[:, 2 * Hp:])
        return n + z * (h - n)                      # == (1-z)*n + z*h

    def body(t, carry):
        hf, hb = carry
        tb = Tc - 1 - t                             # backward walks in reverse

        gi_f = gif_scr[t].astype(jnp.float32)       # (Bt, G), bias included
        gi_b = gib_scr[tb].astype(jnp.float32)

        # Single fused recurrent matmul: (Bt, 2*Hp) @ (2*Hp, 2*G), K = 2*Hp.
        h_cat = jnp.concatenate([hf, hb], axis=-1).astype(jnp.bfloat16)
        gh = jnp.dot(h_cat, wh, preferred_element_type=jnp.float32) + bh

        hf_new = gru_update(gi_f, gh[:, :G], hf)
        hb_new = gru_update(gi_b, gh[:, G:], hb)

        mf = lens > (t0_f + t)                      # (Bt, 1) bool
        mb = lens > (t0_b + tb)

        zero = jnp.zeros_like(hf_new)
        out_f_ref[t] = jnp.where(mf, hf_new, zero)  # padded steps -> 0
        out_b_ref[tb] = jnp.where(mb, hb_new, zero)

        hf = jnp.where(mf, hf_new, hf)              # freeze past sequence end
        hb = jnp.where(mb, hb_new, hb)
        return hf, hb

    unroll = 4 if Tc % 4 == 0 else (2 if Tc % 2 == 0 else 1)
    hf, hb = lax.fori_loop(0, Tc, body, (hf_scr[...], hb_scr[...]),
                           unroll=unroll)

    hf_scr[...] = hf                     # carry across time chunks
    hb_scr[...] = hb
    hid_ref[0] = hf                      # resident block: last chunk's write
    hid_ref[1] = hb                      #   is the final hidden state


# ----------------------------------------------------------------------------
# Wrapper helpers
# ----------------------------------------------------------------------------
def _pack_gate_w(w, H, Hp):
    """(3H, H) PyTorch gate-stacked weight -> transposed, gate-aligned (Hp, 3Hp)."""
    out = jnp.zeros((Hp, 3 * Hp), jnp.float32)
    for g in range(3):
        out = out.at[:H, g * Hp:g * Hp + H].set(w[g * H:(g + 1) * H, :].T)
    return out


def _pack_gate_b(b, H, Hp):
    out = jnp.zeros((1, 3 * Hp), jnp.float32)
    for g in range(3):
        out = out.at[0, g * Hp:g * Hp + H].set(b[g * H:(g + 1) * H])
    return out


def _pick_b_tile(B):
    """Batch tile: as many MXU LHS rows as possible (up to 128) while keeping
    >= 2 'parallel' grid iterations whenever the batch allows it."""
    Bp = _round_up(B, 8)
    if Bp < 16:
        return 8, Bp
    bt = min(128, (Bp // 2) // 8 * 8)
    return bt, _round_up(Bp, bt)


def _pick_t_chunk(T, t_chunk):
    if t_chunk is None:
        # TODO(synk): tune per generation (v7x: 64 MiB VMEM -> smaller chunks).
        t_chunk = min(64, _round_up(T, 4))
    return t_chunk, _round_up(T, t_chunk)


def _encoder_pallas(emb, lens, wi_f, wi_b, wh_bd, bi_f, bi_b, bh_cat,
                    feat, topicsT, *, b_tile, t_chunk):
    Tp, Bp, Hp = emb.shape
    Fp, Kp = topicsT.shape
    nb = Bp // b_tile
    nc = Tp // t_chunk
    G = 3 * Hp

    grid_spec = pltpu.PrefetchScalarGridSpec(
        num_scalar_prefetch=0,
        grid=(nb, nc),
        in_specs=[
            pl.BlockSpec((t_chunk, b_tile, Hp), lambda b, c: (c, b, 0)),           # emb (fwd chunk)
            pl.BlockSpec((t_chunk, b_tile, Hp), lambda b, c: (nc - 1 - c, b, 0)),  # emb (bwd chunk)
            pl.BlockSpec((b_tile, 1), lambda b, c: (b, 0)),                        # lengths
            pl.BlockSpec((Hp, G), lambda b, c: (0, 0)),                            # W_ih fwd
            pl.BlockSpec((Hp, G), lambda b, c: (0, 0)),                            # W_ih bwd
            pl.BlockSpec((2 * Hp, 2 * G), lambda b, c: (0, 0)),                    # W_hh block-diag
            pl.BlockSpec((1, G), lambda b, c: (0, 0)),                             # b_ih fwd
            pl.BlockSpec((1, G), lambda b, c: (0, 0)),                             # b_ih bwd
            pl.BlockSpec((1, 2 * G), lambda b, c: (0, 0)),                         # b_hh fwd|bwd
            pl.BlockSpec((b_tile, Fp), lambda b, c: (b, 0)),                       # features
            pl.BlockSpec((Fp, Kp), lambda b, c: (0, 0)),                           # topics^T
        ],
        out_specs=[
            pl.BlockSpec((t_chunk, b_tile, Hp), lambda b, c: (c, b, 0)),           # fwd outputs
            pl.BlockSpec((t_chunk, b_tile, Hp), lambda b, c: (nc - 1 - c, b, 0)),  # bwd outputs
            pl.BlockSpec((2, b_tile, Hp), lambda b, c: (0, b, 0)),                 # final hidden
            pl.BlockSpec((b_tile, Kp), lambda b, c: (b, 0)),                       # codes
        ],
        scratch_shapes=[
            pltpu.VMEM((t_chunk, b_tile, G), jnp.bfloat16),  # fwd input-gate preacts
            pltpu.VMEM((t_chunk, b_tile, G), jnp.bfloat16),  # bwd input-gate preacts
            pltpu.VMEM((b_tile, Hp), jnp.float32),           # carried fwd hidden
            pltpu.VMEM((b_tile, Hp), jnp.float32),           # carried bwd hidden
        ],
    )

    return pl.pallas_call(
        encoder_kernel,
        out_shape=(
            jax.ShapeDtypeStruct((Tp, Bp, Hp), jnp.float32),
            jax.ShapeDtypeStruct((Tp, Bp, Hp), jnp.float32),
            jax.ShapeDtypeStruct((2, Bp, Hp), jnp.float32),
            jax.ShapeDtypeStruct((Bp, Kp), jnp.float32),
        ),
        grid_spec=grid_spec,
        compiler_params=pltpu.CompilerParams(
            dimension_semantics=("parallel", "arbitrary"),
            vmem_limit_bytes=32 * 1024 * 1024),
    )(emb, emb, lens, wi_f, wi_b, wh_bd, bi_f, bi_b, bh_cat, feat, topicsT)


def build_features(input_seq, input_lengths, F):
    """Stand-in for the nmfdict word matching in calculate_codes.

    The original matches vocabulary strings against feature names loaded from
    'delta-nmf.npz' (file I/O + string compare) to build a multi-hot vector.
    Here we deterministically bucket token ids into F feature slots.
    """
    # TODO(synk): exact nmfdict string matching has no Pallas equivalent.
    T, B = input_seq.shape
    valid = jnp.arange(T)[:, None] < input_lengths[None, :]          # (T, B)
    ids = jnp.where(valid, input_seq % F, F)                         # pad -> bucket F
    onehot = jax.nn.one_hot(ids, F + 1, dtype=jnp.float32)[:, :, :F]
    return jnp.clip(jnp.sum(onehot, axis=0), 0.0, 1.0)               # (B, F)


def encoder_rnn_forward(input_seq, input_lengths, params, *, t_chunk=None):
    """Pallas implementation of EncoderRNN.forward (hidden=None)."""
    T, B = input_seq.shape
    H = params["embedding"].shape[1]
    K, F = params["topics"].shape

    Hp = _round_up(H, 128)
    Fp = _round_up(F, 128)
    Kp = _round_up(K, 128)
    b_tile, Bp = _pick_b_tile(B)
    Tc, Tp = _pick_t_chunk(T, t_chunk)

    # Embedding gather (plain-JAX glue), padded lane-dense + T-chunk padded.
    embedded = params["embedding"][input_seq]                        # (T, B, H)
    emb_p = jnp.zeros((Tp, Bp, Hp), jnp.float32).at[:T, :B, :H].set(embedded)

    lens_p = jnp.zeros((Bp, 1), jnp.int32).at[:B, 0].set(input_lengths)

    # Pack GRU weights: transposed, gate-aligned to Hp, bf16 for the MXU.
    # TODO(synk): for H < 64 the per-gate 128-lane padding wastes ~4x MXU
    # columns and gi scratch; pack all gates into one 128-lane tile (or run the
    # cell on the VPU) if such a tiny H is ever deployed at scale.
    wi_f = _pack_gate_w(params["w_ih_f"], H, Hp).astype(jnp.bfloat16)
    wi_b = _pack_gate_w(params["w_ih_b"], H, Hp).astype(jnp.bfloat16)
    # Block-diagonal recurrent weight: concat([hf, hb]) @ wh_bd computes both
    # directions' recurrent matmuls as a single K = 2*Hp MXU dot per timestep.
    whf = _pack_gate_w(params["w_hh_f"], H, Hp)
    whb = _pack_gate_w(params["w_hh_b"], H, Hp)
    wh_bd = (jnp.zeros((2 * Hp, 6 * Hp), jnp.float32)
             .at[:Hp, :3 * Hp].set(whf)
             .at[Hp:, 3 * Hp:].set(whb)).astype(jnp.bfloat16)
    bi_f = _pack_gate_b(params["b_ih_f"], H, Hp)
    bi_b = _pack_gate_b(params["b_ih_b"], H, Hp)
    bh_cat = jnp.concatenate([_pack_gate_b(params["b_hh_f"], H, Hp),
                              _pack_gate_b(params["b_hh_b"], H, Hp)], axis=1)

    # Multi-hot features + pre-transposed topics for the codes matmul (f32).
    feat = build_features(input_seq, input_lengths, F)               # (B, F)
    feat_p = jnp.zeros((Bp, Fp), jnp.float32).at[:B, :F].set(feat)
    topics_T = jnp.zeros((Fp, Kp), jnp.float32).at[:F, :K].set(params["topics"].T)

    out_f, out_b, hid_p, codes_p = _encoder_pallas(
        emb_p, lens_p, wi_f, wi_b, wh_bd, bi_f, bi_b, bh_cat, feat_p, topics_T,
        b_tile=b_tile, t_chunk=Tc)

    outputs = (out_f + out_b)[:T, :B, :H]        # sum directions (module semantics)
    hidden = hid_p[:, :B, :H]
    codes = codes_p[:B, :K][:, :, None]          # (B, K, 1)
    return outputs, hidden, codes


# ----------------------------------------------------------------------------
# Pure-JAX reference (correctness check, f32 everywhere)
# ----------------------------------------------------------------------------
def bigru_reference(emb, lengths, p):
    T, B, H = emb.shape

    def cell(x, h, w_ih, w_hh, b_ih, b_hh):
        gi = x @ w_ih.T + b_ih
        gh = h @ w_hh.T + b_hh
        r = jax.nn.sigmoid(gi[:, :H] + gh[:, :H])
        z = jax.nn.sigmoid(gi[:, H:2 * H] + gh[:, H:2 * H])
        n = jnp.tanh(gi[:, 2 * H:] + r * gh[:, 2 * H:])
        return (1.0 - z) * n + z * h

    mask = (jnp.arange(T)[:, None] < lengths[None, :]).astype(jnp.float32)
    hf = jnp.zeros((B, H), jnp.float32)
    hb = jnp.zeros((B, H), jnp.float32)
    out_f = []
    for t in range(T):
        m = mask[t][:, None]
        hn = cell(emb[t], hf, p["w_ih_f"], p["w_hh_f"], p["b_ih_f"], p["b_hh_f"])
        hf = m * hn + (1 - m) * hf
        out_f.append(m * hf)
    out_b = [None] * T
    for t in range(T - 1, -1, -1):
        m = mask[t][:, None]
        hn = cell(emb[t], hb, p["w_ih_b"], p["w_hh_b"], p["b_ih_b"], p["b_hh_b"])
        hb = m * hn + (1 - m) * hb
        out_b[t] = m * hb
    return jnp.stack(out_f) + jnp.stack(out_b), jnp.stack([hf, hb])


# ----------------------------------------------------------------------------
# Main
# ----------------------------------------------------------------------------
if __name__ == "__main__":
    T, B, H = 8, 2, 32          # seq len, batch, hidden_size
    V = 50                      # vocab size
    K, F = 6, 40                # num topics, num nmf features

    key = jax.random.PRNGKey(0)
    keys = jax.random.split(key, 12)

    def rnd(k, shape):
        return (0.1 * jax.random.normal(k, shape)).astype(jnp.float32)

    params = {
        "embedding": rnd(keys[0], (V, H)),
        "topics":    rnd(keys[1], (K, F)),
        # PyTorch-layout GRU parameters (gates [r, z, n] stacked on dim 0)
        "w_ih_f": rnd(keys[2], (3 * H, H)),
        "w_hh_f": rnd(keys[3], (3 * H, H)),
        "b_ih_f": rnd(keys[4], (3 * H,)),
        "b_hh_f": rnd(keys[5], (3 * H,)),
        "w_ih_b": rnd(keys[6], (3 * H, H)),
        "w_hh_b": rnd(keys[7], (3 * H, H)),
        "b_ih_b": rnd(keys[8], (3 * H,)),
        "b_hh_b": rnd(keys[9], (3 * H,)),
    }

    input_seq = jax.random.randint(keys[10], (T, B), 1, V, dtype=jnp.int32)
    input_lengths = jnp.array([T, T - 2], dtype=jnp.int32)   # sorted descending

    # t_chunk=4 -> 2 time chunks: exercises the carried-state "arbitrary" axis.
    outputs, hidden, codes = jax.block_until_ready(
        encoder_rnn_forward(input_seq, input_lengths, params, t_chunk=4))

    assert outputs.shape == (T, B, H)
    assert hidden.shape == (2, B, H)
    assert codes.shape == (B, K, 1)

    # Correctness check of the fused Pallas kernel against pure-JAX references.
    emb_ref = params["embedding"][input_seq]
    ref_out, ref_hid = bigru_reference(emb_ref, input_lengths, params)
    # bf16 MXU operands / bf16 gi scratch -> loosened tolerance (state in f32).
    np.testing.assert_allclose(np.asarray(outputs), np.asarray(ref_out),
                               rtol=2e-2, atol=2e-2)
    np.testing.assert_allclose(np.asarray(hidden), np.asarray(ref_hid),
                               rtol=2e-2, atol=2e-2)

    feat_chk = build_features(input_seq, input_lengths, F)
    ref_codes = (feat_chk @ params["topics"].T)[:, :, None]
    np.testing.assert_allclose(np.asarray(codes), np.asarray(ref_codes),
                               rtol=1e-4, atol=1e-4)

    print("KERNEL_OK")
</pallas_src>

<mosaic_0001>
module attributes {stable_mosaic.version = 11 : i64} {
  func.func @encoder_kernel(%arg0: i32, %arg1: i32, %arg2: memref<4x8x128xf32, #tpu.memory_space<vmem>>, %arg3: memref<4x8x128xf32, #tpu.memory_space<vmem>>, %arg4: memref<8x1xi32, #tpu.memory_space<vmem>>, %arg5: memref<128x384xbf16, #tpu.memory_space<vmem>>, %arg6: memref<128x384xbf16, #tpu.memory_space<vmem>>, %arg7: memref<256x768xbf16, #tpu.memory_space<vmem>>, %arg8: memref<1x384xf32, #tpu.memory_space<vmem>>, %arg9: memref<1x384xf32, #tpu.memory_space<vmem>>, %arg10: memref<1x768xf32, #tpu.memory_space<vmem>>, %arg11: memref<8x128xf32, #tpu.memory_space<vmem>>, %arg12: memref<128x128xf32, #tpu.memory_space<vmem>>, %arg13: memref<4x8x128xf32, #tpu.memory_space<vmem>>, %arg14: memref<4x8x128xf32, #tpu.memory_space<vmem>>, %arg15: memref<2x8x128xf32, #tpu.memory_space<vmem>>, %arg16: memref<8x128xf32, #tpu.memory_space<vmem>>, %arg17: memref<4x8x384xbf16, #tpu.memory_space<vmem>>, %arg18: memref<4x8x384xbf16, #tpu.memory_space<vmem>>, %arg19: memref<8x128xf32, #tpu.memory_space<vmem>>, %arg20: memref<8x128xf32, #tpu.memory_space<vmem>>) attributes {dimension_semantics = [#tpu.dimension_semantics<parallel>, #tpu.dimension_semantics<arbitrary>], iteration_bounds = array<i64: 1, 2>, scalar_prefetch = 0 : i64, scratch_operands = 4 : i64, tpu.core_type = #tpu.core_type<tc>, window_params = [{transform_indices = @transform_0, window_bounds = array<i64: 4, 8, 128>}, {transform_indices = @transform_1, window_bounds = array<i64: 4, 8, 128>}, {transform_indices = @transform_2, window_bounds = array<i64: 8, 1>}, {pipeline_mode = #tpu.pipeline_mode<synchronous>, transform_indices = @transform_3, window_bounds = array<i64: 128, 384>}, {pipeline_mode = #tpu.pipeline_mode<synchronous>, transform_indices = @transform_4, window_bounds = array<i64: 128, 384>}, {pipeline_mode = #tpu.pipeline_mode<synchronous>, transform_indices = @transform_5, window_bounds = array<i64: 256, 768>}, {pipeline_mode = #tpu.pipeline_mode<synchronous>, transform_indices = @transform_6, window_bounds = array<i64: 1, 384>}, {pipeline_mode = #tpu.pipeline_mode<synchronous>, transform_indices = @transform_7, window_bounds = array<i64: 1, 384>}, {pipeline_mode = #tpu.pipeline_mode<synchronous>, transform_indices = @transform_8, window_bounds = array<i64: 1, 768>}, {transform_indices = @transform_9, window_bounds = array<i64: 8, 128>}, {pipeline_mode = #tpu.pipeline_mode<synchronous>, transform_indices = @transform_10, window_bounds = array<i64: 128, 128>}, {transform_indices = @transform_11, window_bounds = array<i64: 4, 8, 128>}, {transform_indices = @transform_12, window_bounds = array<i64: 4, 8, 128>}, {transform_indices = @transform_13, window_bounds = array<i64: 2, 8, 128>}, {transform_indices = @transform_14, window_bounds = array<i64: 8, 128>}]} {
    %c0_i32 = arith.constant 0 : i32
    %0 = arith.cmpi eq, %arg1, %c0_i32 : i32
    %1 = arith.extui %0 : i1 to i32
    %c0_i32_0 = arith.constant 0 : i32
    %2 = arith.cmpi ne, %1, %c0_i32_0 : i32
    scf.if %2 {
      %cst_104 = arith.constant 0.000000e+00 : f32
      %405 = vector.broadcast %cst_104 : f32 to vector<8x128xf32>
      %c0_105 = arith.constant 0 : index
      %c0_106 = arith.constant 0 : index
      %406 = vector.load %arg19[%c0_105, %c0_106] : memref<8x128xf32, #tpu.memory_space<vmem>>, vector<8x128xf32>
      tpu.vector_store %arg19[%c0_105, %c0_106], %405 {strides = array<i32>} : memref<8x128xf32, #tpu.memory_space<vmem>>, vector<8x128xf32>,
      %cst_107 = arith.constant 0.000000e+00 : f32
      %407 = vector.broadcast %cst_107 : f32 to vector<8x128xf32>
      %c0_108 = arith.constant 0 : index
      %c0_109 = arith.constant 0 : index
      %408 = vector.load %arg20[%c0_108, %c0_109] : memref<8x128xf32, #tpu.memory_space<vmem>>, vector<8x128xf32>
      tpu.vector_store %arg20[%c0_108, %c0_109], %407 {strides = array<i32>} : memref<8x128xf32, #tpu.memory_space<vmem>>, vector<8x128xf32>,
      %c0_110 = arith.constant 0 : index
      %c0_111 = arith.constant 0 : index
      %409 = vector.load %arg11[%c0_110, %c0_111] : memref<8x128xf32, #tpu.memory_space<vmem>>, vector<8x128xf32>
      %c0_112 = arith.constant 0 : index
      %c0_113 = arith.constant 0 : index
      %410 = vector.load %arg12[%c0_112, %c0_113] : memref<128x128xf32, #tpu.memory_space<vmem>>, vector<128x128xf32>
      %cst_114 = arith.constant dense<0.000000e+00> : vector<8x128xf32>
      %411 = tpu.matmul %409, %410, %cst_114 {dimension_numbers = #tpu.dot_dimension_numbers<[1], [0], [0], [1], [0, 0, 1, 1], [], []>} : vector<8x128xf32>, vector<128x128xf32>, vector<8x128xf32> -> vector<8x128xf32>
      %c0_115 = arith.constant 0 : index
      %c0_116 = arith.constant 0 : index
      %412 = vector.load %arg16[%c0_115, %c0_116] : memref<8x128xf32, #tpu.memory_space<vmem>>, vector<8x128xf32>
      tpu.vector_store %arg16[%c0_115, %c0_116], %411 {strides = array<i32>} : memref<8x128xf32, #tpu.memory_space<vmem>>, vector<8x128xf32>,
    } else {
    }
    %c0 = arith.constant 0 : index
    %c0_1 = arith.constant 0 : index
    %c0_2 = arith.constant 0 : index
    %3 = vector.load %arg2[%c0, %c0_1, %c0_2] : memref<4x8x128xf32, #tpu.memory_space<vmem>>, vector<4x8x128xf32>
    %4 = vector.shape_cast %3 : vector<4x8x128xf32> to vector<32x128xf32>
    %5 = arith.truncf %4 : vector<32x128xf32> to vector<32x128xbf16>
    %c0_3 = arith.constant 0 : index
    %c0_4 = arith.constant 0 : index
    %c0_5 = arith.constant 0 : index
    %6 = vector.load %arg3[%c0_3, %c0_4, %c0_5] : memref<4x8x128xf32, #tpu.memory_space<vmem>>, vector<4x8x128xf32>
    %7 = vector.shape_cast %6 : vector<4x8x128xf32> to vector<32x128xf32>
    %8 = arith.truncf %7 : vector<32x128xf32> to vector<32x128xbf16>
    %c0_6 = arith.constant 0 : index
    %c0_7 = arith.constant 0 : index
    %9 = vector.load %arg5[%c0_6, %c0_7] : memref<128x384xbf16, #tpu.memory_space<vmem>>, vector<128x384xbf16>
    %cst = arith.constant dense<0.000000e+00> : vector<32x384xf32>
    %10 = tpu.matmul %5, %9, %cst {dimension_numbers = #tpu.dot_dimension_numbers<[1], [0], [0], [1], [0, 0, 1, 1], [], []>} : vector<32x128xbf16>, vector<128x384xbf16>, vector<32x384xf32> -> vector<32x384xf32>
    %c0_8 = arith.constant 0 : index
    %c0_9 = arith.constant 0 : index
    %11 = vector.load %arg8[%c0_8, %c0_9] : memref<1x384xf32, #tpu.memory_space<vmem>>, vector<1x384xf32>
    %12 = vector.broadcast %11 : vector<1x384xf32> to vector<32x384xf32>
    %13 = arith.addf %10, %12 : vector<32x384xf32>
    %14 = arith.truncf %13 : vector<32x384xf32> to vector<32x384xbf16>
    %15 = vector.shape_cast %14 : vector<32x384xbf16> to vector<4x8x384xbf16>
    %c0_10 = arith.constant 0 : index
    %c0_11 = arith.constant 0 : index
    %c0_12 = arith.constant 0 : index
    %16 = vector.load %arg17[%c0_10, %c0_11, %c0_12] : memref<4x8x384xbf16, #tpu.memory_space<vmem>>, vector<4x8x384xbf16>
    tpu.vector_store %arg17[%c0_10, %c0_11, %c0_12], %15 {strides = array<i32>} : memref<4x8x384xbf16, #tpu.memory_space<vmem>>, vector<4x8x384xbf16>,
    %c0_13 = arith.constant 0 : index
    %c0_14 = arith.constant 0 : index
    %17 = vector.load %arg6[%c0_13, %c0_14] : memref<128x384xbf16, #tpu.memory_space<vmem>>, vector<128x384xbf16>
    %cst_15 = arith.constant dense<0.000000e+00> : vector<32x384xf32>
    %18 = tpu.matmul %8, %17, %cst_15 {dimension_numbers = #tpu.dot_dimension_numbers<[1], [0], [0], [1], [0, 0, 1, 1], [], []>} : vector<32x128xbf16>, vector<128x384xbf16>, vector<32x384xf32> -> vector<32x384xf32>
    %c0_16 = arith.constant 0 : index
    %c0_17 = arith.constant 0 : index
    %19 = vector.load %arg9[%c0_16, %c0_17] : memref<1x384xf32, #tpu.memory_space<vmem>>, vector<1x384xf32>
    %20 = vector.broadcast %19 : vector<1x384xf32> to vector<32x384xf32>
    %21 = arith.addf %18, %20 : vector<32x384xf32>
    %22 = arith.truncf %21 : vector<32x384xf32> to vector<32x384xbf16>
    %23 = vector.shape_cast %22 : vector<32x384xbf16> to vector<4x8x384xbf16>
    %c0_18 = arith.constant 0 : index
    %c0_19 = arith.constant 0 : index
    %c0_20 = arith.constant 0 : index
    %24 = vector.load %arg18[%c0_18, %c0_19, %c0_20] : memref<4x8x384xbf16, #tpu.memory_space<vmem>>, vector<4x8x384xbf16>
    tpu.vector_store %arg18[%c0_18, %c0_19, %c0_20], %23 {strides = array<i32>} : memref<4x8x384xbf16, #tpu.memory_space<vmem>>, vector<4x8x384xbf16>,
    %c0_21 = arith.constant 0 : index
    %c0_22 = arith.constant 0 : index
    %25 = vector.load %arg7[%c0_21, %c0_22] : memref<256x768xbf16, #tpu.memory_space<vmem>>, vector<256x768xbf16>
    %c0_23 = arith.constant 0 : index
    %c0_24 = arith.constant 0 : index
    %26 = vector.load %arg10[%c0_23, %c0_24] : memref<1x768xf32, #tpu.memory_space<vmem>>, vector<1x768xf32>
    %c0_25 = arith.constant 0 : index
    %c0_26 = arith.constant 0 : index
    %27 = vector.load %arg4[%c0_25, %c0_26] : memref<8x1xi32, #tpu.memory_space<vmem>>, vector<8x1xi32>
    %c4_i32 = arith.constant 4 : i32
    %28 = arith.muli %arg1, %c4_i32 : i32
    %c1_i32 = arith.constant 1 : i32
    %29 = arith.subi %c1_i32, %arg1 : i32
    %c4_i32_27 = arith.constant 4 : i32
    %30 = arith.muli %29, %c4_i32_27 : i32
    %c0_28 = arith.constant 0 : index
    %c0_29 = arith.constant 0 : index
    %31 = vector.load %arg19[%c0_28, %c0_29] : memref<8x128xf32, #tpu.memory_space<vmem>>, vector<8x128xf32>
    %c0_30 = arith.constant 0 : index
    %c0_31 = arith.constant 0 : index
    %32 = vector.load %arg20[%c0_30, %c0_31] : memref<8x128xf32, #tpu.memory_space<vmem>>, vector<8x128xf32>
    %c0_i32_32 = arith.constant 0 : i32
    %c3_i32 = arith.constant 3 : i32
    %33 = arith.subi %c3_i32, %c0_i32_32 : i32
    %34 = arith.index_cast %c0_i32_32 : i32 to index
    %c0_33 = arith.constant 0 : index
    %c0_34 = arith.constant 0 : index
    %35 = vector.load %arg17[%34, %c0_33, %c0_34] : memref<4x8x384xbf16, #tpu.memory_space<vmem>>, vector<1x8x384xbf16>
    %36 = vector.shape_cast %35 : vector<1x8x384xbf16> to vector<8x384xbf16>
    %37 = arith.extf %36 : vector<8x384xbf16> to vector<8x384xf32>
    %38 = arith.index_cast %33 : i32 to index
    %c0_35 = arith.constant 0 : index
    %c0_36 = arith.constant 0 : index
    %39 = vector.load %arg18[%38, %c0_35, %c0_36] : memref<4x8x384xbf16, #tpu.memory_space<vmem>>, vector<1x8x384xbf16>
    %40 = vector.shape_cast %39 : vector<1x8x384xbf16> to vector<8x384xbf16>
    %41 = arith.extf %40 : vector<8x384xbf16> to vector<8x384xf32>
    %42 = tpu.concatenate %31, %32 in 1 : vector<8x128xf32>, vector<8x128xf32> -> vector<8x256xf32>
    %43 = arith.truncf %42 : vector<8x256xf32> to vector<8x256xbf16>
    %cst_37 = arith.constant dense<0.000000e+00> : vector<8x768xf32>
    %44 = tpu.matmul %43, %25, %cst_37 {dimension_numbers = #tpu.dot_dimension_numbers<[1], [0], [0], [1], [0, 0, 1, 1], [], []>} : vector<8x256xbf16>, vector<256x768xbf16>, vector<8x768xf32> -> vector<8x768xf32>
    %45 = vector.broadcast %26 : vector<1x768xf32> to vector<8x768xf32>
    %46 = arith.addf %44, %45 : vector<8x768xf32>
    %47 = vector.extract_strided_slice %46 {offsets = [0, 0], sizes = [8, 384], strides = [1, 1]} : vector<8x768xf32> to vector<8x384xf32>
    %48 = vector.extract_strided_slice %37 {offsets = [0, 0], sizes = [8, 128], strides = [1, 1]} : vector<8x384xf32> to vector<8x128xf32>
    %49 = vector.extract_strided_slice %47 {offsets = [0, 0], sizes = [8, 128], strides = [1, 1]} : vector<8x384xf32> to vector<8x128xf32>
    %50 = arith.addf %48, %49 : vector<8x128xf32>
    %51 = arith.negf %50 : vector<8x128xf32>
    %52 = math.exp %51 : vector<8x128xf32>
    %cst_38 = arith.constant 1.000000e+00 : f32
    %53 = vector.broadcast %cst_38 : f32 to vector<8x128xf32>
    %54 = arith.addf %53, %52 : vector<8x128xf32>
    %55 = arith.divf %53, %54 : vector<8x128xf32>
    %56 = vector.extract_strided_slice %37 {offsets = [0, 128], sizes = [8, 128], strides = [1, 1]} : vector<8x384xf32> to vector<8x128xf32>
    %57 = vector.extract_strided_slice %47 {offsets = [0, 128], sizes = [8, 128], strides = [1, 1]} : vector<8x384xf32> to vector<8x128xf32>
    %58 = arith.addf %56, %57 : vector<8x128xf32>
    %59 = arith.negf %58 : vector<8x128xf32>
    %60 = math.exp %59 : vector<8x128xf32>
    %cst_39 = arith.constant 1.000000e+00 : f32
    %61 = vector.broadcast %cst_39 : f32 to vector<8x128xf32>
    %62 = arith.addf %61, %60 : vector<8x128xf32>
    %63 = arith.divf %61, %62 : vector<8x128xf32>
    %64 = vector.extract_strided_slice %37 {offsets = [0, 256], sizes = [8, 128], strides = [1, 1]} : vector<8x384xf32> to vector<8x128xf32>
    %65 = vector.extract_strided_slice %47 {offsets = [0, 256], sizes = [8, 128], strides = [1, 1]} : vector<8x384xf32> to vector<8x128xf32>
    %66 = arith.mulf %55, %65 : vector<8x128xf32>
    %67 = arith.addf %64, %66 : vector<8x128xf32>
    %68 = math.tanh %67 : vector<8x128xf32>
    %69 = arith.subf %31, %68 : vector<8x128xf32>
    %70 = arith.mulf %63, %69 : vector<8x128xf32>
    %71 = arith.addf %68, %70 : vector<8x128xf32>
    %72 = vector.extract_strided_slice %46 {offsets = [0, 384], sizes = [8, 384], strides = [1, 1]} : vector<8x768xf32> to vector<8x384xf32>
    %73 = vector.extract_strided_slice %41 {offsets = [0, 0], sizes = [8, 128], strides = [1, 1]} : vector<8x384xf32> to vector<8x128xf32>
    %74 = vector.extract_strided_slice %72 {offsets = [0, 0], sizes = [8, 128], strides = [1, 1]} : vector<8x384xf32> to vector<8x128xf32>
    %75 = arith.addf %73, %74 : vector<8x128xf32>
    %76 = arith.negf %75 : vector<8x128xf32>
    %77 = math.exp %76 : vector<8x128xf32>
    %cst_40 = arith.constant 1.000000e+00 : f32
    %78 = vector.broadcast %cst_40 : f32 to vector<8x128xf32>
    %79 = arith.addf %78, %77 : vector<8x128xf32>
    %80 = arith.divf %78, %79 : vector<8x128xf32>
    %81 = vector.extract_strided_slice %41 {offsets = [0, 128], sizes = [8, 128], strides = [1, 1]} : vector<8x384xf32> to vector<8x128xf32>
    %82 = vector.extract_strided_slice %72 {offsets = [0, 128], sizes = [8, 128], strides = [1, 1]} : vector<8x384xf32> to vector<8x128xf32>
    %83 = arith.addf %81, %82 : vector<8x128xf32>
    %84 = arith.negf %83 : vector<8x128xf32>
    %85 = math.exp %84 : vector<8x128xf32>
    %cst_41 = arith.constant 1.000000e+00 : f32
    %86 = vector.broadcast %cst_41 : f32 to vector<8x128xf32>
    %87 = arith.addf %86, %85 : vector<8x128xf32>
    %88 = arith.divf %86, %87 : vector<8x128xf32>
    %89 = vector.extract_strided_slice %41 {offsets = [0, 256], sizes = [8, 128], strides = [1, 1]} : vector<8x384xf32> to vector<8x128xf32>
    %90 = vector.extract_strided_slice %72 {offsets = [0, 256], sizes = [8, 128], strides = [1, 1]} : vector<8x384xf32> to vector<8x128xf32>
    %91 = arith.mulf %80, %90 : vector<8x128xf32>
    %92 = arith.addf %89, %91 : vector<8x128xf32>
    %93 = math.tanh %92 : vector<8x128xf32>
    %94 = arith.subf %32, %93 : vector<8x128xf32>
    %95 = arith.mulf %88, %94 : vector<8x128xf32>
    %96 = arith.addf %93, %95 : vector<8x128xf32>
    %97 = arith.addi %28, %c0_i32_32 : i32
    %98 = vector.broadcast %97 : i32 to vector<8x1xi32>
    %99 = arith.cmpi sgt, %27, %98 : vector<8x1xi32>
    %100 = arith.addi %30, %33 : i32
    %101 = vector.broadcast %100 : i32 to vector<8x1xi32>
    %102 = arith.cmpi sgt, %27, %101 : vector<8x1xi32>
    %cst_42 = arith.constant 0.000000e+00 : f32
    %103 = vector.broadcast %cst_42 : f32 to vector<8x128xf32>
    %104 = vector.shape_cast %99 : vector<8x1xi1> to vector<8x1xi1>
    %105 = vector.broadcast %104 : vector<8x1xi1> to vector<8x128xi1>
    %106 = arith.select %105, %71, %103 : vector<8x128xi1>, vector<8x128xf32>
    %107 = arith.index_cast %c0_i32_32 : i32 to index
    %c0_43 = arith.constant 0 : index
    %c0_44 = arith.constant 0 : index
    %108 = vector.load %arg13[%107, %c0_43, %c0_44] : memref<4x8x128xf32, #tpu.memory_space<vmem>>, vector<1x8x128xf32>
    %109 = vector.shape_cast %108 : vector<1x8x128xf32> to vector<8x128xf32>
    %110 = vector.shape_cast %106 : vector<8x128xf32> to vector<1x8x128xf32>
    tpu.vector_store %arg13[%107, %c0_43, %c0_44], %110 {strides = array<i32>} : memref<4x8x128xf32, #tpu.memory_space<vmem>>, vector<1x8x128xf32>,
    %111 = vector.shape_cast %102 : vector<8x1xi1> to vector<8x1xi1>
    %112 = vector.broadcast %111 : vector<8x1xi1> to vector<8x128xi1>
    %113 = arith.select %112, %96, %103 : vector<8x128xi1>, vector<8x128xf32>
    %114 = arith.index_cast %33 : i32 to index
    %c0_45 = arith.constant 0 : index
    %c0_46 = arith.constant 0 : index
    %115 = vector.load %arg14[%114, %c0_45, %c0_46] : memref<4x8x128xf32, #tpu.memory_space<vmem>>, vector<1x8x128xf32>
    %116 = vector.shape_cast %115 : vector<1x8x128xf32> to vector<8x128xf32>
    %117 = vector.shape_cast %113 : vector<8x128xf32> to vector<1x8x128xf32>
    tpu.vector_store %arg14[%114, %c0_45, %c0_46], %117 {strides = array<i32>} : memref<4x8x128xf32, #tpu.memory_space<vmem>>, vector<1x8x128xf32>,
    %118 = vector.shape_cast %99 : vector<8x1xi1> to vector<8x1xi1>
    %119 = vector.broadcast %118 : vector<8x1xi1> to vector<8x128xi1>
    %120 = arith.select %119, %71, %31 : vector<8x128xi1>, vector<8x128xf32>
    %121 = vector.shape_cast %102 : vector<8x1xi1> to vector<8x1xi1>
    %122 = vector.broadcast %121 : vector<8x1xi1> to vector<8x128xi1>
    %123 = arith.select %122, %96, %32 : vector<8x128xi1>, vector<8x128xf32>
    %c1_i32_47 = arith.constant 1 : i32
    %c3_i32_48 = arith.constant 3 : i32
    %124 = arith.subi %c3_i32_48, %c1_i32_47 : i32
    %125 = arith.index_cast %c1_i32_47 : i32 to index
    %c0_49 = arith.constant 0 : index
    %c0_50 = arith.constant 0 : index
    %126 = vector.load %arg17[%125, %c0_49, %c0_50] : memref<4x8x384xbf16, #tpu.memory_space<vmem>>, vector<1x8x384xbf16>
    %127 = vector.shape_cast %126 : vector<1x8x384xbf16> to vector<8x384xbf16>
    %128 = arith.extf %127 : vector<8x384xbf16> to vector<8x384xf32>
    %129 = arith.index_cast %124 : i32 to index
    %c0_51 = arith.constant 0 : index
    %c0_52 = arith.constant 0 : index
    %130 = vector.load %arg18[%129, %c0_51, %c0_52] : memref<4x8x384xbf16, #tpu.memory_space<vmem>>, vector<1x8x384xbf16>
    %131 = vector.shape_cast %130 : vector<1x8x384xbf16> to vector<8x384xbf16>
    %132 = arith.extf %131 : vector<8x384xbf16> to vector<8x384xf32>
    %133 = tpu.concatenate %120, %123 in 1 : vector<8x128xf32>, vector<8x128xf32> -> vector<8x256xf32>
    %134 = arith.truncf %133 : vector<8x256xf32> to vector<8x256xbf16>
    %cst_53 = arith.constant dense<0.000000e+00> : vector<8x768xf32>
    %135 = tpu.matmul %134, %25, %cst_53 {dimension_numbers = #tpu.dot_dimension_numbers<[1], [0], [0], [1], [0, 0, 1, 1], [], []>} : vector<8x256xbf16>, vector<256x768xbf16>, vector<8x768xf32> -> vector<8x768xf32>
    %136 = vector.broadcast %26 : vector<1x768xf32> to vector<8x768xf32>
    %137 = arith.addf %135, %136 : vector<8x768xf32>
    %138 = vector.extract_strided_slice %137 {offsets = [0, 0], sizes = [8, 384], strides = [1, 1]} : vector<8x768xf32> to vector<8x384xf32>
    %139 = vector.extract_strided_slice %128 {offsets = [0, 0], sizes = [8, 128], strides = [1, 1]} : vector<8x384xf32> to vector<8x128xf32>
    %140 = vector.extract_strided_slice %138 {offsets = [0, 0], sizes = [8, 128], strides = [1, 1]} : vector<8x384xf32> to vector<8x128xf32>
    %141 = arith.addf %139, %140 : vector<8x128xf32>
    %142 = arith.negf %141 : vector<8x128xf32>
    %143 = math.exp %142 : vector<8x128xf32>
    %cst_54 = arith.constant 1.000000e+00 : f32
    %144 = vector.broadcast %cst_54 : f32 to vector<8x128xf32>
    %145 = arith.addf %144, %143 : vector<8x128xf32>
    %146 = arith.divf %144, %145 : vector<8x128xf32>
    %147 = vector.extract_strided_slice %128 {offsets = [0, 128], sizes = [8, 128], strides = [1, 1]} : vector<8x384xf32> to vector<8x128xf32>
    %148 = vector.extract_strided_slice %138 {offsets = [0, 128], sizes = [8, 128], strides = [1, 1]} : vector<8x384xf32> to vector<8x128xf32>
    %149 = arith.addf %147, %148 : vector<8x128xf32>
    %150 = arith.negf %149 : vector<8x128xf32>
    %151 = math.exp %150 : vector<8x128xf32>
    %cst_55 = arith.constant 1.000000e+00 : f32
    %152 = vector.broadcast %cst_55 : f32 to vector<8x128xf32>
    %153 = arith.addf %152, %151 : vector<8x128xf32>
    %154 = arith.divf %152, %153 : vector<8x128xf32>
    %155 = vector.extract_strided_slice %128 {offsets = [0, 256], sizes = [8, 128], strides = [1, 1]} : vector<8x384xf32> to vector<8x128xf32>
    %156 = vector.extract_strided_slice %138 {offsets = [0, 256], sizes = [8, 128], strides = [1, 1]} : vector<8x384xf32> to vector<8x128xf32>
    %157 = arith.mulf %146, %156 : vector<8x128xf32>
    %158 = arith.addf %155, %157 : vector<8x128xf32>
    %159 = math.tanh %158 : vector<8x128xf32>
    %160 = arith.subf %120, %159 : vector<8x128xf32>
    %161 = arith.mulf %154, %160 : vector<8x128xf32>
    %162 = arith.addf %159, %161 : vector<8x128xf32>
    %163 = vector.extract_strided_slice %137 {offsets = [0, 384], sizes = [8, 384], strides = [1, 1]} : vector<8x768xf32> to vector<8x384xf32>
    %164 = vector.extract_strided_slice %132 {offsets = [0, 0], sizes = [8, 128], strides = [1, 1]} : vector<8x384xf32> to vector<8x128xf32>
    %165 = vector.extract_strided_slice %163 {offsets = [0, 0], sizes = [8, 128], strides = [1, 1]} : vector<8x384xf32> to vector<8x128xf32>
    %166 = arith.addf %164, %165 : vector<8x128xf32>
    %167 = arith.negf %166 : vector<8x128xf32>
    %168 = math.exp %167 : vector<8x128xf32>
    %cst_56 = arith.constant 1.000000e+00 : f32
    %169 = vector.broadcast %cst_56 : f32 to vector<8x128xf32>
    %170 = arith.addf %169, %168 : vector<8x128xf32>
    %171 = arith.divf %169, %170 : vector<8x128xf32>
    %172 = vector.extract_strided_slice %132 {offsets = [0, 128], sizes = [8, 128], strides = [1, 1]} : vector<8x384xf32> to vector<8x128xf32>
    %173 = vector.extract_strided_slice %163 {offsets = [0, 128], sizes = [8, 128], strides = [1, 1]} : vector<8x384xf32> to vector<8x128xf32>
    %174 = arith.addf %172, %173 : vector<8x128xf32>
    %175 = arith.negf %174 : vector<8x128xf32>
    %176 = math.exp %175 : vector<8x128xf32>
    %cst_57 = arith.constant 1.000000e+00 : f32
    %177 = vector.broadcast %cst_57 : f32 to vector<8x128xf32>
    %178 = arith.addf %177, %176 : vector<8x128xf32>
    %179 = arith.divf %177, %178 : vector<8x128xf32>
    %180 = vector.extract_strided_slice %132 {offsets = [0, 256], sizes = [8, 128], strides = [1, 1]} : vector<8x384xf32> to vector<8x128xf32>
    %181 = vector.extract_strided_slice %163 {offsets = [0, 256], sizes = [8, 128], strides = [1, 1]} : vector<8x384xf32> to vector<8x128xf32>
    %182 = arith.mulf %171, %181 : vector<8x128xf32>
    %183 = arith.addf %180, %182 : vector<8x128xf32>
    %184 = math.tanh %183 : vector<8x128xf32>
    %185 = arith.subf %123, %184 : vector<8x128xf32>
    %186 = arith.mulf %179, %185 : vector<8x128xf32>
    %187 = arith.addf %184, %186 : vector<8x128xf32>
    %188 = arith.addi %28, %c1_i32_47 : i32
    %189 = vector.broadcast %188 : i32 to vector<8x1xi32>
    %190 = arith.cmpi sgt, %27, %189 : vector<8x1xi32>
    %191 = arith.addi %30, %124 : i32
    %192 = vector.broadcast %191 : i32 to vector<8x1xi32>
    %193 = arith.cmpi sgt, %27, %192 : vector<8x1xi32>
    %cst_58 = arith.constant 0.000000e+00 : f32
    %194 = vector.broadcast %cst_58 : f32 to vector<8x128xf32>
    %195 = vector.shape_cast %190 : vector<8x1xi1> to vector<8x1xi1>
    %196 = vector.broadcast %195 : vector<8x1xi1> to vector<8x128xi1>
    %197 = arith.select %196, %162, %194 : vector<8x128xi1>, vector<8x128xf32>
    %198 = arith.index_cast %c1_i32_47 : i32 to index
    %c0_59 = arith.constant 0 : index
    %c0_60 = arith.constant 0 : index
    %199 = vector.load %arg13[%198, %c0_59, %c0_60] : memref<4x8x128xf32, #tpu.memory_space<vmem>>, vector<1x8x128xf32>
    %200 = vector.shape_cast %199 : vector<1x8x128xf32> to vector<8x128xf32>
    %201 = vector.shape_cast %197 : vector<8x128xf32> to vector<1x8x128xf32>
    tpu.vector_store %arg13[%198, %c0_59, %c0_60], %201 {strides = array<i32>} : memref<4x8x128xf32, #tpu.memory_space<vmem>>, vector<1x8x128xf32>,
    %202 = vector.shape_cast %193 : vector<8x1xi1> to vector<8x1xi1>
    %203 = vector.broadcast %202 : vector<8x1xi1> to vector<8x128xi1>
    %204 = arith.select %203, %187, %194 : vector<8x128xi1>, vector<8x128xf32>
    %205 = arith.index_cast %124 : i32 to index
    %c0_61 = arith.constant 0 : index
    %c0_62 = arith.constant 0 : index
    %206 = vector.load %arg14[%205, %c0_61, %c0_62] : memref<4x8x128xf32, #tpu.memory_space<vmem>>, vector<1x8x128xf32>
    %207 = vector.shape_cast %206 : vector<1x8x128xf32> to vector<8x128xf32>
    %208 = vector.shape_cast %204 : vector<8x128xf32> to vector<1x8x128xf32>
    tpu.vector_store %arg14[%205, %c0_61, %c0_62], %208 {strides = array<i32>} : memref<4x8x128xf32, #tpu.memory_space<vmem>>, vector<1x8x128xf32>,
    %209 = vector.shape_cast %190 : vector<8x1xi1> to vector<8x1xi1>
    %210 = vector.broadcast %209 : vector<8x1xi1> to vector<8x128xi1>
    %211 = arith.select %210, %162, %120 : vector<8x128xi1>, vector<8x128xf32>
    %212 = vector.shape_cast %193 : vector<8x1xi1> to vector<8x1xi1>
    %213 = vector.broadcast %212 : vector<8x1xi1> to vector<8x128xi1>
    %214 = arith.select %213, %187, %123 : vector<8x128xi1>, vector<8x128xf32>
    %c2_i32 = arith.constant 2 : i32
    %c3_i32_63 = arith.constant 3 : i32
    %215 = arith.subi %c3_i32_63, %c2_i32 : i32
    %216 = arith.index_cast %c2_i32 : i32 to index
    %c0_64 = arith.constant 0 : index
    %c0_65 = arith.constant 0 : index
    %217 = vector.load %arg17[%216, %c0_64, %c0_65] : memref<4x8x384xbf16, #tpu.memory_space<vmem>>, vector<1x8x384xbf16>
    %218 = vector.shape_cast %217 : vector<1x8x384xbf16> to vector<8x384xbf16>
    %219 = arith.extf %218 : vector<8x384xbf16> to vector<8x384xf32>
    %220 = arith.index_cast %215 : i32 to index
    %c0_66 = arith.constant 0 : index
    %c0_67 = arith.constant 0 : index
    %221 = vector.load %arg18[%220, %c0_66, %c0_67] : memref<4x8x384xbf16, #tpu.memory_space<vmem>>, vector<1x8x384xbf16>
    %222 = vector.shape_cast %221 : vector<1x8x384xbf16> to vector<8x384xbf16>
    %223 = arith.extf %222 : vector<8x384xbf16> to vector<8x384xf32>
    %224 = tpu.concatenate %211, %214 in 1 : vector<8x128xf32>, vector<8x128xf32> -> vector<8x256xf32>
    %225 = arith.truncf %224 : vector<8x256xf32> to vector<8x256xbf16>
    %cst_68 = arith.constant dense<0.000000e+00> : vector<8x768xf32>
    %226 = tpu.matmul %225, %25, %cst_68 {dimension_numbers = #tpu.dot_dimension_numbers<[1], [0], [0], [1], [0, 0, 1, 1], [], []>} : vector<8x256xbf16>, vector<256x768xbf16>, vector<8x768xf32> -> vector<8x768xf32>
    %227 = vector.broadcast %26 : vector<1x768xf32> to vector<8x768xf32>
    %228 = arith.addf %226, %227 : vector<8x768xf32>
    %229 = vector.extract_strided_slice %228 {offsets = [0, 0], sizes = [8, 384], strides = [1, 1]} : vector<8x768xf32> to vector<8x384xf32>
    %230 = vector.extract_strided_slice %219 {offsets = [0, 0], sizes = [8, 128], strides = [1, 1]} : vector<8x384xf32> to vector<8x128xf32>
    %231 = vector.extract_strided_slice %229 {offsets = [0, 0], sizes = [8, 128], strides = [1, 1]} : vector<8x384xf32> to vector<8x128xf32>
    %232 = arith.addf %230, %231 : vector<8x128xf32>
    %233 = arith.negf %232 : vector<8x128xf32>
    %234 = math.exp %233 : vector<8x128xf32>
    %cst_69 = arith.constant 1.000000e+00 : f32
    %235 = vector.broadcast %cst_69 : f32 to vector<8x128xf32>
    %236 = arith.addf %235, %234 : vector<8x128xf32>
    %237 = arith.divf %235, %236 : vector<8x128xf32>
    %238 = vector.extract_strided_slice %219 {offsets = [0, 128], sizes = [8, 128], strides = [1, 1]} : vector<8x384xf32> to vector<8x128xf32>
    %239 = vector.extract_strided_slice %229 {offsets = [0, 128], sizes = [8, 128], strides = [1, 1]} : vector<8x384xf32> to vector<8x128xf32>
    %240 = arith.addf %238, %239 : vector<8x128xf32>
    %241 = arith.negf %240 : vector<8x128xf32>
    %242 = math.exp %241 : vector<8x128xf32>
    %cst_70 = arith.constant 1.000000e+00 : f32
    %243 = vector.broadcast %cst_70 : f32 to vector<8x128xf32>
    %244 = arith.addf %243, %242 : vector<8x128xf32>
    %245 = arith.divf %243, %244 : vector<8x128xf32>
    %246 = vector.extract_strided_slice %219 {offsets = [0, 256], sizes = [8, 128], strides = [1, 1]} : vector<8x384xf32> to vector<8x128xf32>
    %247 = vector.extract_strided_slice %229 {offsets = [0, 256], sizes = [8, 128], strides = [1, 1]} : vector<8x384xf32> to vector<8x128xf32>
    %248 = arith.mulf %237, %247 : vector<8x128xf32>
    %249 = arith.addf %246, %248 : vector<8x128xf32>
    %250 = math.tanh %249 : vector<8x128xf32>
    %251 = arith.subf %211, %250 : vector<8x128xf32>
    %252 = arith.mulf %245, %251 : vector<8x128xf32>
    %253 = arith.addf %250, %252 : vector<8x128xf32>
    %254 = vector.extract_strided_slice %228 {offsets = [0, 384], sizes = [8, 384], strides = [1, 1]} : vector<8x768xf32> to vector<8x384xf32>
    %255 = vector.extract_strided_slice %223 {offsets = [0, 0], sizes = [8, 128], strides = [1, 1]} : vector<8x384xf32> to vector<8x128xf32>
    %256 = vector.extract_strided_slice %254 {offsets = [0, 0], sizes = [8, 128], strides = [1, 1]} : vector<8x384xf32> to vector<8x128xf32>
    %257 = arith.addf %255, %256 : vector<8x128xf32>
    %258 = arith.negf %257 : vector<8x128xf32>
    %259 = math.exp %258 : vector<8x128xf32>
    %cst_71 = arith.constant 1.000000e+00 : f32
    %260 = vector.broadcast %cst_71 : f32 to vector<8x128xf32>
    %261 = arith.addf %260, %259 : vector<8x128xf32>
    %262 = arith.divf %260, %261 : vector<8x128xf32>
    %263 = vector.extract_strided_slice %223 {offsets = [0, 128], sizes = [8, 128], strides = [1, 1]} : vector<8x384xf32> to vector<8x128xf32>
    %264 = vector.extract_strided_slice %254 {offsets = [0, 128], sizes = [8, 128], strides = [1, 1]} : vector<8x384xf32> to vector<8x128xf32>
    %265 = arith.addf %263, %264 : vector<8x128xf32>
    %266 = arith.negf %265 : vector<8x128xf32>
    %267 = math.exp %266 : vector<8x128xf32>
    %cst_72 = arith.constant 1.000000e+00 : f32
    %268 = vector.broadcast %cst_72 : f32 to vector<8x128xf32>
    %269 = arith.addf %268, %267 : vector<8x128xf32>
    %270 = arith.divf %268, %269 : vector<8x128xf32>
    %271 = vector.extract_strided_slice %223 {offsets = [0, 256], sizes = [8, 128], strides = [1, 1]} : vector<8x384xf32> to vector<8x128xf32>
    %272 = vector.extract_strided_slice %254 {offsets = [0, 256], sizes = [8, 128], strides = [1, 1]} : vector<8x384xf32> to vector<8x128xf32>
    %273 = arith.mulf %262, %272 : vector<8x128xf32>
    %274 = arith.addf %271, %273 : vector<8x128xf32>
    %275 = math.tanh %274 : vector<8x128xf32>
    %276 = arith.subf %214, %275 : vector<8x128xf32>
    %277 = arith.mulf %270, %276 : vector<8x128xf32>
    %278 = arith.addf %275, %277 : vector<8x128xf32>
    %279 = arith.addi %28, %c2_i32 : i32
    %280 = vector.broadcast %279 : i32 to vector<8x1xi32>
    %281 = arith.cmpi sgt, %27, %280 : vector<8x1xi32>
    %282 = arith.addi %30, %215 : i32
    %283 = vector.broadcast %282 : i32 to vector<8x1xi32>
    %284 = arith.cmpi sgt, %27, %283 : vector<8x1xi32>
    %cst_73 = arith.constant 0.000000e+00 : f32
    %285 = vector.broadcast %cst_73 : f32 to vector<8x128xf32>
    %286 = vector.shape_cast %281 : vector<8x1xi1> to vector<8x1xi1>
    %287 = vector.broadcast %286 : vector<8x1xi1> to vector<8x128xi1>
    %288 = arith.select %287, %253, %285 : vector<8x128xi1>, vector<8x128xf32>
    %289 = arith.index_cast %c2_i32 : i32 to index
    %c0_74 = arith.constant 0 : index
    %c0_75 = arith.constant 0 : index
    %290 = vector.load %arg13[%289, %c0_74, %c0_75] : memref<4x8x128xf32, #tpu.memory_space<vmem>>, vector<1x8x128xf32>
    %291 = vector.shape_cast %290 : vector<1x8x128xf32> to vector<8x128xf32>
    %292 = vector.shape_cast %288 : vector<8x128xf32> to vector<1x8x128xf32>
    tpu.vector_store %arg13[%289, %c0_74, %c0_75], %292 {strides = array<i32>} : memref<4x8x128xf32, #tpu.memory_space<vmem>>, vector<1x8x128xf32>,
    %293 = vector.shape_cast %284 : vector<8x1xi1> to vector<8x1xi1>
    %294 = vector.broadcast %293 : vector<8x1xi1> to vector<8x128xi1>
    %295 = arith.select %294, %278, %285 : vector<8x128xi1>, vector<8x128xf32>
    %296 = arith.index_cast %215 : i32 to index
    %c0_76 = arith.constant 0 : index
    %c0_77 = arith.constant 0 : index
    %297 = vector.load %arg14[%296, %c0_76, %c0_77] : memref<4x8x128xf32, #tpu.memory_space<vmem>>, vector<1x8x128xf32>
    %298 = vector.shape_cast %297 : vector<1x8x128xf32> to vector<8x128xf32>
    %299 = vector.shape_cast %295 : vector<8x128xf32> to vector<1x8x128xf32>
    tpu.vector_store %arg14[%296, %c0_76, %c0_77], %299 {strides = array<i32>} : memref<4x8x128xf32, #tpu.memory_space<vmem>>, vector<1x8x128xf32>,
    %300 = vector.shape_cast %281 : vector<8x1xi1> to vector<8x1xi1>
    %301 = vector.broadcast %300 : vector<8x1xi1> to vector<8x128xi1>
    %302 = arith.select %301, %253, %211 : vector<8x128xi1>, vector<8x128xf32>
    %303 = vector.shape_cast %284 : vector<8x1xi1> to vector<8x1xi1>
    %304 = vector.broadcast %303 : vector<8x1xi1> to vector<8x128xi1>
    %305 = arith.select %304, %278, %214 : vector<8x128xi1>, vector<8x128xf32>
    %c3_i32_78 = arith.constant 3 : i32
    %c3_i32_79 = arith.constant 3 : i32
    %306 = arith.subi %c3_i32_79, %c3_i32_78 : i32
    %307 = arith.index_cast %c3_i32_78 : i32 to index
    %c0_80 = arith.constant 0 : index
    %c0_81 = arith.constant 0 : index
    %308 = vector.load %arg17[%307, %c0_80, %c0_81] : memref<4x8x384xbf16, #tpu.memory_space<vmem>>, vector<1x8x384xbf16>
    %309 = vector.shape_cast %308 : vector<1x8x384xbf16> to vector<8x384xbf16>
    %310 = arith.extf %309 : vector<8x384xbf16> to vector<8x384xf32>
    %311 = arith.index_cast %306 : i32 to index
    %c0_82 = arith.constant 0 : index
    %c0_83 = arith.constant 0 : index
    %312 = vector.load %arg18[%311, %c0_82, %c0_83] : memref<4x8x384xbf16, #tpu.memory_space<vmem>>, vector<1x8x384xbf16>
    %313 = vector.shape_cast %312 : vector<1x8x384xbf16> to vector<8x384xbf16>
    %314 = arith.extf %313 : vector<8x384xbf16> to vector<8x384xf32>
    %315 = tpu.concatenate %302, %305 in 1 : vector<8x128xf32>, vector<8x128xf32> -> vector<8x256xf32>
    %316 = arith.truncf %315 : vector<8x256xf32> to vector<8x256xbf16>
    %cst_84 = arith.constant dense<0.000000e+00> : vector<8x768xf32>
    %317 = tpu.matmul %316, %25, %cst_84 {dimension_numbers = #tpu.dot_dimension_numbers<[1], [0], [0], [1], [0, 0, 1, 1], [], []>} : vector<8x256xbf16>, vector<256x768xbf16>, vector<8x768xf32> -> vector<8x768xf32>
    %318 = vector.broadcast %26 : vector<1x768xf32> to vector<8x768xf32>
    %319 = arith.addf %317, %318 : vector<8x768xf32>
    %320 = vector.extract_strided_slice %319 {offsets = [0, 0], sizes = [8, 384], strides = [1, 1]} : vector<8x768xf32> to vector<8x384xf32>
    %321 = vector.extract_strided_slice %310 {offsets = [0, 0], sizes = [8, 128], strides = [1, 1]} : vector<8x384xf32> to vector<8x128xf32>
    %322 = vector.extract_strided_slice %320 {offsets = [0, 0], sizes = [8, 128], strides = [1, 1]} : vector<8x384xf32> to vector<8x128xf32>
    %323 = arith.addf %321, %322 : vector<8x128xf32>
    %324 = arith.negf %323 : vector<8x128xf32>
    %325 = math.exp %324 : vector<8x128xf32>
    %cst_85 = arith.constant 1.000000e+00 : f32
    %326 = vector.broadcast %cst_85 : f32 to vector<8x128xf32>
    %327 = arith.addf %326, %325 : vector<8x128xf32>
    %328 = arith.divf %326, %327 : vector<8x128xf32>
    %329 = vector.extract_strided_slice %310 {offsets = [0, 128], sizes = [8, 128], strides = [1, 1]} : vector<8x384xf32> to vector<8x128xf32>
    %330 = vector.extract_strided_slice %320 {offsets = [0, 128], sizes = [8, 128], strides = [1, 1]} : vector<8x384xf32> to vector<8x128xf32>
    %331 = arith.addf %329, %330 : vector<8x128xf32>
    %332 = arith.negf %331 : vector<8x128xf32>
    %333 = math.exp %332 : vector<8x128xf32>
    %cst_86 = arith.constant 1.000000e+00 : f32
    %334 = vector.broadcast %cst_86 : f32 to vector<8x128xf32>
    %335 = arith.addf %334, %333 : vector<8x128xf32>
    %336 = arith.divf %334, %335 : vector<8x128xf32>
    %337 = vector.extract_strided_slice %310 {offsets = [0, 256], sizes = [8, 128], strides = [1, 1]} : vector<8x384xf32> to vector<8x128xf32>
    %338 = vector.extract_strided_slice %320 {offsets = [0, 256], sizes = [8, 128], strides = [1, 1]} : vector<8x384xf32> to vector<8x128xf32>
    %339 = arith.mulf %328, %338 : vector<8x128xf32>
    %340 = arith.addf %337, %339 : vector<8x128xf32>
    %341 = math.tanh %340 : vector<8x128xf32>
    %342 = arith.subf %302, %341 : vector<8x128xf32>
    %343 = arith.mulf %336, %342 : vector<8x128xf32>
    %344 = arith.addf %341, %343 : vector<8x128xf32>
    %345 = vector.extract_strided_slice %319 {offsets = [0, 384], sizes = [8, 384], strides = [1, 1]} : vector<8x768xf32> to vector<8x384xf32>
    %346 = vector.extract_strided_slice %314 {offsets = [0, 0], sizes = [8, 128], strides = [1, 1]} : vector<8x384xf32> to vector<8x128xf32>
    %347 = vector.extract_strided_slice %345 {offsets = [0, 0], sizes = [8, 128], strides = [1, 1]} : vector<8x384xf32> to vector<8x128xf32>
    %348 = arith.addf %346, %347 : vector<8x128xf32>
    %349 = arith.negf %348 : vector<8x128xf32>
    %350 = math.exp %349 : vector<8x128xf32>
    %cst_87 = arith.constant 1.000000e+00 : f32
    %351 = vector.broadcast %cst_87 : f32 to vector<8x128xf32>
    %352 = arith.addf %351, %350 : vector<8x128xf32>
    %353 = arith.divf %351, %352 : vector<8x128xf32>
    %354 = vector.extract_strided_slice %314 {offsets = [0, 128], sizes = [8, 128], strides = [1, 1]} : vector<8x384xf32> to vector<8x128xf32>
    %355 = vector.extract_strided_slice %345 {offsets = [0, 128], sizes = [8, 128], strides = [1, 1]} : vector<8x384xf32> to vector<8x128xf32>
    %356 = arith.addf %354, %355 : vector<8x128xf32>
    %357 = arith.negf %356 : vector<8x128xf32>
    %358 = math.exp %357 : vector<8x128xf32>
    %cst_88 = arith.constant 1.000000e+00 : f32
    %359 = vector.broadcast %cst_88 : f32 to vector<8x128xf32>
    %360 = arith.addf %359, %358 : vector<8x128xf32>
    %361 = arith.divf %359, %360 : vector<8x128xf32>
    %362 = vector.extract_strided_slice %314 {offsets = [0, 256], sizes = [8, 128], strides = [1, 1]} : vector<8x384xf32> to vector<8x128xf32>
    %363 = vector.extract_strided_slice %345 {offsets = [0, 256], sizes = [8, 128], strides = [1, 1]} : vector<8x384xf32> to vector<8x128xf32>
    %364 = arith.mulf %353, %363 : vector<8x128xf32>
    %365 = arith.addf %362, %364 : vector<8x128xf32>
    %366 = math.tanh %365 : vector<8x128xf32>
    %367 = arith.subf %305, %366 : vector<8x128xf32>
    %368 = arith.mulf %361, %367 : vector<8x128xf32>
    %369 = arith.addf %366, %368 : vector<8x128xf32>
    %370 = arith.addi %28, %c3_i32_78 : i32
    %371 = vector.broadcast %370 : i32 to vector<8x1xi32>
    %372 = arith.cmpi sgt, %27, %371 : vector<8x1xi32>
    %373 = arith.addi %30, %306 : i32
    %374 = vector.broadcast %373 : i32 to vector<8x1xi32>
    %375 = arith.cmpi sgt, %27, %374 : vector<8x1xi32>
    %cst_89 = arith.constant 0.000000e+00 : f32
    %376 = vector.broadcast %cst_89 : f32 to vector<8x128xf32>
    %377 = vector.shape_cast %372 : vector<8x1xi1> to vector<8x1xi1>
    %378 = vector.broadcast %377 : vector<8x1xi1> to vector<8x128xi1>
    %379 = arith.select %378, %344, %376 : vector<8x128xi1>, vector<8x128xf32>
    %380 = arith.index_cast %c3_i32_78 : i32 to index
    %c0_90 = arith.constant 0 : index
    %c0_91 = arith.constant 0 : index
    %381 = vector.load %arg13[%380, %c0_90, %c0_91] : memref<4x8x128xf32, #tpu.memory_space<vmem>>, vector<1x8x128xf32>
    %382 = vector.shape_cast %381 : vector<1x8x128xf32> to vector<8x128xf32>
    %383 = vector.shape_cast %379 : vector<8x128xf32> to vector<1x8x128xf32>
    tpu.vector_store %arg13[%380, %c0_90, %c0_91], %383 {strides = array<i32>} : memref<4x8x128xf32, #tpu.memory_space<vmem>>, vector<1x8x128xf32>,
    %384 = vector.shape_cast %375 : vector<8x1xi1> to vector<8x1xi1>
    %385 = vector.broadcast %384 : vector<8x1xi1> to vector<8x128xi1>
    %386 = arith.select %385, %369, %376 : vector<8x128xi1>, vector<8x128xf32>
    %387 = arith.index_cast %306 : i32 to index
    %c0_92 = arith.constant 0 : index
    %c0_93 = arith.constant 0 : index
    %388 = vector.load %arg14[%387, %c0_92, %c0_93] : memref<4x8x128xf32, #tpu.memory_space<vmem>>, vector<1x8x128xf32>
    %389 = vector.shape_cast %388 : vector<1x8x128xf32> to vector<8x128xf32>
    %390 = vector.shape_cast %386 : vector<8x128xf32> to vector<1x8x128xf32>
    tpu.vector_store %arg14[%387, %c0_92, %c0_93], %390 {strides = array<i32>} : memref<4x8x128xf32, #tpu.memory_space<vmem>>, vector<1x8x128xf32>,
    %391 = vector.shape_cast %372 : vector<8x1xi1> to vector<8x1xi1>
    %392 = vector.broadcast %391 : vector<8x1xi1> to vector<8x128xi1>
    %393 = arith.select %392, %344, %302 : vector<8x128xi1>, vector<8x128xf32>
    %394 = vector.shape_cast %375 : vector<8x1xi1> to vector<8x1xi1>
    %395 = vector.broadcast %394 : vector<8x1xi1> to vector<8x128xi1>
    %396 = arith.select %395, %369, %305 : vector<8x128xi1>, vector<8x128xf32>
    %c4_i32_94 = arith.constant 4 : i32
    %c0_95 = arith.constant 0 : index
    %c0_96 = arith.constant 0 : index
    %397 = vector.load %arg19[%c0_95, %c0_96] : memref<8x128xf32, #tpu.memory_space<vmem>>, vector<8x128xf32>
    tpu.vector_store %arg19[%c0_95, %c0_96], %393 {strides = array<i32>} : memref<8x128xf32, #tpu.memory_space<vmem>>, vector<8x128xf32>,
    %c0_97 = arith.constant 0 : index
    %c0_98 = arith.constant 0 : index
    %398 = vector.load %arg20[%c0_97, %c0_98] : memref<8x128xf32, #tpu.memory_space<vmem>>, vector<8x128xf32>
    tpu.vector_store %arg20[%c0_97, %c0_98], %396 {strides = array<i32>} : memref<8x128xf32, #tpu.memory_space<vmem>>, vector<8x128xf32>,
    %c0_99 = arith.constant 0 : index
    %c0_100 = arith.constant 0 : index
    %c0_101 = arith.constant 0 : index
    %399 = vector.load %arg15[%c0_99, %c0_100, %c0_101] : memref<2x8x128xf32, #tpu.memory_space<vmem>>, vector<1x8x128xf32>
    %400 = vector.shape_cast %399 : vector<1x8x128xf32> to vector<8x128xf32>
    %401 = vector.shape_cast %393 : vector<8x128xf32> to vector<1x8x128xf32>
    tpu.vector_store %arg15[%c0_99, %c0_100, %c0_101], %401 {strides = array<i32>} : memref<2x8x128xf32, #tpu.memory_space<vmem>>, vector<1x8x128xf32>,
    %c1 = arith.constant 1 : index
    %c0_102 = arith.constant 0 : index
    %c0_103 = arith.constant 0 : index
    %402 = vector.load %arg15[%c1, %c0_102, %c0_103] : memref<2x8x128xf32, #tpu.memory_space<vmem>>, vector<1x8x128xf32>
    %403 = vector.shape_cast %402 : vector<1x8x128xf32> to vector<8x128xf32>
    %404 = vector.shape_cast %396 : vector<8x128xf32> to vector<1x8x128xf32>
    tpu.vector_store %arg15[%c1, %c0_102, %c0_103], %404 {strides = array<i32>} : memref<2x8x128xf32, #tpu.memory_space<vmem>>, vector<1x8x128xf32>,
    return
  }
  func.func @transform_0(%arg0: i32, %arg1: i32) -> (i32, i32, i32) {
    %c0_i32 = arith.constant 0 : i32
    %c0_i32_0 = arith.constant 0 : i32
    return %arg1, %arg0, %c0_i32 : i32, i32, i32
  }
  func.func @transform_1(%arg0: i32, %arg1: i32) -> (i32, i32, i32) {
    %c1_i32 = arith.constant 1 : i32
    %0 = arith.subi %c1_i32, %arg1 : i32
    %c0_i32 = arith.constant 0 : i32
    %c0_i32_0 = arith.constant 0 : i32
    return %0, %arg0, %c0_i32 : i32, i32, i32
  }
  func.func @transform_2(%arg0: i32, %arg1: i32) -> (i32, i32) {
    %c0_i32 = arith.constant 0 : i32
    %c0_i32_0 = arith.constant 0 : i32
    return %arg0, %c0_i32 : i32, i32
  }
  func.func @transform_3(%arg0: i32, %arg1: i32) -> (i32, i32) {
    %c0_i32 = arith.constant 0 : i32
    %c0_i32_0 = arith.constant 0 : i32
    %c0_i32_1 = arith.constant 0 : i32
    return %c0_i32, %c0_i32_0 : i32, i32
  }
  func.func @transform_4(%arg0: i32, %arg1: i32) -> (i32, i32) {
    %c0_i32 = arith.constant 0 : i32
    %c0_i32_0 = arith.constant 0 : i32
    %c0_i32_1 = arith.constant 0 : i32
    return %c0_i32, %c0_i32_0 : i32, i32
  }
  func.func @transform_5(%arg0: i32, %arg1: i32) -> (i32, i32) {
    %c0_i32 = arith.constant 0 : i32
    %c0_i32_0 = arith.constant 0 : i32
    %c0_i32_1 = arith.constant 0 : i32
    return %c0_i32, %c0_i32_0 : i32, i32
  }
  func.func @transform_6(%arg0: i32, %arg1: i32) -> (i32, i32) {
    %c0_i32 = arith.constant 0 : i32
    %c0_i32_0 = arith.constant 0 : i32
    %c0_i32_1 = arith.constant 0 : i32
    return %c0_i32, %c0_i32_0 : i32, i32
  }
  func.func @transform_7(%arg0: i32, %arg1: i32) -> (i32, i32) {
    %c0_i32 = arith.constant 0 : i32
    %c0_i32_0 = arith.constant 0 : i32
    %c0_i32_1 = arith.constant 0 : i32
    return %c0_i32, %c0_i32_0 : i32, i32
  }
  func.func @transform_8(%arg0: i32, %arg1: i32) -> (i32, i32) {
    %c0_i32 = arith.constant 0 : i32
    %c0_i32_0 = arith.constant 0 : i32
    %c0_i32_1 = arith.constant 0 : i32
    return %c0_i32, %c0_i32_0 : i32, i32
  }
  func.func @transform_9(%arg0: i32, %arg1: i32) -> (i32, i32) {
    %c0_i32 = arith.constant 0 : i32
    %c0_i32_0 = arith.constant 0 : i32
    return %arg0, %c0_i32 : i32, i32
  }
  func.func @transform_10(%arg0: i32, %arg1: i32) -> (i32, i32) {
    %c0_i32 = arith.constant 0 : i32
    %c0_i32_0 = arith.constant 0 : i32
    %c0_i32_1 = arith.constant 0 : i32
    return %c0_i32, %c0_i32_0 : i32, i32
  }
  func.func @transform_11(%arg0: i32, %arg1: i32) -> (i32, i32, i32) {
    %c0_i32 = arith.constant 0 : i32
    %c0_i32_0 = arith.constant 0 : i32
    return %arg1, %arg0, %c0_i32 : i32, i32, i32
  }
  func.func @transform_12(%arg0: i32, %arg1: i32) -> (i32, i32, i32) {
    %c1_i32 = arith.constant 1 : i32
    %0 = arith.subi %c1_i32, %arg1 : i32
    %c0_i32 = arith.constant 0 : i32
    %c0_i32_0 = arith.constant 0 : i32
    return %0, %arg0, %c0_i32 : i32, i32, i32
  }
  func.func @transform_13(%arg0: i32, %arg1: i32) -> (i32, i32, i32) {
    %c0_i32 = arith.constant 0 : i32
    %c0_i32_0 = arith.constant 0 : i32
    %c0_i32_1 = arith.constant 0 : i32
    return %c0_i32, %arg0, %c0_i32_0 : i32, i32, i32
  }
  func.func @transform_14(%arg0: i32, %arg1: i32) -> (i32, i32) {
    %c0_i32 = arith.constant 0 : i32
    %c0_i32_0 = arith.constant 0 : i32
    return %arg0, %c0_i32 : i32, i32
  }
}

</mosaic_0001>

<llo_original>
// kernel: tpu_custom_call.1
$region0: #{tpu_custom_call.1}
  #allocation0 [shape = 'u32[]', space=smem, size = 0x4, offset = 0x4, fixed_abs, tag = 'smem constant byte address 0x4 - core index']
  #allocation1 [shape = 'u32[144,128]{1,0:T(1,128)}', space=vmem, size = 0x12000, scoped, tag = 'internal scratch']
  #allocation2 [shape = 'bf16[4,8,384]{2,1,0:T(8,128)(2,1)}', space=vmem, size = 0x6000, scoped, tag = 'scratch operand']
  #allocation3 [shape = 'bf16[4,8,384]{2,1,0:T(8,128)(2,1)}', space=vmem, size = 0x6000, scoped, tag = 'scratch operand']
  #allocation4 [shape = 'f32[8,128]{1,0:T(8,128)}', space=vmem, size = 0x1000, scoped, tag = 'scratch operand']
  #allocation5 [shape = 'f32[8,128]{1,0:T(8,128)}', space=vmem, size = 0x1000, scoped, tag = 'scratch operand']
  %s0 = inlined_call_operand.hbm [shape: f32[8,8,128], index: 0, kind: input, shape index: {}]
  %s1 = inlined_call_operand.hbm [shape: f32[8,8,128], index: 1, kind: input, shape index: {}]
  %s2 = inlined_call_operand.vmem [shape: s32[8,1], index: 2, kind: input, shape index: {}]
  %s3 = inlined_call_operand.hbm [shape: bf16[128,384], index: 3, kind: input, shape index: {}]
  %s4 = inlined_call_operand.hbm [shape: bf16[128,384], index: 4, kind: input, shape index: {}]
  %s5 = inlined_call_operand.hbm [shape: bf16[256,768], index: 5, kind: input, shape index: {}]
  %s6 = inlined_call_operand.vmem [shape: f32[1,384], index: 6, kind: input, shape index: {}]
  %s7 = inlined_call_operand.vmem [shape: f32[1,384], index: 7, kind: input, shape index: {}]
  %s8 = inlined_call_operand.vmem [shape: f32[1,768], index: 8, kind: input, shape index: {}]
  %s9 = inlined_call_operand.vmem [shape: f32[8,128], index: 9, kind: input, shape index: {}]
  %s10 = inlined_call_operand.hbm [shape: f32[128,128], index: 10, kind: input, shape index: {}]
  %s11 = inlined_call_operand.hbm [shape: f32[8,8,128], index: 11, kind: output, shape index: {0}]
  %s12 = inlined_call_operand.hbm [shape: f32[8,8,128], index: 12, kind: output, shape index: {1}]
  %s13 = inlined_call_operand.hbm [shape: f32[2,8,128], index: 13, kind: output, shape index: {2}]
  %s14 = inlined_call_operand.hbm [shape: f32[8,128], index: 14, kind: output, shape index: {3}]
  %15 = xla_tuple %s11, %s12, %s13, %s14
  %s16 = sld [smem:[#allocation0]]
  $region129: #{tpu_custom_call.1} parent=0
    _
  %s18 = ssub.s32 1, %s16
  %s19 = scalar_select 0, %s18, %s16
  $region1: #{tpu_custom_call.1} parent=0
    #allocation6 [shape = 'u8[32768]{0}', space=vmem, size = 0x8000, scoped, tag = 'input window, operand 0']
    #allocation7 [shape = 's32[2]{0}', space=sflag, size = 0x8, scoped, tag = 'scoped memory for tpu_custom_call.1']
    #allocation8 [shape = 's32[2]{0}', space=sflag, size = 0x8, scoped, tag = 'scoped memory for tpu_custom_call.1']
    #allocation9 [shape = 'u8[32768]{0}', space=vmem, size = 0x8000, scoped, tag = 'input window, operand 1']
    #allocation10 [shape = 's32[2]{0}', space=sflag, size = 0x8, scoped, tag = 'scoped memory for tpu_custom_call.1']
    #allocation11 [shape = 'u8[98304]{0}', space=vmem, size = 0x18000, scoped, tag = 'input window, operand 3, single buffered']
    #allocation12 [shape = 'u8[98304]{0}', space=vmem, size = 0x18000, scoped, tag = 'input window, operand 4, single buffered']
    #allocation13 [shape = 's32[1]{0}', space=sflag, size = 0x4, scoped, tag = 'scoped memory for tpu_custom_call.1']
    #allocation14 [shape = 'u8[393216]{0}', space=vmem, size = 0x60000, scoped, tag = 'input window, operand 5, single buffered']
    #allocation15 [shape = 'u8[65536]{0}', space=vmem, size = 0x10000, scoped, tag = 'input window, operand 10, single buffered']
    #allocation16 [shape = 's32[1]{0}', space=sflag, size = 0x4, scoped, tag = 'scoped memory for tpu_custom_call.1']
    #allocation17 [shape = 'u8[32768]{0}', space=vmem, size = 0x8000, scoped, tag = 'output window, operand 0']
    #allocation18 [shape = 'u8[32768]{0}', space=vmem, size = 0x8000, scoped, tag = 'output window, operand 1']
    #allocation19 [shape = 's32[2]{0}', space=sflag, size = 0x8, scoped, tag = 'scoped memory for tpu_custom_call.1']
    #allocation20 [shape = 'u8[8192]{0}', space=vmem, size = 0x2000, scoped, tag = 'output window, operand 2, single buffered']
    #allocation21 [shape = 'u8[4096]{0}', space=vmem, size = 0x1000, scoped, tag = 'output window, operand 3, single buffered']
    #allocation22 [shape = 's32[1]{0}', space=sflag, size = 0x4, scoped, tag = 'scoped memory for tpu_custom_call.1']
    %20 = vsyncpa [#allocation7], 0
    %s21 = scalar_lea.sflag [#allocation7], 1
    %22 = vsyncpa %s21, 0
    %23 = vsyncpa [#allocation10], 0
    %s24 = scalar_lea.sflag [#allocation10], 1
    %25 = vsyncpa %s24, 0
    %26 = vsyncpa [#allocation13], 0
    %27 = vsyncpa [#allocation16], 0
    %28 = vsyncpa [#allocation8], 0
    %s29 = scalar_lea.sflag [#allocation8], 1
    %30 = vsyncpa %s29, 0
    %31 = vsyncpa [#allocation19], 0
    %s32 = scalar_lea.sflag [#allocation19], 1
    %33 = vsyncpa %s32, 0
    %34 = vsyncpa [#allocation22], 0
    loop: start=0, step=1, limit=4
    $region2: #{tpu_custom_call.1} parent=1 // loop_pre_header
      _
    $region3: #{tpu_custom_call.1} parent=1 // loop_header
      %s36 = sphi 0, %s40
      %p37 = scmp.ge.s32.totalorder %s36, 4
      %s43 = sphi 0, %s55
      %s44 = sphi 0, %s51
      %s45 = sphi 0, %s43
      %s46 = sphi 0, %s44
      %s47 = sphi 0, %s45
      %s48 = sphi 0, %s46
      %s60 = sphi 0, %s62
      %s63 = sphi 0, %s60
      %s64 = sphi 0, %s63
      %s80 = sphi 0, %s64
      %s90 = sphi 0, %s92
      %s93 = sphi 0, %s90
      %s94 = sphi 0, %s93
      %s110 = sphi 0, %s94
      %s116 = sphi 0, %s118
      %s119 = sphi 0, %s116
      %s120 = sphi 0, %s119
      %s136 = sphi 0, %s120
      %s140 = sphi 0, %s140
      %s142 = sphi 0, %s140
      %s143 = sphi 0, %s142
      %s157 = sphi 0, %s143
      %s161 = sphi 0, %s161
      %s163 = sphi 0, %s161
      %s164 = sphi 0, %s163
      %s178 = sphi 0, %s164
      %s182 = sphi 0, %s182
      %s184 = sphi 0, %s182
      %s185 = sphi 0, %s184
      %s199 = sphi 0, %s185
      %s203 = sphi 0, %s203
      %s205 = sphi 0, %s203
      %s206 = sphi 0, %s205
      %s220 = sphi 0, %s206
      %s224 = sphi 0, %s224
      %s226 = sphi 0, %s224
      %s227 = sphi 0, %s226
      %s241 = sphi 0, %s227
      %s245 = sphi 0, %s245
      %s247 = sphi 0, %s245
      %s248 = sphi 0, %s247
      %s262 = sphi 0, %s248
      %s268 = sphi 0, %s270
      %s271 = sphi 0, %s268
      %s272 = sphi 0, %s271
      %s288 = sphi 0, %s272
      %s292 = sphi 0, %s292
      %s294 = sphi 0, %s292
      %s295 = sphi 0, %s294
      %s309 = sphi 0, %s295
      %s317 = sphi 0, %s319
      %s320 = sphi 0, %s317
      %s321 = sphi 0, %s320
      %s337 = sphi 0, %s321
      %s347 = sphi 0, %s349
      %s350 = sphi 0, %s347
      %s351 = sphi 0, %s350
      %s367 = sphi 0, %s351
      %s373 = sphi 0, %s375
      %s376 = sphi 0, %s373
      %s377 = sphi 0, %s376
      %s393 = sphi 0, %s377
      %s399 = sphi 0, %s401
      %s402 = sphi 0, %s399
      %s403 = sphi 0, %s402
      %s419 = sphi 0, %s403
    $region4: #{tpu_custom_call.1} parent=1 // loop_header_branch
      %39 = sbr.rel (%p37) target = $region8
    $region5: #{tpu_custom_call.1} parent=1 // loop_body
      %s41 = ssub.s32 %s36, 1
      %s42 = ssub.s32 %s36, 2
      %s49 = sadd.s32 1, %s44
      %p50 = scmp.ge.s32.totalorder %s49, 2
      %s51 = scalar_select %p50, 0, %s49
      %s52 = sadd.s32 1, %s43
      %s53 = scalar_select %p50, %s52, %s43
      %p54 = scmp.ge.s32.totalorder %s53, 1
      %s55 = scalar_select %p54, 0, %s53
      %s56 = ssub.s32 %s44, %s51
      %s57 = ssub.s32 %s43, %s55
      %s58 = sor.u32 %s56, %s57
      %p59 = scmp.eq.s32.totalorder %s58, 0
      %s61 = sadd.s32 %s60, 1
      %s62 = scalar_select %p59, %s60, %s61
      %p65 = pneg %p59
      %p66 = scmp.eq.s32.totalorder %s36, 1
      %p67 = por %p65, %p66
      %p68 = scmp.ne.s32.totalorder %s60, %s63
      %p69 = scmp.eq.s32.totalorder %s36, 0
      %p70 = por %p68, %p69
      %p71 = scmp.ne.s32.totalorder %s60, %s63
      %p72 = scmp.eq.s32.totalorder %s41, 1
      %p73 = por %p71, %p72
      %p74 = scmp.ne.s32.totalorder %s63, %s64
      %p75 = scmp.eq.s32.totalorder %s41, 0
      %p76 = por %p74, %p75
      %p77 = scmp.ne.s32.totalorder %s63, %s64
      %p78 = scmp.eq.s32.totalorder %s42, 1
      %p79 = por %p77, %p78
      %p81 = scmp.ne.s32.totalorder %s64, %s80
      %p82 = scmp.eq.s32.totalorder %s42, 0
      %p83 = por %p81, %p82
      %s84 = ssub.s32 1, %s44
      %s85 = ssub.s32 1, %s51
      %s86 = ssub.s32 %s84, %s85
      %s87 = ssub.s32 %s43, %s55
      %s88 = sor.u32 %s86, %s87
      %p89 = scmp.eq.s32.totalorder %s88, 0
      %s91 = sadd.s32 %s90, 1
      %s92 = scalar_select %p89, %s90, %s91
      %p95 = pneg %p89
      %p96 = scmp.eq.s32.totalorder %s36, 1
      %p97 = por %p95, %p96
      %p98 = scmp.ne.s32.totalorder %s90, %s93
      %p99 = scmp.eq.s32.totalorder %s36, 0
      %p100 = por %p98, %p99
      %p101 = scmp.ne.s32.totalorder %s90, %s93
      %p102 = scmp.eq.s32.totalorder %s41, 1
      %p103 = por %p101, %p102
      %p104 = scmp.ne.s32.totalorder %s93, %s94
      %p105 = scmp.eq.s32.totalorder %s41, 0
      %p106 = por %p104, %p105
      %p107 = scmp.ne.s32.totalorder %s93, %s94
      %p108 = scmp.eq.s32.totalorder %s42, 1
      %p109 = por %p107, %p108
      %p111 = scmp.ne.s32.totalorder %s94, %s110
      %p112 = scmp.eq.s32.totalorder %s42, 0
      %p113 = por %p111, %p112
      %s114 = ssub.s32 %s43, %s55
      %p115 = scmp.eq.s32.totalorder %s114, 0
      %s117 = sadd.s32 %s116, 1
      %s118 = scalar_select %p115, %s116, %s117
      %p121 = pneg %p115
      %p122 = scmp.eq.s32.totalorder %s36, 1
      %p123 = por %p121, %p122
      %p124 = scmp.ne.s32.totalorder %s116, %s119
      %p125 = scmp.eq.s32.totalorder %s36, 0
      %p126 = por %p124, %p125
      %p127 = scmp.ne.s32.totalorder %s116, %s119
      %p128 = scmp.eq.s32.totalorder %s41, 1
      %p129 = por %p127, %p128
      %p130 = scmp.ne.s32.totalorder %s119, %s120
      %p131 = scmp.eq.s32.totalorder %s41, 0
      %p132 = por %p130, %p131
      %p133 = scmp.ne.s32.totalorder %s119, %s120
      %p134 = scmp.eq.s32.totalorder %s42, 1
      %p135 = por %p133, %p134
      %p137 = scmp.ne.s32.totalorder %s120, %s136
      %p138 = scmp.eq.s32.totalorder %s42, 0
      %p139 = por %p137, %p138
      %s141 = sadd.s32 %s140, 1
      %p144 = scmp.eq.s32.totalorder %s36, 1
      %p145 = scmp.ne.s32.totalorder %s140, %s142
      %p146 = scmp.eq.s32.totalorder %s36, 0
      %p147 = por %p145, %p146
      %p148 = scmp.ne.s32.totalorder %s140, %s142
      %p149 = scmp.eq.s32.totalorder %s41, 1
      %p150 = por %p148, %p149
      %p151 = scmp.ne.s32.totalorder %s142, %s143
      %p152 = scmp.eq.s32.totalorder %s41, 0
      %p153 = por %p151, %p152
      %p154 = scmp.ne.s32.totalorder %s142, %s143
      %p155 = scmp.eq.s32.totalorder %s42, 1
      %p156 = por %p154, %p155
      %p158 = scmp.ne.s32.totalorder %s143, %s157
      %p159 = scmp.eq.s32.totalorder %s42, 0
      %p160 = por %p158, %p159
      %s162 = sadd.s32 %s161, 1
      %p165 = scmp.eq.s32.totalorder %s36, 1
      %p166 = scmp.ne.s32.totalorder %s161, %s163
      %p167 = scmp.eq.s32.totalorder %s36, 0
      %p168 = por %p166, %p167
      %p169 = scmp.ne.s32.totalorder %s161, %s163
      %p170 = scmp.eq.s32.totalorder %s41, 1
      %p171 = por %p169, %p170
      %p172 = scmp.ne.s32.totalorder %s163, %s164
      %p173 = scmp.eq.s32.totalorder %s41, 0
      %p174 = por %p172, %p173
      %p175 = scmp.ne.s32.totalorder %s163, %s164
      %p176 = scmp.eq.s32.totalorder %s42, 1
      %p177 = por %p175, %p176
      %p179 = scmp.ne.s32.totalorder %s164, %s178
      %p180 = scmp.eq.s32.totalorder %s42, 0
      %p181 = por %p179, %p180
      %s183 = sadd.s32 %s182, 1
      %p186 = scmp.eq.s32.totalorder %s36, 1
      %p187 = scmp.ne.s32.totalorder %s182, %s184
      %p188 = scmp.eq.s32.totalorder %s36, 0
      %p189 = por %p187, %p188
      %p190 = scmp.ne.s32.totalorder %s182, %s184
      %p191 = scmp.eq.s32.totalorder %s41, 1
      %p192 = por %p190, %p191
      %p193 = scmp.ne.s32.totalorder %s184, %s185
      %p194 = scmp.eq.s32.totalorder %s41, 0
      %p195 = por %p193, %p194
      %p196 = scmp.ne.s32.totalorder %s184, %s185
      %p197 = scmp.eq.s32.totalorder %s42, 1
      %p198 = por %p196, %p197
      %p200 = scmp.ne.s32.totalorder %s185, %s199
      %p201 = scmp.eq.s32.totalorder %s42, 0
      %p202 = por %p200, %p201
      %s204 = sadd.s32 %s203, 1
      %p207 = scmp.eq.s32.totalorder %s36, 1
      %p208 = scmp.ne.s32.totalorder %s203, %s205
      %p209 = scmp.eq.s32.totalorder %s36, 0
      %p210 = por %p208, %p209
      %p211 = scmp.ne.s32.totalorder %s203, %s205
      %p212 = scmp.eq.s32.totalorder %s41, 1
      %p213 = por %p211, %p212
      %p214 = scmp.ne.s32.totalorder %s205, %s206
      %p215 = scmp.eq.s32.totalorder %s41, 0
      %p216 = por %p214, %p215
      %p217 = scmp.ne.s32.totalorder %s205, %s206
      %p218 = scmp.eq.s32.totalorder %s42, 1
      %p219 = por %p217, %p218
      %p221 = scmp.ne.s32.totalorder %s206, %s220
      %p222 = scmp.eq.s32.totalorder %s42, 0
      %p223 = por %p221, %p222
      %s225 = sadd.s32 %s224, 1
      %p228 = scmp.eq.s32.totalorder %s36, 1
      %p229 = scmp.ne.s32.totalorder %s224, %s226
      %p230 = scmp.eq.s32.totalorder %s36, 0
      %p231 = por %p229, %p230
      %p232 = scmp.ne.s32.totalorder %s224, %s226
      %p233 = scmp.eq.s32.totalorder %s41, 1
      %p234 = por %p232, %p233
      %p235 = scmp.ne.s32.totalorder %s226, %s227
      %p236 = scmp.eq.s32.totalorder %s41, 0
      %p237 = por %p235, %p236
      %p238 = scmp.ne.s32.totalorder %s226, %s227
      %p239 = scmp.eq.s32.totalorder %s42, 1
      %p240 = por %p238, %p239
      %p242 = scmp.ne.s32.totalorder %s227, %s241
      %p243 = scmp.eq.s32.totalorder %s42, 0
      %p244 = por %p242, %p243
      %s246 = sadd.s32 %s245, 1
      %p249 = scmp.eq.s32.totalorder %s36, 1
      %p250 = scmp.ne.s32.totalorder %s245, %s247
      %p251 = scmp.eq.s32.totalorder %s36, 0
      %p252 = por %p250, %p251
      %p253 = scmp.ne.s32.totalorder %s245, %s247
      %p254 = scmp.eq.s32.totalorder %s41, 1
      %p255 = por %p253, %p254
      %p256 = scmp.ne.s32.totalorder %s247, %s248
      %p257 = scmp.eq.s32.totalorder %s41, 0
      %p258 = por %p256, %p257
      %p259 = scmp.ne.s32.totalorder %s247, %s248
      %p260 = scmp.eq.s32.totalorder %s42, 1
      %p261 = por %p259, %p260
      %p263 = scmp.ne.s32.totalorder %s248, %s262
      %p264 = scmp.eq.s32.totalorder %s42, 0
      %p265 = por %p263, %p264
      %s266 = ssub.s32 %s43, %s55
      %p267 = scmp.eq.s32.totalorder %s266, 0
      %s269 = sadd.s32 %s268, 1
      %s270 = scalar_select %p267, %s268, %s269
      %p273 = pneg %p267
      %p274 = scmp.eq.s32.totalorder %s36, 1
      %p275 = por %p273, %p274
      %p276 = scmp.ne.s32.totalorder %s268, %s271
      %p277 = scmp.eq.s32.totalorder %s36, 0
      %p278 = por %p276, %p277
      %p279 = scmp.ne.s32.totalorder %s268, %s271
      %p280 = scmp.eq.s32.totalorder %s41, 1
      %p281 = por %p279, %p280
      %p282 = scmp.ne.s32.totalorder %s271, %s272
      %p283 = scmp.eq.s32.totalorder %s41, 0
      %p284 = por %p282, %p283
      %p285 = scmp.ne.s32.totalorder %s271, %s272
      %p286 = scmp.eq.s32.totalorder %s42, 1
      %p287 = por %p285, %p286
      %p289 = scmp.ne.s32.totalorder %s272, %s288
      %p290 = scmp.eq.s32.totalorder %s42, 0
      %p291 = por %p289, %p290
      %s293 = sadd.s32 %s292, 1
      %p296 = scmp.eq.s32.totalorder %s36, 1
      %p297 = scmp.ne.s32.totalorder %s292, %s294
      %p298 = scmp.eq.s32.totalorder %s36, 0
      %p299 = por %p297, %p298
      %p300 = scmp.ne.s32.totalorder %s292, %s294
      %p301 = scmp.eq.s32.totalorder %s41, 1
      %p302 = por %p300, %p301
      %p303 = scmp.ne.s32.totalorder %s294, %s295
      %p304 = scmp.eq.s32.totalorder %s41, 0
      %p305 = por %p303, %p304
      %p306 = scmp.ne.s32.totalorder %s294, %s295
      %p307 = scmp.eq.s32.totalorder %s42, 1
      %p308 = por %p306, %p307
      %p310 = scmp.ne.s32.totalorder %s295, %s309
      %p311 = scmp.eq.s32.totalorder %s42, 0
      %p312 = por %p310, %p311
      %s313 = ssub.s32 %s44, %s51
      %s314 = ssub.s32 %s43, %s55
      %s315 = sor.u32 %s313, %s314
      %p316 = scmp.eq.s32.totalorder %s315, 0
      %s318 = sadd.s32 %s317, 1
      %s319 = scalar_select %p316, %s317, %s318
      %p322 = pneg %p316
      %p323 = scmp.eq.s32.totalorder %s36, 1
      %p324 = por %p322, %p323
      %p325 = scmp.ne.s32.totalorder %s317, %s320
      %p326 = scmp.eq.s32.totalorder %s36, 0
      %p327 = por %p325, %p326
      %p328 = scmp.ne.s32.totalorder %s317, %s320
      %p329 = scmp.eq.s32.totalorder %s41, 1
      %p330 = por %p328, %p329
      %p331 = scmp.ne.s32.totalorder %s320, %s321
      %p332 = scmp.eq.s32.totalorder %s41, 0
      %p333 = por %p331, %p332
      %p334 = scmp.ne.s32.totalorder %s320, %s321
      %p335 = scmp.eq.s32.totalorder %s42, 1
      %p336 = por %p334, %p335
      %p338 = scmp.ne.s32.totalorder %s321, %s337
      %p339 = scmp.eq.s32.totalorder %s42, 0
      %p340 = por %p338, %p339
      %s341 = ssub.s32 1, %s44
      %s342 = ssub.s32 1, %s51
      %s343 = ssub.s32 %s341, %s342
      %s344 = ssub.s32 %s43, %s55
      %s345 = sor.u32 %s343, %s344
      %p346 = scmp.eq.s32.totalorder %s345, 0
      %s348 = sadd.s32 %s347, 1
      %s349 = scalar_select %p346, %s347, %s348
      %p352 = pneg %p346
      %p353 = scmp.eq.s32.totalorder %s36, 1
      %p354 = por %p352, %p353
      %p355 = scmp.ne.s32.totalorder %s347, %s350
      %p356 = scmp.eq.s32.totalorder %s36, 0
      %p357 = por %p355, %p356
      %p358 = scmp.ne.s32.totalorder %s347, %s350
      %p359 = scmp.eq.s32.totalorder %s41, 1
      %p360 = por %p358, %p359
      %p361 = scmp.ne.s32.totalorder %s350, %s351
      %p362 = scmp.eq.s32.totalorder %s41, 0
      %p363 = por %p361, %p362
      %p364 = scmp.ne.s32.totalorder %s350, %s351
      %p365 = scmp.eq.s32.totalorder %s42, 1
      %p366 = por %p364, %p365
      %p368 = scmp.ne.s32.totalorder %s351, %s367
      %p369 = scmp.eq.s32.totalorder %s42, 0
      %p370 = por %p368, %p369
      %s371 = ssub.s32 %s43, %s55
      %p372 = scmp.eq.s32.totalorder %s371, 0
      %s374 = sadd.s32 %s373, 1
      %s375 = scalar_select %p372, %s373, %s374
      %p378 = pneg %p372
      %p379 = scmp.eq.s32.totalorder %s36, 1
      %p380 = por %p378, %p379
      %p381 = scmp.ne.s32.totalorder %s373, %s376
      %p382 = scmp.eq.s32.totalorder %s36, 0
      %p383 = por %p381, %p382
      %p384 = scmp.ne.s32.totalorder %s373, %s376
      %p385 = scmp.eq.s32.totalorder %s41, 1
      %p386 = por %p384, %p385
      %p387 = scmp.ne.s32.totalorder %s376, %s377
      %p388 = scmp.eq.s32.totalorder %s41, 0
      %p389 = por %p387, %p388
      %p390 = scmp.ne.s32.totalorder %s376, %s377
      %p391 = scmp.eq.s32.totalorder %s42, 1
      %p392 = por %p390, %p391
      %p394 = scmp.ne.s32.totalorder %s377, %s393
      %p395 = scmp.eq.s32.totalorder %s42, 0
      %p396 = por %p394, %p395
      %s397 = ssub.s32 %s43, %s55
      %p398 = scmp.eq.s32.totalorder %s397, 0
      %s400 = sadd.s32 %s399, 1
      %s401 = scalar_select %p398, %s399, %s400
      %p404 = pneg %p398
      %p405 = scmp.eq.s32.totalorder %s36, 1
      %p406 = por %p404, %p405
      %p407 = scmp.ne.s32.totalorder %s399, %s402
      %p408 = scmp.eq.s32.totalorder %s36, 0
      %p409 = por %p407, %p408
      %p410 = scmp.ne.s32.totalorder %s399, %s402
      %p411 = scmp.eq.s32.totalorder %s41, 1
      %p412 = por %p410, %p411
      %p413 = scmp.ne.s32.totalorder %s402, %s403
      %p414 = scmp.eq.s32.totalorder %s41, 0
      %p415 = por %p413, %p414
      %p416 = scmp.ne.s32.totalorder %s402, %s403
      %p417 = scmp.eq.s32.totalorder %s42, 1
      %p418 = por %p416, %p417
      %p420 = scmp.ne.s32.totalorder %s403, %s419
      %p421 = scmp.eq.s32.totalorder %s42, 0
      %p422 = por %p420, %p421
      %p423 = scmp.le.s32.totalorder 1, %s36
      %p424 = scmp.lt.s32.totalorder %s36, 3
      %p425 = pnand %p423, %p424
      %p426 = pneg %p425
      // Predicated region
      $region9: #{tpu_custom_call.1} parent=5 // pred_check
        _
      $region10: #{tpu_custom_call.1} parent=5 // pred_check_branch
        %428 = sbr.rel (%p425) target = $region12
      $region11: #{tpu_custom_call.1} parent=5 // pred_region
        %s429 = ssub.s32 %s36, 1
        // Predicated region
        $region13: #{tpu_custom_call.1} parent=11 // pred_check
          %p430 = pneg %p132
        $region14: #{tpu_custom_call.1} parent=11 // pred_check_branch
          %432 = sbr.rel (%p430) target = $region16
        $region15: #{tpu_custom_call.1} parent=11 // pred_region
          %p433 = scmp.lt.s32.totalorder %s45, 0
          %s434 = scalar_select %p433, %s45, 0
          %s435 = smul.addr %s434, 8
          %s436 = scalar_lea.vmem %s2, %s435
        $region16: #{tpu_custom_call.1} parent=11 // pred_fallthru
          _
        // Predicated region
        $region17: #{tpu_custom_call.1} parent=11 // pred_check
          %p437 = pneg %p153
        $region18: #{tpu_custom_call.1} parent=11 // pred_check_branch
          %439 = sbr.rel (%p437) target = $region20
        $region19: #{tpu_custom_call.1} parent=11 // pred_region
          %s441 = ssub.s32 3072, 3072
          %442 = vsyncadd [#allocation10], %s441
          %s443 = sshll.u32 [#allocation11], 4
          %s444 = int_to_ptr.vmem [resolvable:$true] %s443
          %449 = dma.hbm_to_vmem [thread:$0]  %s3, 3072, %s444, [#allocation10], 192, 192, 12
        $region20: #{tpu_custom_call.1} parent=11 // pred_fallthru
          _
        // Predicated region
        $region21: #{tpu_custom_call.1} parent=11 // pred_check
          %p450 = pneg %p174
        $region22: #{tpu_custom_call.1} parent=11 // pred_check_branch
          %452 = sbr.rel (%p450) target = $region24
        $region23: #{tpu_custom_call.1} parent=11 // pred_region
          %s454 = ssub.s32 3072, 3072
          %455 = vsyncadd [#allocation13], %s454
          %s456 = sshll.u32 [#allocation12], 4
          %s457 = int_to_ptr.vmem [resolvable:$true] %s456
          %462 = dma.hbm_to_vmem [thread:$0]  %s4, 3072, %s457, [#allocation13], 192, 192, 12
        $region24: #{tpu_custom_call.1} parent=11 // pred_fallthru
          _
        // Predicated region
        $region25: #{tpu_custom_call.1} parent=11 // pred_check
          %p463 = pneg %p195
        $region26: #{tpu_custom_call.1} parent=11 // pred_check_branch
          %465 = sbr.rel (%p463) target = $region28
        $region27: #{tpu_custom_call.1} parent=11 // pred_region
          %s467 = ssub.s32 12288, 12288
          %468 = vsyncadd [#allocation13], %s467
          %s469 = sshll.u32 [#allocation14], 4
          %s470 = int_to_ptr.vmem [resolvable:$true] %s469
          %475 = dma.hbm_to_vmem [thread:$0]  %s5, 12288, %s470, [#allocation13], 384, 384, 24
        $region28: #{tpu_custom_call.1} parent=11 // pred_fallthru
          _
        // Predicated region
        $region29: #{tpu_custom_call.1} parent=11 // pred_check
          %p476 = pneg %p216
        $region30: #{tpu_custom_call.1} parent=11 // pred_check_branch
          %478 = sbr.rel (%p476) target = $region32
        $region31: #{tpu_custom_call.1} parent=11 // pred_region
          _
        $region32: #{tpu_custom_call.1} parent=11 // pred_fallthru
          _
        // Predicated region
        $region33: #{tpu_custom_call.1} parent=11 // pred_check
          %p479 = pneg %p237
        $region34: #{tpu_custom_call.1} parent=11 // pred_check_branch
          %481 = sbr.rel (%p479) target = $region36
        $region35: #{tpu_custom_call.1} parent=11 // pred_region
          _
        $region36: #{tpu_custom_call.1} parent=11 // pred_fallthru
          _
        // Predicated region
        $region37: #{tpu_custom_call.1} parent=11 // pred_check
          %p482 = pneg %p258
        $region38: #{tpu_custom_call.1} parent=11 // pred_check_branch
          %484 = sbr.rel (%p482) target = $region40
        $region39: #{tpu_custom_call.1} parent=11 // pred_region
          _
        $region40: #{tpu_custom_call.1} parent=11 // pred_fallthru
          _
        // Predicated region
        $region41: #{tpu_custom_call.1} parent=11 // pred_check
          %p485 = pneg %p284
        $region42: #{tpu_custom_call.1} parent=11 // pred_check_branch
          %487 = sbr.rel (%p485) target = $region44
        $region43: #{tpu_custom_call.1} parent=11 // pred_region
          %p488 = scmp.lt.s32.totalorder %s45, 0
          %s489 = scalar_select %p488, %s45, 0
          %s490 = smul.addr %s489, 8
          %s491 = scalar_lea.vmem %s9, %s490
        $region44: #{tpu_custom_call.1} parent=11 // pred_fallthru
          _
        // Predicated region
        $region45: #{tpu_custom_call.1} parent=11 // pred_check
          %p492 = pneg %p305
        $region46: #{tpu_custom_call.1} parent=11 // pred_check_branch
          %494 = sbr.rel (%p492) target = $region48
        $region47: #{tpu_custom_call.1} parent=11 // pred_region
          %s496 = ssub.s32 2048, 2048
          %497 = vsyncadd [#allocation16], %s496
          %s498 = sshll.u32 [#allocation15], 4
          %s499 = int_to_ptr.vmem [resolvable:$true] %s498
          %504 = dma.hbm_to_vmem [thread:$0]  %s10, 2048, %s499, [#allocation16], 128, 128, 8
        $region48: #{tpu_custom_call.1} parent=11 // pred_fallthru
          _
      $region12: #{tpu_custom_call.1} parent=5 // pred_fallthru
        _
      %p505 = scmp.lt.s32.totalorder %s36, 2
      // Predicated region
      $region49: #{tpu_custom_call.1} parent=5 // pred_check
        %p506 = pneg %p505
      $region50: #{tpu_custom_call.1} parent=5 // pred_check_branch
        %508 = sbr.rel (%p506) target = $region52
      $region51: #{tpu_custom_call.1} parent=5 // pred_region
        // Predicated region
        $region53: #{tpu_custom_call.1} parent=51 // pred_check
          %p509 = pneg %p70
        $region54: #{tpu_custom_call.1} parent=51 // pred_check_branch
          %511 = sbr.rel (%p509) target = $region56
        $region55: #{tpu_custom_call.1} parent=51 // pred_region
          %s512 = sand.u32 %s60, 1
          %s513 = scalar_lea.sflag [#allocation7], %s512
          %s514 = sand.u32 %s60, 1
          %s515 = smul.addr %s514, 32
          %s516 = scalar_lea.vmem [#allocation6], %s515
          %s517 = smul.u32 4, %s44
          %s519 = ssub.s32 512, 512
          %520 = vsyncadd %s513, %s519
          %s521 = sadd.s32 %s43, %s517
          %s522 = smul.addr %s521, 128
          %s523 = scalar_lea.hbm %s0, %s522
          %s524 = sshll.u32 %s516, 4
          %s525 = int_to_ptr.vmem [resolvable:$true] %s524
          %530 = dma.hbm_to_vmem [thread:$0]  %s523, 512, %s525, %s513, 128, 128, 8
        $region56: #{tpu_custom_call.1} parent=51 // pred_fallthru
          _
        // Predicated region
        $region57: #{tpu_custom_call.1} parent=51 // pred_check
          %p531 = pneg %p100
        $region58: #{tpu_custom_call.1} parent=51 // pred_check_branch
          %533 = sbr.rel (%p531) target = $region60
        $region59: #{tpu_custom_call.1} parent=51 // pred_region
          %s534 = sand.u32 %s36, 1
          %s535 = scalar_lea.sflag [#allocation10], %s534
          %s536 = sand.u32 %s90, 1
          %s537 = smul.addr %s536, 32
          %s538 = scalar_lea.vmem [#allocation9], %s537
          %s539 = ssub.s32 1, %s44
          %s540 = smul.u32 4, %s539
          %s542 = ssub.s32 512, 512
          %543 = vsyncadd %s535, %s542
          %s544 = sadd.s32 %s43, %s540
          %s545 = smul.addr %s544, 128
          %s546 = scalar_lea.hbm %s1, %s545
          %s547 = sshll.u32 %s538, 4
          %s548 = int_to_ptr.vmem [resolvable:$true] %s547
          %553 = dma.hbm_to_vmem [thread:$0]  %s546, 512, %s548, %s535, 128, 128, 8
        $region60: #{tpu_custom_call.1} parent=51 // pred_fallthru
          _
      $region52: #{tpu_custom_call.1} parent=5 // pred_fallthru
        _
      %p554 = scmp.le.s32.totalorder 1, %s36
      %p555 = scmp.lt.s32.totalorder %s36, 3
      %p556 = pnand %p554, %p555
      %p557 = pneg %p556
      // Predicated region
      $region61: #{tpu_custom_call.1} parent=5 // pred_check
        _
      $region62: #{tpu_custom_call.1} parent=5 // pred_check_branch
        %559 = sbr.rel (%p556) target = $region64
      $region63: #{tpu_custom_call.1} parent=5 // pred_region
        %s560 = ssub.s32 %s36, 1
        %s561 = sand.u32 %s63, 1
        %s562 = scalar_lea.sflag [#allocation7], %s561
        %s563 = sand.u32 %s63, 1
        %s564 = smul.addr %s563, 32
        %s565 = scalar_lea.vmem [#allocation6], %s564
        // Predicated region
        $region65: #{tpu_custom_call.1} parent=63 // pred_check
          %p566 = pneg %p76
        $region66: #{tpu_custom_call.1} parent=63 // pred_check_branch
          %568 = sbr.rel (%p566) target = $region68
        $region67: #{tpu_custom_call.1} parent=63 // pred_region
          %569 = dma.done %s562, 512
        $region68: #{tpu_custom_call.1} parent=63 // pred_fallthru
          _
        %s570 = sand.u32 %s41, 1
        %s571 = scalar_lea.sflag [#allocation10], %s570
        %s572 = sand.u32 %s93, 1
        %s573 = smul.addr %s572, 32
        %s574 = scalar_lea.vmem [#allocation9], %s573
        // Predicated region
        $region69: #{tpu_custom_call.1} parent=63 // pred_check
          %p575 = pneg %p106
        $region70: #{tpu_custom_call.1} parent=63 // pred_check_branch
          %577 = sbr.rel (%p575) target = $region72
        $region71: #{tpu_custom_call.1} parent=63 // pred_region
          %578 = dma.done %s571, 512
        $region72: #{tpu_custom_call.1} parent=63 // pred_fallthru
          _
        // Predicated region
        $region73: #{tpu_custom_call.1} parent=63 // pred_check
          %p579 = pneg %p153
        $region74: #{tpu_custom_call.1} parent=63 // pred_check_branch
          %581 = sbr.rel (%p579) target = $region76
        $region75: #{tpu_custom_call.1} parent=63 // pred_region
          %582 = dma.done [#allocation10], 3072
        $region76: #{tpu_custom_call.1} parent=63 // pred_fallthru
          _
        // Predicated region
        $region77: #{tpu_custom_call.1} parent=63 // pred_check
          %p583 = pneg %p174
        $region78: #{tpu_custom_call.1} parent=63 // pred_check_branch
          %585 = sbr.rel (%p583) target = $region80
        $region79: #{tpu_custom_call.1} parent=63 // pred_region
          %586 = dma.done [#allocation13], 3072
        $region80: #{tpu_custom_call.1} parent=63 // pred_fallthru
          _
        // Predicated region
        $region81: #{tpu_custom_call.1} parent=63 // pred_check
          %p587 = pneg %p195
        $region82: #{tpu_custom_call.1} parent=63 // pred_check_branch
          %589 = sbr.rel (%p587) target = $region84
        $region83: #{tpu_custom_call.1} parent=63 // pred_region
          %590 = dma.done [#allocation13], 12288
        $region84: #{tpu_custom_call.1} parent=63 // pred_fallthru
          _
        // Predicated region
        $region85: #{tpu_custom_call.1} parent=63 // pred_check
          %p591 = pneg %p305
        $region86: #{tpu_custom_call.1} parent=63 // pred_check_branch
          %593 = sbr.rel (%p591) target = $region88
        $region87: #{tpu_custom_call.1} parent=63 // pred_region
          %594 = dma.done [#allocation16], 2048
        $region88: #{tpu_custom_call.1} parent=63 // pred_fallthru
          _
        %s595 = sand.u32 %s63, 1
        %s596 = scalar_lea.sflag [#allocation7], %s595
        %s597 = sand.u32 %s63, 1
        %s598 = smul.addr %s597, 32
        %s599 = scalar_lea.vmem [#allocation6], %s598
        %p600 = pneg %p76
        %p601 = pneg %p73
        %s602 = sand.u32 %s41, 1
        %s603 = scalar_lea.sflag [#allocation10], %s602
        %s604 = sand.u32 %s93, 1
        %s605 = smul.addr %s604, 32
        %s606 = scalar_lea.vmem [#allocation9], %s605
        %p607 = pneg %p106
        %p608 = pneg %p103
        %p609 = scmp.lt.s32.totalorder %s45, 0
        %s610 = scalar_select %p609, %s45, 0
        %s611 = smul.addr %s610, 8
        %s612 = scalar_lea.vmem %s2, %s611
        %p613 = pneg %p132
        %p614 = pneg %p129
        %p615 = pneg %p153
        %p616 = pneg %p150
        %p617 = pneg %p174
        %p618 = pneg %p171
        %p619 = pneg %p195
        %p620 = pneg %p192
        %p621 = pneg %p216
        %p622 = pneg %p213
        %p623 = pneg %p237
        %p624 = pneg %p234
        %p625 = pneg %p258
        %p626 = pneg %p255
        %p627 = scmp.lt.s32.totalorder %s45, 0
        %s628 = scalar_select %p627, %s45, 0
        %s629 = smul.addr %s628, 8
        %s630 = scalar_lea.vmem %s9, %s629
        %p631 = pneg %p284
        %p632 = pneg %p281
        %p633 = pneg %p305
        %p634 = pneg %p302
        %p635 = pneg %p333
        %p636 = pneg %p330
        %s637 = sand.u32 %s320, 1
        %s638 = scalar_lea.sflag [#allocation8], %s637
        %s639 = sand.u32 %s320, 1
        %s640 = smul.addr %s639, 32
        %s641 = scalar_lea.vmem [#allocation17], %s640
        %p642 = pneg %p363
        %p643 = pneg %p360
        %s644 = sand.u32 %s41, 1
        %s645 = scalar_lea.sflag [#allocation19], %s644
        %s646 = sand.u32 %s350, 1
        %s647 = smul.addr %s646, 32
        %s648 = scalar_lea.vmem [#allocation18], %s647
        %p649 = pneg %p389
        %p650 = pneg %p386
        %p651 = pneg %p415
        %p652 = pneg %p412
        %s653 = smul.u32 4, %s46
        %s654 = ssub.s32 1, %s46
        %s655 = smul.u32 4, %s654
        %p656 = scmp.lt.s32.totalorder %s45, 0
        %s657 = scalar_select %p656, %s45, 0
        %s658 = smul.addr %s657, 8
        %s659 = scalar_lea.vmem %s2, %s658
        %p660 = scmp.lt.s32.totalorder %s45, 0
        %s661 = scalar_select %p660, %s45, 0
        %s662 = smul.addr %s661, 8
        %s663 = scalar_lea.vmem %s9, %s662
        %s664 = smul.u32 4, %s46
        %s665 = ssub.s32 1, %s46
        %s666 = smul.u32 4, %s665
        %p668 = scmp.eq.s32.totalorder %s46, 0
        // Predicated region
        $region89: #{tpu_custom_call.1} parent=63 // pred_check
          %p669 = pneg %p668
        $region90: #{tpu_custom_call.1} parent=63 // pred_check_branch
          %671 = sbr.rel (%p669) target = $region92
        $region91: #{tpu_custom_call.1} parent=63 // pred_region
          %672 = vst [vmem:[#allocation4] sm:$0xff] 0.0
          %673 = vst [vmem:[#allocation5] sm:$0xff] 0.0
          %v674 = vld [vmem:[%s663] sm:$0xff]
          %v675 = vld [vmem:[#allocation15] sm:$0xff]
          %v676 = vld [vmem:[#allocation15 + $0x8] sm:$0xff]
          %v677 = vld [vmem:[#allocation15 + $0x10] sm:$0xff]
          %v678 = vld [vmem:[#allocation15 + $0x18] sm:$0xff]
          %v679 = vld [vmem:[#allocation15 + $0x20] sm:$0xff]
          %v680 = vld [vmem:[#allocation15 + $0x28] sm:$0xff]
          %v681 = vld [vmem:[#allocation15 + $0x30] sm:$0xff]
          %v682 = vld [vmem:[#allocation15 + $0x38] sm:$0xff]
          %v683 = vld [vmem:[#allocation15 + $0x40] sm:$0xff]
          %v684 = vld [vmem:[#allocation15 + $0x48] sm:$0xff]
          %v685 = vld [vmem:[#allocation15 + $0x50] sm:$0xff]
          %v686 = vld [vmem:[#allocation15 + $0x58] sm:$0xff]
          %v687 = vld [vmem:[#allocation15 + $0x60] sm:$0xff]
          %v688 = vld [vmem:[#allocation15 + $0x68] sm:$0xff]
          %v689 = vld [vmem:[#allocation15 + $0x70] sm:$0xff]
          %v690 = vld [vmem:[#allocation15 + $0x78] sm:$0xff]
          %691 = vmatprep.subr.mxu0 0.0
          %692 = vmatpush1.msra.mxu0 %v675
          %693 = vmatprep.subr.mxu0 0.0
          %694 = vmatpush1.msra.mxu0 %v676
          %695 = vmatprep.subr.mxu0 0.0
          %696 = vmatpush1.msra.mxu0 %v677
          %697 = vmatprep.subr.mxu0 0.0
          %698 = vmatpush1.msra.mxu0 %v678
          %699 = vmatprep.subr.mxu0 0.0
          %700 = vmatpush1.msra.mxu0 %v679
          %701 = vmatprep.subr.mxu0 0.0
          %702 = vmatpush1.msra.mxu0 %v680
          %703 = vmatprep.subr.mxu0 0.0
          %704 = vmatpush1.msra.mxu0 %v681
          %705 = vmatprep.subr.mxu0 0.0
          %706 = vmatpush1.msra.mxu0 %v682
          %707 = vmatprep.subr.mxu0 0.0
          %708 = vmatpush1.msra.mxu0 %v683
          %709 = vmatprep.subr.mxu0 0.0
          %710 = vmatpush1.msra.mxu0 %v684
          %711 = vmatprep.subr.mxu0 0.0
          %712 = vmatpush1.msra.mxu0 %v685
          %713 = vmatprep.subr.mxu0 0.0
          %714 = vmatpush1.msra.mxu0 %v686
          %715 = vmatprep.subr.mxu0 0.0
          %716 = vmatpush1.msra.mxu0 %v687
          %717 = vmatprep.subr.mxu0 0.0
          %718 = vmatpush1.msra.mxu0 %v688
          %719 = vmatprep.subr.mxu0 0.0
          %720 = vmatpush1.msra.mxu0 %v689
          %721 = vmatprep.subr.mxu0 0.0
          %722 = vmatpush1.msra.mxu0 %v690
          %723 = vmatprep.subr.mxu0 0.0
          %724 = vmatpush1.msra.mxu0 0.0
          %725 = vmatprep.subr.mxu0 0.0
          %726 = vmatpush1.msra.mxu0 0.0
          %727 = vmatprep.subr.mxu0 0.0
          %728 = vmatpush1.msra.mxu0 0.0
          %729 = vmatprep.subr.mxu0 0.0
          %730 = vmatpush1.msra.mxu0 0.0
          %731 = vmatprep.subr.mxu0 0.0
          %732 = vmatpush1.msra.mxu0 0.0
          %733 = vmatprep.subr.mxu0 0.0
          %734 = vmatpush1.msra.mxu0 0.0
          %735 = vmatprep.subr.mxu0 0.0
          %736 = vmatpush1.msra.mxu0 0.0
          %737 = vmatprep.subr.mxu0 0.0
          %738 = vmatpush1.msra.mxu0 0.0
          %739 = vmatprep.subr.mxu0 0.0
          %740 = vmatpush1.msra.mxu0 0.0
          %741 = vmatprep.subr.mxu0 0.0
          %742 = vmatpush1.msra.mxu0 0.0
          %743 = vmatprep.subr.mxu0 0.0
          %744 = vmatpush1.msra.mxu0 0.0
          %745 = vmatprep.subr.mxu0 0.0
          %746 = vmatpush1.msra.mxu0 0.0
          %747 = vmatprep.subr.mxu0 0.0
          %748 = vmatpush1.msra.mxu0 0.0
          %749 = vmatprep.subr.mxu0 0.0
          %750 = vmatpush1.msra.mxu0 0.0
          %751 = vmatprep.subr.mxu0 0.0
          %752 = vmatpush1.msra.mxu0 0.0
          %753 = vmatprep.subr.mxu0 0.0
          %754 = vmatpush1.msra.mxu0 0.0
          %755 = vmatprep.mubr.f32.mxu0 0.0
          %756 = vmatmul.mubr.f32.gmra.mrb[0].mxu0 %v674
          %v757 = vpop.f32.mrb[0].mxu0
          %v758 = vadd.f32 0.0, %v757
          %v759 = vpop.f32.mrb[0].mxu0
          %760 = vdwg.mxu0
          %761 = vst [vmem:[#allocation21] sm:$0xff] %v758
        $region92: #{tpu_custom_call.1} parent=63 // pred_fallthru
          _
        %v762 = vld [vmem:[%s565] sm:$0xff]
        %v763 = vld [vmem:[%s565 + $0x8] sm:$0xff]
        %v764 = vld [vmem:[%s565 + $0x10] sm:$0xff]
        %v765 = vld [vmem:[%s565 + $0x18] sm:$0xff]
        %v766 = vpack.c.bf16 %v763, %v762
        %v767 = vpack.c.bf16 %v765, %v764
        %v768 = vld [vmem:[%s574] sm:$0xff]
        %v769 = vld [vmem:[%s574 + $0x8] sm:$0xff]
        %v770 = vld [vmem:[%s574 + $0x10] sm:$0xff]
        %v771 = vld [vmem:[%s574 + $0x18] sm:$0xff]
        %v772 = vpack.c.bf16 %v769, %v768
        %v773 = vpack.c.bf16 %v771, %v770
        %v774 = vld [vmem:[#allocation11] sm:$0xff]
        %v775 = vld [vmem:[#allocation11 + $0x8] sm:$0xf]
        %v776 = vld [vmem:[#allocation11 + $0xc] sm:$0xff]
        %v777 = vld [vmem:[#allocation11 + $0x14] sm:$0xf]
        %v778 = vld [vmem:[#allocation11 + $0x18] sm:$0xff]
        %v779 = vld [vmem:[#allocation11 + $0x20] sm:$0xf]
        %v780 = vld [vmem:[#allocation11 + $0x24] sm:$0xff]
        %v781 = vld [vmem:[#allocation11 + $0x2c] sm:$0xf]
        %v782 = vld [vmem:[#allocation11 + $0x30] sm:$0xff]
        %v783 = vld [vmem:[#allocation11 + $0x38] sm:$0xf]
        %v784 = vld [vmem:[#allocation11 + $0x3c] sm:$0xff]
        %v785 = vld [vmem:[#allocation11 + $0x44] sm:$0xf]
        %v786 = vld [vmem:[#allocation11 + $0x48] sm:$0xff]
        %v787 = vld [vmem:[#allocation11 + $0x50] sm:$0xf]
        %v788 = vld [vmem:[#allocation11 + $0x54] sm:$0xff]
        %v789 = vld [vmem:[#allocation11 + $0x5c] sm:$0xf]
        %v790 = vld [vmem:[#allocation11 + $0x60] sm:$0xff]
        %v791 = vld [vmem:[#allocation11 + $0x68] sm:$0xf]
        %v792 = vld [vmem:[#allocation11 + $0x6c] sm:$0xff]
        %v793 = vld [vmem:[#allocation11 + $0x74] sm:$0xf]
        %v794 = vld [vmem:[#allocation11 + $0x78] sm:$0xff]
        %v795 = vld [vmem:[#allocation11 + $0x80] sm:$0xf]
        %v796 = vld [vmem:[#allocation11 + $0x84] sm:$0xff]
        %v797 = vld [vmem:[#allocation11 + $0x8c] sm:$0xf]
        %v798 = vld [vmem:[#allocation11 + $0x90] sm:$0xff]
        %v799 = vld [vmem:[#allocation11 + $0x98] sm:$0xf]
        %v800 = vld [vmem:[#allocation11 + $0x9c] sm:$0xff]
        %v801 = vld [vmem:[#allocation11 + $0xa4] sm:$0xf]
        %v802 = vld [vmem:[#allocation11 + $0xa8] sm:$0xff]
        %v803 = vld [vmem:[#allocation11 + $0xb0] sm:$0xf]
        %v804 = vld [vmem:[#allocation11 + $0xb4] sm:$0xff]
        %v805 = vld [vmem:[#allocation11 + $0xbc] sm:$0xf]
        %v806 = vld [vmem:[%s6] sm:$0x7]
        %v808 = vlaneseq
        %v809 = vshrl.u32 %v808, 7
        %v810 = vsub.s32 0, %v809
        %v811 = vrot.slane %v806, %v810
        %v812 = vlaneseq
        %v813 = vshrl.u32 %v812, 7
        %v814 = vsub.s32 1, %v813
        %v815 = vrot.slane %v806, %v814
        %v816 = vlaneseq
        %v817 = vshrl.u32 %v816, 7
        %v818 = vsub.s32 2, %v817
        %v819 = vrot.slane %v806, %v818
        %v855 = vunpack.c.l.b16 %v774
        %v856 = vunpack.c.h.b16 %v774
        %v857 = vunpack.c.l.b16 %v775
        %v858 = vunpack.c.l.b16 %v776
        %v859 = vunpack.c.h.b16 %v776
        %v860 = vunpack.c.l.b16 %v777
        %v861 = vunpack.c.l.b16 %v778
        %v862 = vunpack.c.h.b16 %v778
        %v863 = vunpack.c.l.b16 %v779
        %v864 = vunpack.c.l.b16 %v780
        %v865 = vunpack.c.h.b16 %v780
        %v866 = vunpack.c.l.b16 %v781
        %v867 = vunpack.c.l.b16 %v782
        %v868 = vunpack.c.h.b16 %v782
        %v869 = vunpack.c.l.b16 %v783
        %v870 = vunpack.c.l.b16 %v784
        %v871 = vunpack.c.h.b16 %v784
        %v872 = vunpack.c.l.b16 %v785
        %v873 = vunpack.c.l.b16 %v786
        %v874 = vunpack.c.h.b16 %v786
        %v875 = vunpack.c.l.b16 %v787
        %v876 = vunpack.c.l.b16 %v788
        %v877 = vunpack.c.h.b16 %v788
        %v878 = vunpack.c.l.b16 %v789
        %v879 = vunpack.c.l.b16 %v790
        %v880 = vunpack.c.h.b16 %v790
        %v881 = vunpack.c.l.b16 %v791
        %v882 = vunpack.c.l.b16 %v792
        %v883 = vunpack.c.h.b16 %v792
        %v884 = vunpack.c.l.b16 %v793
        %v885 = vunpack.c.l.b16 %v794
        %v886 = vunpack.c.h.b16 %v794
        %v887 = vunpack.c.l.b16 %v795
        %v888 = vunpack.c.l.b16 %v796
        %v889 = vunpack.c.h.b16 %v796
        %v890 = vunpack.c.l.b16 %v797
        %v891 = vunpack.c.l.b16 %v798
        %v892 = vunpack.c.h.b16 %v798
        %v893 = vunpack.c.l.b16 %v799
        %v894 = vunpack.c.l.b16 %v800
        %v895 = vunpack.c.h.b16 %v800
        %v896 = vunpack.c.l.b16 %v801
        %v897 = vunpack.c.l.b16 %v802
        %v898 = vunpack.c.h.b16 %v802
        %v899 = vunpack.c.l.b16 %v803
        %v900 = vunpack.c.l.b16 %v804
        %v901 = vunpack.c.h.b16 %v804
        %v902 = vunpack.c.l.b16 %v805
        %v903 = vpack.c.b16 %v858, %v855
        %v904 = vpack.c.b16 %v859, %v856
        %v905 = vpack.c.b16 %v860, %v857
        %v906 = vpack.c.b16 %v864, %v861
        %v907 = vpack.c.b16 %v865, %v862
        %v908 = vpack.c.b16 %v866, %v863
        %v909 = vpack.c.b16 %v870, %v867
        %v910 = vpack.c.b16 %v871, %v868
        %v911 = vpack.c.b16 %v872, %v869
        %v912 = vpack.c.b16 %v876, %v873
        %v913 = vpack.c.b16 %v877, %v874
        %v914 = vpack.c.b16 %v878, %v875
        %v915 = vpack.c.b16 %v882, %v879
        %v916 = vpack.c.b16 %v883, %v880
        %v917 = vpack.c.b16 %v884, %v881
        %v918 = vpack.c.b16 %v888, %v885
        %v919 = vpack.c.b16 %v889, %v886
        %v920 = vpack.c.b16 %v890, %v887
        %v921 = vpack.c.b16 %v894, %v891
        %v922 = vpack.c.b16 %v895, %v892
        %v923 = vpack.c.b16 %v896, %v893
        %v924 = vpack.c.b16 %v900, %v897
        %v925 = vpack.c.b16 %v901, %v898
        %v926 = vpack.c.b16 %v902, %v899
        %951 = vmatprep.subr.bf16.mxu0 %v904
        %952 = vmatpush1.bf16.msra.mxu0 %v903
        %953 = vmatprep.subr.bf16.mxu0 %v907
        %954 = vmatpush1.bf16.msra.mxu0 %v906
        %955 = vmatprep.subr.bf16.mxu0 %v910
        %956 = vmatpush1.bf16.msra.mxu0 %v909
        %957 = vmatprep.subr.bf16.mxu0 %v913
        %958 = vmatpush1.bf16.msra.mxu0 %v912
        %959 = vmatprep.subr.bf16.mxu0 %v916
        %960 = vmatpush1.bf16.msra.mxu0 %v915
        %961 = vmatprep.subr.bf16.mxu0 %v919
        %962 = vmatpush1.bf16.msra.mxu0 %v918
        %963 = vmatprep.subr.bf16.mxu0 %v922
        %964 = vmatpush1.bf16.msra.mxu0 %v921
        %965 = vmatprep.subr.bf16.mxu0 %v925
        %966 = vmatpush1.bf16.msra.mxu0 %v924
        %967 = vmatprep.subr.bf16.mxu0 0
        %968 = vmatpush1.bf16.msra.mxu0 0
        %969 = vmatprep.subr.bf16.mxu0 0
        %970 = vmatpush1.bf16.msra.mxu0 0
        %971 = vmatprep.subr.bf16.mxu0 0
        %972 = vmatpush1.bf16.msra.mxu0 0
        %973 = vmatprep.subr.bf16.mxu0 0
        %974 = vmatpush1.bf16.msra.mxu0 0
        %975 = vmatprep.subr.bf16.mxu0 0
        %976 = vmatpush1.bf16.msra.mxu0 0
        %977 = vmatprep.subr.bf16.mxu0 0
        %978 = vmatpush1.bf16.msra.mxu0 0
        %979 = vmatprep.subr.bf16.mxu0 0
        %980 = vmatpush1.bf16.msra.mxu0 0
        %981 = vmatprep.subr.bf16.mxu0 0
        %982 = vmatpush1.bf16.msra.mxu0 0
        %983 = vmatprep.mubr.bf16.mxu0 0
        %984 = vmatmul.mubr.bf16.gmra.mrb[0].mxu0 %v766
        %v985 = vpop.f32.mrb[0].mxu0
        %v986 = vadd.f32 %v811, %v985
        %v987 = vpop.f32.mrb[0].mxu0
        %v988 = vadd.f32 %v815, %v987
        %v989 = vpop.f32.mrb[0].mxu0
        %v990 = vadd.f32 %v811, %v989
        %v991 = vpop.f32.mrb[0].mxu0
        %v992 = vadd.f32 %v815, %v991
        %993 = vmatprep.mubr.bf16.mxu0 0
        %994 = vmatmul.mubr.bf16.gmra.mrb[0].mxu0 %v767
        %v995 = vpop.f32.mrb[0].mxu0
        %v996 = vadd.f32 %v811, %v995
        %v997 = vpop.f32.mrb[0].mxu0
        %v998 = vadd.f32 %v815, %v997
        %v999 = vpop.f32.mrb[0].mxu0
        %v1000 = vadd.f32 %v811, %v999
        %v1001 = vpop.f32.mrb[0].mxu0
        %v1002 = vadd.f32 %v815, %v1001
        %1003 = vdwg.mxu0
        %1004 = vmatprep.subr.bf16.mxu0 0
        %1005 = vmatpush1.bf16.msra.mxu0 %v905
        %1006 = vmatprep.subr.bf16.mxu0 0
        %1007 = vmatpush1.bf16.msra.mxu0 %v908
        %1008 = vmatprep.subr.bf16.mxu0 0
        %1009 = vmatpush1.bf16.msra.mxu0 %v911
        %1010 = vmatprep.subr.bf16.mxu0 0
        %1011 = vmatpush1.bf16.msra.mxu0 %v914
        %1012 = vmatprep.subr.bf16.mxu0 0
        %1013 = vmatpush1.bf16.msra.mxu0 %v917
        %1014 = vmatprep.subr.bf16.mxu0 0
        %1015 = vmatpush1.bf16.msra.mxu0 %v920
        %1016 = vmatprep.subr.bf16.mxu0 0
        %1017 = vmatpush1.bf16.msra.mxu0 %v923
        %1018 = vmatprep.subr.bf16.mxu0 0
        %1019 = vmatpush1.bf16.msra.mxu0 %v926
        %1020 = vmatprep.subr.bf16.mxu0 0
        %1021 = vmatpush1.bf16.msra.mxu0 0
        %1022 = vmatprep.subr.bf16.mxu0 0
        %1023 = vmatpush1.bf16.msra.mxu0 0
        %1024 = vmatprep.subr.bf16.mxu0 0
        %1025 = vmatpush1.bf16.msra.mxu0 0
        %1026 = vmatprep.subr.bf16.mxu0 0
        %1027 = vmatpush1.bf16.msra.mxu0 0
        %1028 = vmatprep.subr.bf16.mxu0 0
        %1029 = vmatpush1.bf16.msra.mxu0 0
        %1030 = vmatprep.subr.bf16.mxu0 0
        %1031 = vmatpush1.bf16.msra.mxu0 0
        %1032 = vmatprep.subr.bf16.mxu0 0
        %1033 = vmatpush1.bf16.msra.mxu0 0
        %1034 = vmatprep.subr.bf16.mxu0 0
        %1035 = vmatpush1.bf16.msra.mxu0 0
        %1036 = vmatprep.mubr.bf16.mxu0 0
        %1037 = vmatmul.mubr.bf16.gmra.mrb[0].mxu0 %v766
        %v1038 = vpop.f32.mrb[0].mxu0
        %v1039 = vadd.f32 %v819, %v1038
        %v1040 = vpop.f32.mrb[0].mxu0
        %v1041 = vpop.f32.mrb[0].mxu0
        %v1042 = vadd.f32 %v819, %v1041
        %v1043 = vpop.f32.mrb[0].mxu0
        %1044 = vmatprep.mubr.bf16.mxu0 0
        %1045 = vmatmul.mubr.bf16.gmra.mrb[0].mxu0 %v767
        %v1046 = vpop.f32.mrb[0].mxu0
        %v1047 = vadd.f32 %v819, %v1046
        %v1048 = vpop.f32.mrb[0].mxu0
        %v1049 = vpop.f32.mrb[0].mxu0
        %v1050 = vadd.f32 %v819, %v1049
        %v1051 = vpop.f32.mrb[0].mxu0
        %1052 = vdwg.mxu0
        %v1053 = vpack.c.bf16 %v990, %v986
        %v1054 = vpack.c.bf16 %v992, %v988
        %v1055 = vpack.c.bf16 %v1042, %v1039
        %v1056 = vpack.c.bf16 %v1000, %v996
        %v1057 = vpack.c.bf16 %v1002, %v998
        %v1058 = vpack.c.bf16 %v1050, %v1047
        %v1065 = vunpack.c.l.b16 %v1053
        %v1066 = vunpack.c.l.b16 %v1054
        %v1067 = vunpack.c.l.b16 %v1055
        %v1068 = vunpack.c.h.b16 %v1053
        %v1069 = vunpack.c.h.b16 %v1054
        %v1070 = vunpack.c.h.b16 %v1055
        %v1071 = vunpack.c.l.b16 %v1056
        %v1072 = vunpack.c.l.b16 %v1057
        %v1073 = vunpack.c.l.b16 %v1058
        %v1074 = vunpack.c.h.b16 %v1056
        %v1075 = vunpack.c.h.b16 %v1057
        %v1076 = vunpack.c.h.b16 %v1058
        %v1077 = vpack.c.b16 %v1066, %v1065
        %v1078 = vpack.c.b16 %v1067, %v1067
        %v1079 = vpack.c.b16 %v1069, %v1068
        %v1080 = vpack.c.b16 %v1070, %v1070
        %v1081 = vpack.c.b16 %v1072, %v1071
        %v1082 = vpack.c.b16 %v1073, %v1073
        %v1083 = vpack.c.b16 %v1075, %v1074
        %v1084 = vpack.c.b16 %v1076, %v1076
        %1093 = vst [vmem:[#allocation2] sm:$0xff] %v1077
        %1094 = vst [vmem:[#allocation2 + $0x8] sm:$0xf] %v1078
        %1095 = vst [vmem:[#allocation2 + $0xc] sm:$0xff] %v1079
        %1096 = vst [vmem:[#allocation2 + $0x14] sm:$0xf] %v1080
        %1097 = vst [vmem:[#allocation2 + $0x18] sm:$0xff] %v1081
        %1098 = vst [vmem:[#allocation2 + $0x20] sm:$0xf] %v1082
        %1099 = vst [vmem:[#allocation2 + $0x24] sm:$0xff] %v1083
        %1100 = vst [vmem:[#allocation2 + $0x2c] sm:$0xf] %v1084
        %v1101 = vld [vmem:[#allocation12] sm:$0xff]
        %v1102 = vld [vmem:[#allocation12 + $0x8] sm:$0xf]
        %v1103 = vld [vmem:[#allocation12 + $0xc] sm:$0xff]
        %v1104 = vld [vmem:[#allocation12 + $0x14] sm:$0xf]
        %v1105 = vld [vmem:[#allocation12 + $0x18] sm:$0xff]
        %v1106 = vld [vmem:[#allocation12 + $0x20] sm:$0xf]
        %v1107 = vld [vmem:[#allocation12 + $0x24] sm:$0xff]
        %v1108 = vld [vmem:[#allocation12 + $0x2c] sm:$0xf]
        %v1109 = vld [vmem:[#allocation12 + $0x30] sm:$0xff]
        %v1110 = vld [vmem:[#allocation12 + $0x38] sm:$0xf]
        %v1111 = vld [vmem:[#allocation12 + $0x3c] sm:$0xff]
        %v1112 = vld [vmem:[#allocation12 + $0x44] sm:$0xf]
        %v1113 = vld [vmem:[#allocation12 + $0x48] sm:$0xff]
        %v1114 = vld [vmem:[#allocation12 + $0x50] sm:$0xf]
        %v1115 = vld [vmem:[#allocation12 + $0x54] sm:$0xff]
        %v1116 = vld [vmem:[#allocation12 + $0x5c] sm:$0xf]
        %v1117 = vld [vmem:[#allocation12 + $0x60] sm:$0xff]
        %v1118 = vld [vmem:[#allocation12 + $0x68] sm:$0xf]
        %v1119 = vld [vmem:[#allocation12 + $0x6c] sm:$0xff]
        %v1120 = vld [vmem:[#allocation12 + $0x74] sm:$0xf]
        %v1121 = vld [vmem:[#allocation12 + $0x78] sm:$0xff]
        %v1122 = vld [vmem:[#allocation12 + $0x80] sm:$0xf]
        %v1123 = vld [vmem:[#allocation12 + $0x84] sm:$0xff]
        %v1124 = vld [vmem:[#allocation12 + $0x8c] sm:$0xf]
        %v1125 = vld [vmem:[#allocation12 + $0x90] sm:$0xff]
        %v1126 = vld [vmem:[#allocation12 + $0x98] sm:$0xf]
        %v1127 = vld [vmem:[#allocation12 + $0x9c] sm:$0xff]
        %v1128 = vld [vmem:[#allocation12 + $0xa4] sm:$0xf]
        %v1129 = vld [vmem:[#allocation12 + $0xa8] sm:$0xff]
        %v1130 = vld [vmem:[#allocation12 + $0xb0] sm:$0xf]
        %v1131 = vld [vmem:[#allocation12 + $0xb4] sm:$0xff]
        %v1132 = vld [vmem:[#allocation12 + $0xbc] sm:$0xf]
        %v1133 = vld [vmem:[%s7] sm:$0x7]
        %v1135 = vlaneseq
        %v1136 = vshrl.u32 %v1135, 7
        %v1137 = vsub.s32 0, %v1136
        %v1138 = vrot.slane %v1133, %v1137
        %v1139 = vlaneseq
        %v1140 = vshrl.u32 %v1139, 7
        %v1141 = vsub.s32 1, %v1140
        %v1142 = vrot.slane %v1133, %v1141
        %v1143 = vlaneseq
        %v1144 = vshrl.u32 %v1143, 7
        %v1145 = vsub.s32 2, %v1144
        %v1146 = vrot.slane %v1133, %v1145
        %v1182 = vunpack.c.l.b16 %v1101
        %v1183 = vunpack.c.h.b16 %v1101
        %v1184 = vunpack.c.l.b16 %v1102
        %v1185 = vunpack.c.l.b16 %v1103
        %v1186 = vunpack.c.h.b16 %v1103
        %v1187 = vunpack.c.l.b16 %v1104
        %v1188 = vunpack.c.l.b16 %v1105
        %v1189 = vunpack.c.h.b16 %v1105
        %v1190 = vunpack.c.l.b16 %v1106
        %v1191 = vunpack.c.l.b16 %v1107
        %v1192 = vunpack.c.h.b16 %v1107
        %v1193 = vunpack.c.l.b16 %v1108
        %v1194 = vunpack.c.l.b16 %v1109
        %v1195 = vunpack.c.h.b16 %v1109
        %v1196 = vunpack.c.l.b16 %v1110
        %v1197 = vunpack.c.l.b16 %v1111
        %v1198 = vunpack.c.h.b16 %v1111
        %v1199 = vunpack.c.l.b16 %v1112
        %v1200 = vunpack.c.l.b16 %v1113
        %v1201 = vunpack.c.h.b16 %v1113
        %v1202 = vunpack.c.l.b16 %v1114
        %v1203 = vunpack.c.l.b16 %v1115
        %v1204 = vunpack.c.h.b16 %v1115
        %v1205 = vunpack.c.l.b16 %v1116
        %v1206 = vunpack.c.l.b16 %v1117
        %v1207 = vunpack.c.h.b16 %v1117
        %v1208 = vunpack.c.l.b16 %v1118
        %v1209 = vunpack.c.l.b16 %v1119
        %v1210 = vunpack.c.h.b16 %v1119
        %v1211 = vunpack.c.l.b16 %v1120
        %v1212 = vunpack.c.l.b16 %v1121
        %v1213 = vunpack.c.h.b16 %v1121
        %v1214 = vunpack.c.l.b16 %v1122
        %v1215 = vunpack.c.l.b16 %v1123
        %v1216 = vunpack.c.h.b16 %v1123
        %v1217 = vunpack.c.l.b16 %v1124
        %v1218 = vunpack.c.l.b16 %v1125
        %v1219 = vunpack.c.h.b16 %v1125
        %v1220 = vunpack.c.l.b16 %v1126
        %v1221 = vunpack.c.l.b16 %v1127
        %v1222 = vunpack.c.h.b16 %v1127
        %v1223 = vunpack.c.l.b16 %v1128
        %v1224 = vunpack.c.l.b16 %v1129
        %v1225 = vunpack.c.h.b16 %v1129
        %v1226 = vunpack.c.l.b16 %v1130
        %v1227 = vunpack.c.l.b16 %v1131
        %v1228 = vunpack.c.h.b16 %v1131
        %v1229 = vunpack.c.l.b16 %v1132
        %v1230 = vpack.c.b16 %v1185, %v1182
        %v1231 = vpack.c.b16 %v1186, %v1183
        %v1232 = vpack.c.b16 %v1187, %v1184
        %v1233 = vpack.c.b16 %v1191, %v1188
        %v1234 = vpack.c.b16 %v1192, %v1189
        %v1235 = vpack.c.b16 %v1193, %v1190
        %v1236 = vpack.c.b16 %v1197, %v1194
        %v1237 = vpack.c.b16 %v1198, %v1195
        %v1238 = vpack.c.b16 %v1199, %v1196
        %v1239 = vpack.c.b16 %v1203, %v1200
        %v1240 = vpack.c.b16 %v1204, %v1201
        %v1241 = vpack.c.b16 %v1205, %v1202
        %v1242 = vpack.c.b16 %v1209, %v1206
        %v1243 = vpack.c.b16 %v1210, %v1207
        %v1244 = vpack.c.b16 %v1211, %v1208
        %v1245 = vpack.c.b16 %v1215, %v1212
        %v1246 = vpack.c.b16 %v1216, %v1213
        %v1247 = vpack.c.b16 %v1217, %v1214
        %v1248 = vpack.c.b16 %v1221, %v1218
        %v1249 = vpack.c.b16 %v1222, %v1219
        %v1250 = vpack.c.b16 %v1223, %v1220
        %v1251 = vpack.c.b16 %v1227, %v1224
        %v1252 = vpack.c.b16 %v1228, %v1225
        %v1253 = vpack.c.b16 %v1229, %v1226
        %1278 = vmatprep.subr.bf16.mxu0 %v1231
        %1279 = vmatpush1.bf16.msra.mxu0 %v1230
        %1280 = vmatprep.subr.bf16.mxu0 %v1234
        %1281 = vmatpush1.bf16.msra.mxu0 %v1233
        %1282 = vmatprep.subr.bf16.mxu0 %v1237
        %1283 = vmatpush1.bf16.msra.mxu0 %v1236
        %1284 = vmatprep.subr.bf16.mxu0 %v1240
        %1285 = vmatpush1.bf16.msra.mxu0 %v1239
        %1286 = vmatprep.subr.bf16.mxu0 %v1243
        %1287 = vmatpush1.bf16.msra.mxu0 %v1242
        %1288 = vmatprep.subr.bf16.mxu0 %v1246
        %1289 = vmatpush1.bf16.msra.mxu0 %v1245
        %1290 = vmatprep.subr.bf16.mxu0 %v1249
        %1291 = vmatpush1.bf16.msra.mxu0 %v1248
        %1292 = vmatprep.subr.bf16.mxu0 %v1252
        %1293 = vmatpush1.bf16.msra.mxu0 %v1251
        %1294 = vmatprep.subr.bf16.mxu0 0
        %1295 = vmatpush1.bf16.msra.mxu0 0
        %1296 = vmatprep.subr.bf16.mxu0 0
        %1297 = vmatpush1.bf16.msra.mxu0 0
        %1298 = vmatprep.subr.bf16.mxu0 0
        %1299 = vmatpush1.bf16.msra.mxu0 0
        %1300 = vmatprep.subr.bf16.mxu0 0
        %1301 = vmatpush1.bf16.msra.mxu0 0
        %1302 = vmatprep.subr.bf16.mxu0 0
        %1303 = vmatpush1.bf16.msra.mxu0 0
        %1304 = vmatprep.subr.bf16.mxu0 0
        %1305 = vmatpush1.bf16.msra.mxu0 0
        %1306 = vmatprep.subr.bf16.mxu0 0
        %1307 = vmatpush1.bf16.msra.mxu0 0
        %1308 = vmatprep.subr.bf16.mxu0 0
        %1309 = vmatpush1.bf16.msra.mxu0 0
        %1310 = vmatprep.mubr.bf16.mxu0 0
        %1311 = vmatmul.mubr.bf16.gmra.mrb[0].mxu0 %v772
        %v1312 = vpop.f32.mrb[0].mxu0
        %v1313 = vadd.f32 %v1138, %v1312
        %v1314 = vpop.f32.mrb[0].mxu0
        %v1315 = vadd.f32 %v1142, %v1314
        %v1316 = vpop.f32.mrb[0].mxu0
        %v1317 = vadd.f32 %v1138, %v1316
        %v1318 = vpop.f32.mrb[0].mxu0
        %v1319 = vadd.f32 %v1142, %v1318
        %1320 = vmatprep.mubr.bf16.mxu0 0
        %1321 = vmatmul.mubr.bf16.gmra.mrb[0].mxu0 %v773
        %v1322 = vpop.f32.mrb[0].mxu0
        %v1323 = vadd.f32 %v1138, %v1322
        %v1324 = vpop.f32.mrb[0].mxu0
        %v1325 = vadd.f32 %v1142, %v1324
        %v1326 = vpop.f32.mrb[0].mxu0
        %v1327 = vadd.f32 %v1138, %v1326
        %v1328 = vpop.f32.mrb[0].mxu0
        %v1329 = vadd.f32 %v1142, %v1328
        %1330 = vdwg.mxu0
        %1331 = vmatprep.subr.bf16.mxu0 0
        %1332 = vmatpush1.bf16.msra.mxu0 %v1232
        %1333 = vmatprep.subr.bf16.mxu0 0
        %1334 = vmatpush1.bf16.msra.mxu0 %v1235
        %1335 = vmatprep.subr.bf16.mxu0 0
        %1336 = vmatpush1.bf16.msra.mxu0 %v1238
        %1337 = vmatprep.subr.bf16.mxu0 0
        %1338 = vmatpush1.bf16.msra.mxu0 %v1241
        %1339 = vmatprep.subr.bf16.mxu0 0
        %1340 = vmatpush1.bf16.msra.mxu0 %v1244
        %1341 = vmatprep.subr.bf16.mxu0 0
        %1342 = vmatpush1.bf16.msra.mxu0 %v1247
        %1343 = vmatprep.subr.bf16.mxu0 0
        %1344 = vmatpush1.bf16.msra.mxu0 %v1250
        %1345 = vmatprep.subr.bf16.mxu0 0
        %1346 = vmatpush1.bf16.msra.mxu0 %v1253
        %1347 = vmatprep.subr.bf16.mxu0 0
        %1348 = vmatpush1.bf16.msra.mxu0 0
        %1349 = vmatprep.subr.bf16.mxu0 0
        %1350 = vmatpush1.bf16.msra.mxu0 0
        %1351 = vmatprep.subr.bf16.mxu0 0
        %1352 = vmatpush1.bf16.msra.mxu0 0
        %1353 = vmatprep.subr.bf16.mxu0 0
        %1354 = vmatpush1.bf16.msra.mxu0 0
        %1355 = vmatprep.subr.bf16.mxu0 0
        %1356 = vmatpush1.bf16.msra.mxu0 0
        %1357 = vmatprep.subr.bf16.mxu0 0
        %1358 = vmatpush1.bf16.msra.mxu0 0
        %1359 = vmatprep.subr.bf16.mxu0 0
        %1360 = vmatpush1.bf16.msra.mxu0 0
        %1361 = vmatprep.subr.bf16.mxu0 0
        %1362 = vmatpush1.bf16.msra.mxu0 0
        %1363 = vmatprep.mubr.bf16.mxu0 0
        %1364 = vmatmul.mubr.bf16.gmra.mrb[0].mxu0 %v772
        %v1365 = vpop.f32.mrb[0].mxu0
        %v1366 = vadd.f32 %v1146, %v1365
        %v1367 = vpop.f32.mrb[0].mxu0
        %v1368 = vpop.f32.mrb[0].mxu0
        %v1369 = vadd.f32 %v1146, %v1368
        %v1370 = vpop.f32.mrb[0].mxu0
        %1371 = vmatprep.mubr.bf16.mxu0 0
        %1372 = vmatmul.mubr.bf16.gmra.mrb[0].mxu0 %v773
        %v1373 = vpop.f32.mrb[0].mxu0
        %v1374 = vadd.f32 %v1146, %v1373
        %v1375 = vpop.f32.mrb[0].mxu0
        %v1376 = vpop.f32.mrb[0].mxu0
        %v1377 = vadd.f32 %v1146, %v1376
        %v1378 = vpop.f32.mrb[0].mxu0
        %1379 = vdwg.mxu0
        %v1380 = vpack.c.bf16 %v1317, %v1313
        %v1381 = vpack.c.bf16 %v1319, %v1315
        %v1382 = vpack.c.bf16 %v1369, %v1366
        %v1383 = vpack.c.bf16 %v1327, %v1323
        %v1384 = vpack.c.bf16 %v1329, %v1325
        %v1385 = vpack.c.bf16 %v1377, %v1374
        %v1392 = vunpack.c.l.b16 %v1380
        %v1393 = vunpack.c.l.b16 %v1381
        %v1394 = vunpack.c.l.b16 %v1382
        %v1395 = vunpack.c.h.b16 %v1380
        %v1396 = vunpack.c.h.b16 %v1381
        %v1397 = vunpack.c.h.b16 %v1382
        %v1398 = vunpack.c.l.b16 %v1383
        %v1399 = vunpack.c.l.b16 %v1384
        %v1400 = vunpack.c.l.b16 %v1385
        %v1401 = vunpack.c.h.b16 %v1383
        %v1402 = vunpack.c.h.b16 %v1384
        %v1403 = vunpack.c.h.b16 %v1385
        %v1404 = vpack.c.b16 %v1393, %v1392
        %v1405 = vpack.c.b16 %v1394, %v1394
        %v1406 = vpack.c.b16 %v1396, %v1395
        %v1407 = vpack.c.b16 %v1397, %v1397
        %v1408 = vpack.c.b16 %v1399, %v1398
        %v1409 = vpack.c.b16 %v1400, %v1400
        %v1410 = vpack.c.b16 %v1402, %v1401
        %v1411 = vpack.c.b16 %v1403, %v1403
        %1420 = vst [vmem:[#allocation3] sm:$0xff] %v1404
        %1421 = vst [vmem:[#allocation3 + $0x8] sm:$0xf] %v1405
        %1422 = vst [vmem:[#allocation3 + $0xc] sm:$0xff] %v1406
        %1423 = vst [vmem:[#allocation3 + $0x14] sm:$0xf] %v1407
        %1424 = vst [vmem:[#allocation3 + $0x18] sm:$0xff] %v1408
        %1425 = vst [vmem:[#allocation3 + $0x20] sm:$0xf] %v1409
        %1426 = vst [vmem:[#allocation3 + $0x24] sm:$0xff] %v1410
        %1427 = vst [vmem:[#allocation3 + $0x2c] sm:$0xf] %v1411
        %v1428 = vld [vmem:[#allocation14] sm:$0xff]
        %v1429 = vld [vmem:[#allocation14 + $0x8] sm:$0xff]
        %v1430 = vld [vmem:[#allocation14 + $0x10] sm:$0xff]
        %v1431 = vld [vmem:[#allocation14 + $0x18] sm:$0xff]
        %v1432 = vld [vmem:[#allocation14 + $0x20] sm:$0xff]
        %v1433 = vld [vmem:[#allocation14 + $0x28] sm:$0xff]
        %v1434 = vld [vmem:[#allocation14 + $0x30] sm:$0xff]
        %v1435 = vld [vmem:[#allocation14 + $0x38] sm:$0xff]
        %v1436 = vld [vmem:[#allocation14 + $0x40] sm:$0xff]
        %v1437 = vld [vmem:[#allocation14 + $0x48] sm:$0xff]
        %v1438 = vld [vmem:[#allocation14 + $0x50] sm:$0xff]
        %v1439 = vld [vmem:[#allocation14 + $0x58] sm:$0xff]
        %v1440 = vld [vmem:[#allocation14 + $0x60] sm:$0xff]
        %v1441 = vld [vmem:[#allocation14 + $0x68] sm:$0xff]
        %v1442 = vld [vmem:[#allocation14 + $0x70] sm:$0xff]
        %v1443 = vld [vmem:[#allocation14 + $0x78] sm:$0xff]
        %v1444 = vld [vmem:[#allocation14 + $0x80] sm:$0xff]
        %v1445 = vld [vmem:[#allocation14 + $0x88] sm:$0xff]
        %v1446 = vld [vmem:[#allocation14 + $0x90] sm:$0xff]
        %v1447 = vld [vmem:[#allocation14 + $0x98] sm:$0xff]
        %v1448 = vld [vmem:[#allocation14 + $0xa0] sm:$0xff]
        %v1449 = vld [vmem:[#allocation14 + $0xa8] sm:$0xff]
        %v1450 = vld [vmem:[#allocation14 + $0xb0] sm:$0xff]
        %v1451 = vld [vmem:[#allocation14 + $0xb8] sm:$0xff]
        %v1452 = vld [vmem:[#allocation14 + $0xc0] sm:$0xff]
        %v1453 = vld [vmem:[#allocation14 + $0xc8] sm:$0xff]
        %v1454 = vld [vmem:[#allocation14 + $0xd0] sm:$0xff]
        %v1455 = vld [vmem:[#allocation14 + $0xd8] sm:$0xff]
        %v1456 = vld [vmem:[#allocation14 + $0xe0] sm:$0xff]
        %v1457 = vld [vmem:[#allocation14 + $0xe8] sm:$0xff]
        %v1458 = vld [vmem:[#allocation14 + $0xf0] sm:$0xff]
        %v1459 = vld [vmem:[#allocation14 + $0xf8] sm:$0xff]
        %v1460 = vld [vmem:[#allocation14 + $0x100] sm:$0xff]
        %v1461 = vld [vmem:[#allocation14 + $0x108] sm:$0xff]
        %v1462 = vld [vmem:[#allocation14 + $0x110] sm:$0xff]
        %v1463 = vld [vmem:[#allocation14 + $0x118] sm:$0xff]
        %v1464 = vld [vmem:[#allocation14 + $0x120] sm:$0xff]
        %v1465 = vld [vmem:[#allocation14 + $0x128] sm:$0xff]
        %v1466 = vld [vmem:[#allocation14 + $0x130] sm:$0xff]
        %v1467 = vld [vmem:[#allocation14 + $0x138] sm:$0xff]
        %v1468 = vld [vmem:[#allocation14 + $0x140] sm:$0xff]
        %v1469 = vld [vmem:[#allocation14 + $0x148] sm:$0xff]
        %v1470 = vld [vmem:[#allocation14 + $0x150] sm:$0xff]
        %v1471 = vld [vmem:[#allocation14 + $0x158] sm:$0xff]
        %v1472 = vld [vmem:[#allocation14 + $0x160] sm:$0xff]
        %v1473 = vld [vmem:[#allocation14 + $0x168] sm:$0xff]
        %v1474 = vld [vmem:[#allocation14 + $0x170] sm:$0xff]
        %v1475 = vld [vmem:[#allocation14 + $0x178] sm:$0xff]
        %v1476 = vld [vmem:[#allocation14 + $0x180] sm:$0xff]
        %v1477 = vld [vmem:[#allocation14 + $0x188] sm:$0xff]
        %v1478 = vld [vmem:[#allocation14 + $0x190] sm:$0xff]
        %v1479 = vld [vmem:[#allocation14 + $0x198] sm:$0xff]
        %v1480 = vld [vmem:[#allocation14 + $0x1a0] sm:$0xff]
        %v1481 = vld [vmem:[#allocation14 + $0x1a8] sm:$0xff]
        %v1482 = vld [vmem:[#allocation14 + $0x1b0] sm:$0xff]
        %v1483 = vld [vmem:[#allocation14 + $0x1b8] sm:$0xff]
        %v1484 = vld [vmem:[#allocation14 + $0x1c0] sm:$0xff]
        %v1485 = vld [vmem:[#allocation14 + $0x1c8] sm:$0xff]
        %v1486 = vld [vmem:[#allocation14 + $0x1d0] sm:$0xff]
        %v1487 = vld [vmem:[#allocation14 + $0x1d8] sm:$0xff]
        %v1488 = vld [vmem:[#allocation14 + $0x1e0] sm:$0xff]
        %v1489 = vld [vmem:[#allocation14 + $0x1e8] sm:$0xff]
        %v1490 = vld [vmem:[#allocation14 + $0x1f0] sm:$0xff]
        %v1491 = vld [vmem:[#allocation14 + $0x1f8] sm:$0xff]
        %v1492 = vld [vmem:[#allocation14 + $0x200] sm:$0xff]
        %v1493 = vld [vmem:[#allocation14 + $0x208] sm:$0xff]
        %v1494 = vld [vmem:[#allocation14 + $0x210] sm:$0xff]
        %v1495 = vld [vmem:[#allocation14 + $0x218] sm:$0xff]
        %v1496 = vld [vmem:[#allocation14 + $0x220] sm:$0xff]
        %v1497 = vld [vmem:[#allocation14 + $0x228] sm:$0xff]
        %v1498 = vld [vmem:[#allocation14 + $0x230] sm:$0xff]
        %v1499 = vld [vmem:[#allocation14 + $0x238] sm:$0xff]
        %v1500 = vld [vmem:[#allocation14 + $0x240] sm:$0xff]
        %v1501 = vld [vmem:[#allocation14 + $0x248] sm:$0xff]
        %v1502 = vld [vmem:[#allocation14 + $0x250] sm:$0xff]
        %v1503 = vld [vmem:[#allocation14 + $0x258] sm:$0xff]
        %v1504 = vld [vmem:[#allocation14 + $0x260] sm:$0xff]
        %v1505 = vld [vmem:[#allocation14 + $0x268] sm:$0xff]
        %v1506 = vld [vmem:[#allocation14 + $0x270] sm:$0xff]
        %v1507 = vld [vmem:[#allocation14 + $0x278] sm:$0xff]
        %v1508 = vld [vmem:[#allocation14 + $0x280] sm:$0xff]
        %v1509 = vld [vmem:[#allocation14 + $0x288] sm:$0xff]
        %v1510 = vld [vmem:[#allocation14 + $0x290] sm:$0xff]
        %v1511 = vld [vmem:[#allocation14 + $0x298] sm:$0xff]
        %v1512 = vld [vmem:[#allocation14 + $0x2a0] sm:$0xff]
        %v1513 = vld [vmem:[#allocation14 + $0x2a8] sm:$0xff]
        %v1514 = vld [vmem:[#allocation14 + $0x2b0] sm:$0xff]
        %v1515 = vld [vmem:[#allocation14 + $0x2b8] sm:$0xff]
        %v1516 = vld [vmem:[#allocation14 + $0x2c0] sm:$0xff]
        %v1517 = vld [vmem:[#allocation14 + $0x2c8] sm:$0xff]
        %v1518 = vld [vmem:[#allocation14 + $0x2d0] sm:$0xff]
        %v1519 = vld [vmem:[#allocation14 + $0x2d8] sm:$0xff]
        %v1520 = vld [vmem:[#allocation14 + $0x2e0] sm:$0xff]
        %v1521 = vld [vmem:[#allocation14 + $0x2e8] sm:$0xff]
        %v1522 = vld [vmem:[#allocation14 + $0x2f0] sm:$0xff]
        %v1523 = vld [vmem:[#allocation14 + $0x2f8] sm:$0xff]
        %v1524 = vld [vmem:[%s8] sm:$0x3f]
        %v1525 = vld [vmem:[%s659] sm:$0xff]
        %s1526 = smul.u32 %s46, 4
        %s1527 = ssub.s32 1, %s46
        %s1528 = smul.u32 %s1527, 4
        %v1529 = vld [vmem:[#allocation4] sm:$0xff]
        %v1530 = vld [vmem:[#allocation5] sm:$0xff]
        %v1531 = vld [vmem:[#allocation2] sm:$0xff]
        %v1532 = vld [vmem:[#allocation2 + $0x8] sm:$0xf]
        %v1533 = vunpack.c.l.bf16 %v1531
        %v1534 = vunpack.c.h.bf16 %v1531
        %v1535 = vunpack.c.l.bf16 %v1532
        %s1536 = scalar_lea.vmem [#allocation3], 36
        %v1537 = vld [vmem:[%s1536] sm:$0xff]
        %v1538 = vld [vmem:[%s1536 + $0x8] sm:$0xf]
        %v1539 = vunpack.c.l.bf16 %v1537
        %v1540 = vunpack.c.h.bf16 %v1537
        %v1541 = vunpack.c.l.bf16 %v1538
        %v1542 = vpack.c.bf16 %v1529, %v1529
        %v1543 = vpack.c.bf16 %v1530, %v1530
        %v1545 = vlaneseq
        %v1546 = vshrl.u32 %v1545, 7
        %v1547 = vsub.s32 0, %v1546
        %v1548 = vrot.slane %v1524, %v1547
        %v1549 = vlaneseq
        %v1550 = vshrl.u32 %v1549, 7
        %v1551 = vsub.s32 1, %v1550
        %v1552 = vrot.slane %v1524, %v1551
        %v1553 = vlaneseq
        %v1554 = vshrl.u32 %v1553, 7
        %v1555 = vsub.s32 2, %v1554
        %v1556 = vrot.slane %v1524, %v1555
        %v1557 = vlaneseq
        %v1558 = vshrl.u32 %v1557, 7
        %v1559 = vsub.s32 3, %v1558
        %v1560 = vrot.slane %v1524, %v1559
        %v1561 = vlaneseq
        %v1562 = vshrl.u32 %v1561, 7
        %v1563 = vsub.s32 4, %v1562
        %v1564 = vrot.slane %v1524, %v1563
        %v1565 = vlaneseq
        %v1566 = vshrl.u32 %v1565, 7
        %v1567 = vsub.s32 5, %v1566
        %v1568 = vrot.slane %v1524, %v1567
        %v1671 = vunpack.c.l.b16 %v1428
        %v1672 = vunpack.c.h.b16 %v1428
        %v1673 = vunpack.c.l.b16 %v1429
        %v1674 = vunpack.c.h.b16 %v1429
        %v1675 = vunpack.c.l.b16 %v1430
        %v1676 = vunpack.c.h.b16 %v1430
        %v1677 = vunpack.c.l.b16 %v1431
        %v1678 = vunpack.c.h.b16 %v1431
        %v1679 = vunpack.c.l.b16 %v1432
        %v1680 = vunpack.c.h.b16 %v1432
        %v1681 = vunpack.c.l.b16 %v1433
        %v1682 = vunpack.c.h.b16 %v1433
        %v1683 = vunpack.c.l.b16 %v1434
        %v1684 = vunpack.c.h.b16 %v1434
        %v1685 = vunpack.c.l.b16 %v1435
        %v1686 = vunpack.c.h.b16 %v1435
        %v1687 = vunpack.c.l.b16 %v1436
        %v1688 = vunpack.c.h.b16 %v1436
        %v1689 = vunpack.c.l.b16 %v1437
        %v1690 = vunpack.c.h.b16 %v1437
        %v1691 = vunpack.c.l.b16 %v1438
        %v1692 = vunpack.c.h.b16 %v1438
        %v1693 = vunpack.c.l.b16 %v1439
        %v1694 = vunpack.c.h.b16 %v1439
        %v1695 = vunpack.c.l.b16 %v1440
        %v1696 = vunpack.c.h.b16 %v1440
        %v1697 = vunpack.c.l.b16 %v1441
        %v1698 = vunpack.c.h.b16 %v1441
        %v1699 = vunpack.c.l.b16 %v1442
        %v1700 = vunpack.c.h.b16 %v1442
        %v1701 = vunpack.c.l.b16 %v1443
        %v1702 = vunpack.c.h.b16 %v1443
        %v1703 = vunpack.c.l.b16 %v1444
        %v1704 = vunpack.c.h.b16 %v1444
        %v1705 = vunpack.c.l.b16 %v1445
        %v1706 = vunpack.c.h.b16 %v1445
        %v1707 = vunpack.c.l.b16 %v1446
        %v1708 = vunpack.c.h.b16 %v1446
        %v1709 = vunpack.c.l.b16 %v1447
        %v1710 = vunpack.c.h.b16 %v1447
        %v1711 = vunpack.c.l.b16 %v1448
        %v1712 = vunpack.c.h.b16 %v1448
        %v1713 = vunpack.c.l.b16 %v1449
        %v1714 = vunpack.c.h.b16 %v1449
        %v1715 = vunpack.c.l.b16 %v1450
        %v1716 = vunpack.c.h.b16 %v1450
        %v1717 = vunpack.c.l.b16 %v1451
        %v1718 = vunpack.c.h.b16 %v1451
        %v1719 = vunpack.c.l.b16 %v1452
        %v1720 = vunpack.c.h.b16 %v1452
        %v1721 = vunpack.c.l.b16 %v1453
        %v1722 = vunpack.c.h.b16 %v1453
        %v1723 = vunpack.c.l.b16 %v1454
        %v1724 = vunpack.c.h.b16 %v1454
        %v1725 = vunpack.c.l.b16 %v1455
        %v1726 = vunpack.c.h.b16 %v1455
        %v1727 = vunpack.c.l.b16 %v1456
        %v1728 = vunpack.c.h.b16 %v1456
        %v1729 = vunpack.c.l.b16 %v1457
        %v1730 = vunpack.c.h.b16 %v1457
        %v1731 = vunpack.c.l.b16 %v1458
        %v1732 = vunpack.c.h.b16 %v1458
        %v1733 = vunpack.c.l.b16 %v1459
        %v1734 = vunpack.c.h.b16 %v1459
        %v1735 = vunpack.c.l.b16 %v1460
        %v1736 = vunpack.c.h.b16 %v1460
        %v1737 = vunpack.c.l.b16 %v1461
        %v1738 = vunpack.c.h.b16 %v1461
        %v1739 = vunpack.c.l.b16 %v1462
        %v1740 = vunpack.c.h.b16 %v1462
        %v1741 = vunpack.c.l.b16 %v1463
        %v1742 = vunpack.c.h.b16 %v1463
        %v1743 = vunpack.c.l.b16 %v1464
        %v1744 = vunpack.c.h.b16 %v1464
        %v1745 = vunpack.c.l.b16 %v1465
        %v1746 = vunpack.c.h.b16 %v1465
        %v1747 = vunpack.c.l.b16 %v1466
        %v1748 = vunpack.c.h.b16 %v1466
        %v1749 = vunpack.c.l.b16 %v1467
        %v1750 = vunpack.c.h.b16 %v1467
        %v1751 = vunpack.c.l.b16 %v1468
        %v1752 = vunpack.c.h.b16 %v1468
        %v1753 = vunpack.c.l.b16 %v1469
        %v1754 = vunpack.c.h.b16 %v1469
        %v1755 = vunpack.c.l.b16 %v1470
        %v1756 = vunpack.c.h.b16 %v1470
        %v1757 = vunpack.c.l.b16 %v1471
        %v1758 = vunpack.c.h.b16 %v1471
        %v1759 = vunpack.c.l.b16 %v1472
        %v1760 = vunpack.c.h.b16 %v1472
        %v1761 = vunpack.c.l.b16 %v1473
        %v1762 = vunpack.c.h.b16 %v1473
        %v1763 = vunpack.c.l.b16 %v1474
        %v1764 = vunpack.c.h.b16 %v1474
        %v1765 = vunpack.c.l.b16 %v1475
        %v1766 = vunpack.c.h.b16 %v1475
        %v1767 = vunpack.c.l.b16 %v1476
        %v1768 = vunpack.c.h.b16 %v1476
        %v1769 = vunpack.c.l.b16 %v1477
        %v1770 = vunpack.c.h.b16 %v1477
        %v1771 = vunpack.c.l.b16 %v1478
        %v1772 = vunpack.c.h.b16 %v1478
        %v1773 = vunpack.c.l.b16 %v1479
        %v1774 = vunpack.c.h.b16 %v1479
        %v1775 = vunpack.c.l.b16 %v1480
        %v1776 = vunpack.c.h.b16 %v1480
        %v1777 = vunpack.c.l.b16 %v1481
        %v1778 = vunpack.c.h.b16 %v1481
        %v1779 = vunpack.c.l.b16 %v1482
        %v1780 = vunpack.c.h.b16 %v1482
        %v1781 = vunpack.c.l.b16 %v1483
        %v1782 = vunpack.c.h.b16 %v1483
        %v1783 = vunpack.c.l.b16 %v1484
        %v1784 = vunpack.c.h.b16 %v1484
        %v1785 = vunpack.c.l.b16 %v1485
        %v1786 = vunpack.c.h.b16 %v1485
        %v1787 = vunpack.c.l.b16 %v1486
        %v1788 = vunpack.c.h.b16 %v1486
        %v1789 = vunpack.c.l.b16 %v1487
        %v1790 = vunpack.c.h.b16 %v1487
        %v1791 = vunpack.c.l.b16 %v1488
        %v1792 = vunpack.c.h.b16 %v1488
        %v1793 = vunpack.c.l.b16 %v1489
        %v1794 = vunpack.c.h.b16 %v1489
        %v1795 = vunpack.c.l.b16 %v1490
        %v1796 = vunpack.c.h.b16 %v1490
        %v1797 = vunpack.c.l.b16 %v1491
        %v1798 = vunpack.c.h.b16 %v1491
        %v1799 = vunpack.c.l.b16 %v1492
        %v1800 = vunpack.c.h.b16 %v1492
        %v1801 = vunpack.c.l.b16 %v1493
        %v1802 = vunpack.c.h.b16 %v1493
        %v1803 = vunpack.c.l.b16 %v1494
        %v1804 = vunpack.c.h.b16 %v1494
        %v1805 = vunpack.c.l.b16 %v1495
        %v1806 = vunpack.c.h.b16 %v1495
        %v1807 = vunpack.c.l.b16 %v1496
        %v1808 = vunpack.c.h.b16 %v1496
        %v1809 = vunpack.c.l.b16 %v1497
        %v1810 = vunpack.c.h.b16 %v1497
        %v1811 = vunpack.c.l.b16 %v1498
        %v1812 = vunpack.c.h.b16 %v1498
        %v1813 = vunpack.c.l.b16 %v1499
        %v1814 = vunpack.c.h.b16 %v1499
        %v1815 = vunpack.c.l.b16 %v1500
        %v1816 = vunpack.c.h.b16 %v1500
        %v1817 = vunpack.c.l.b16 %v1501
        %v1818 = vunpack.c.h.b16 %v1501
        %v1819 = vunpack.c.l.b16 %v1502
        %v1820 = vunpack.c.h.b16 %v1502
        %v1821 = vunpack.c.l.b16 %v1503
        %v1822 = vunpack.c.h.b16 %v1503
        %v1823 = vunpack.c.l.b16 %v1504
        %v1824 = vunpack.c.h.b16 %v1504
        %v1825 = vunpack.c.l.b16 %v1505
        %v1826 = vunpack.c.h.b16 %v1505
        %v1827 = vunpack.c.l.b16 %v1506
        %v1828 = vunpack.c.h.b16 %v1506
        %v1829 = vunpack.c.l.b16 %v1507
        %v1830 = vunpack.c.h.b16 %v1507
        %v1831 = vunpack.c.l.b16 %v1508
        %v1832 = vunpack.c.h.b16 %v1508
        %v1833 = vunpack.c.l.b16 %v1509
        %v1834 = vunpack.c.h.b16 %v1509
        %v1835 = vunpack.c.l.b16 %v1510
        %v1836 = vunpack.c.h.b16 %v1510
        %v1837 = vunpack.c.l.b16 %v1511
        %v1838 = vunpack.c.h.b16 %v1511
        %v1839 = vunpack.c.l.b16 %v1512
        %v1840 = vunpack.c.h.b16 %v1512
        %v1841 = vunpack.c.l.b16 %v1513
        %v1842 = vunpack.c.h.b16 %v1513
        %v1843 = vunpack.c.l.b16 %v1514
        %v1844 = vunpack.c.h.b16 %v1514
        %v1845 = vunpack.c.l.b16 %v1515
        %v1846 = vunpack.c.h.b16 %v1515
        %v1847 = vunpack.c.l.b16 %v1516
        %v1848 = vunpack.c.h.b16 %v1516
        %v1849 = vunpack.c.l.b16 %v1517
        %v1850 = vunpack.c.h.b16 %v1517
        %v1851 = vunpack.c.l.b16 %v1518
        %v1852 = vunpack.c.h.b16 %v1518
        %v1853 = vunpack.c.l.b16 %v1519
        %v1854 = vunpack.c.h.b16 %v1519
        %v1855 = vunpack.c.l.b16 %v1520
        %v1856 = vunpack.c.h.b16 %v1520
        %v1857 = vunpack.c.l.b16 %v1521
        %v1858 = vunpack.c.h.b16 %v1521
        %v1859 = vunpack.c.l.b16 %v1522
        %v1860 = vunpack.c.h.b16 %v1522
        %v1861 = vunpack.c.l.b16 %v1523
        %v1862 = vunpack.c.h.b16 %v1523
        %v1863 = vpack.c.b16 %v1677, %v1671
        %v1864 = vpack.c.b16 %v1678, %v1672
        %v1865 = vpack.c.b16 %v1679, %v1673
        %v1866 = vpack.c.b16 %v1680, %v1674
        %v1867 = vpack.c.b16 %v1681, %v1675
        %v1868 = vpack.c.b16 %v1682, %v1676
        %v1869 = vpack.c.b16 %v1689, %v1683
        %v1870 = vpack.c.b16 %v1690, %v1684
        %v1871 = vpack.c.b16 %v1691, %v1685
        %v1872 = vpack.c.b16 %v1692, %v1686
        %v1873 = vpack.c.b16 %v1693, %v1687
        %v1874 = vpack.c.b16 %v1694, %v1688
        %v1875 = vpack.c.b16 %v1701, %v1695
        %v1876 = vpack.c.b16 %v1702, %v1696
        %v1877 = vpack.c.b16 %v1703, %v1697
        %v1878 = vpack.c.b16 %v1704, %v1698
        %v1879 = vpack.c.b16 %v1705, %v1699
        %v1880 = vpack.c.b16 %v1706, %v1700
        %v1881 = vpack.c.b16 %v1713, %v1707
        %v1882 = vpack.c.b16 %v1714, %v1708
        %v1883 = vpack.c.b16 %v1715, %v1709
        %v1884 = vpack.c.b16 %v1716, %v1710
        %v1885 = vpack.c.b16 %v1717, %v1711
        %v1886 = vpack.c.b16 %v1718, %v1712
        %v1887 = vpack.c.b16 %v1725, %v1719
        %v1888 = vpack.c.b16 %v1726, %v1720
        %v1889 = vpack.c.b16 %v1727, %v1721
        %v1890 = vpack.c.b16 %v1728, %v1722
        %v1891 = vpack.c.b16 %v1729, %v1723
        %v1892 = vpack.c.b16 %v1730, %v1724
        %v1893 = vpack.c.b16 %v1737, %v1731
        %v1894 = vpack.c.b16 %v1738, %v1732
        %v1895 = vpack.c.b16 %v1739, %v1733
        %v1896 = vpack.c.b16 %v1740, %v1734
        %v1897 = vpack.c.b16 %v1741, %v1735
        %v1898 = vpack.c.b16 %v1742, %v1736
        %v1899 = vpack.c.b16 %v1749, %v1743
        %v1900 = vpack.c.b16 %v1750, %v1744
        %v1901 = vpack.c.b16 %v1751, %v1745
        %v1902 = vpack.c.b16 %v1752, %v1746
        %v1903 = vpack.c.b16 %v1753, %v1747
        %v1904 = vpack.c.b16 %v1754, %v1748
        %v1905 = vpack.c.b16 %v1761, %v1755
        %v1906 = vpack.c.b16 %v1762, %v1756
        %v1907 = vpack.c.b16 %v1763, %v1757
        %v1908 = vpack.c.b16 %v1764, %v1758
        %v1909 = vpack.c.b16 %v1765, %v1759
        %v1910 = vpack.c.b16 %v1766, %v1760
        %v1911 = vpack.c.b16 %v1773, %v1767
        %v1912 = vpack.c.b16 %v1774, %v1768
        %v1913 = vpack.c.b16 %v1775, %v1769
        %v1914 = vpack.c.b16 %v1776, %v1770
        %v1915 = vpack.c.b16 %v1777, %v1771
        %v1916 = vpack.c.b16 %v1778, %v1772
        %v1917 = vpack.c.b16 %v1785, %v1779
        %v1918 = vpack.c.b16 %v1786, %v1780
        %v1919 = vpack.c.b16 %v1787, %v1781
        %v1920 = vpack.c.b16 %v1788, %v1782
        %v1921 = vpack.c.b16 %v1789, %v1783
        %v1922 = vpack.c.b16 %v1790, %v1784
        %v1923 = vpack.c.b16 %v1797, %v1791
        %v1924 = vpack.c.b16 %v1798, %v1792
        %v1925 = vpack.c.b16 %v1799, %v1793
        %v1926 = vpack.c.b16 %v1800, %v1794
        %v1927 = vpack.c.b16 %v1801, %v1795
        %v1928 = vpack.c.b16 %v1802, %v1796
        %v1929 = vpack.c.b16 %v1809, %v1803
        %v1930 = vpack.c.b16 %v1810, %v1804
        %v1931 = vpack.c.b16 %v1811, %v1805
        %v1932 = vpack.c.b16 %v1812, %v1806
        %v1933 = vpack.c.b16 %v1813, %v1807
        %v1934 = vpack.c.b16 %v1814, %v1808
        %v1935 = vpack.c.b16 %v1821, %v1815
        %v1936 = vpack.c.b16 %v1822, %v1816
        %v1937 = vpack.c.b16 %v1823, %v1817
        %v1938 = vpack.c.b16 %v1824, %v1818
        %v1939 = vpack.c.b16 %v1825, %v1819
        %v1940 = vpack.c.b16 %v1826, %v1820
        %v1941 = vpack.c.b16 %v1833, %v1827
        %v1942 = vpack.c.b16 %v1834, %v1828
        %v1943 = vpack.c.b16 %v1835, %v1829
        %v1944 = vpack.c.b16 %v1836, %v1830
        %v1945 = vpack.c.b16 %v1837, %v1831
        %v1946 = vpack.c.b16 %v1838, %v1832
        %v1947 = vpack.c.b16 %v1845, %v1839
        %v1948 = vpack.c.b16 %v1846, %v1840
        %v1949 = vpack.c.b16 %v1847, %v1841
        %v1950 = vpack.c.b16 %v1848, %v1842
        %v1951 = vpack.c.b16 %v1849, %v1843
        %v1952 = vpack.c.b16 %v1850, %v1844
        %v1953 = vpack.c.b16 %v1857, %v1851
        %v1954 = vpack.c.b16 %v1858, %v1852
        %v1955 = vpack.c.b16 %v1859, %v1853
        %v1956 = vpack.c.b16 %v1860, %v1854
        %v1957 = vpack.c.b16 %v1861, %v1855
        %v1958 = vpack.c.b16 %v1862, %v1856
        %2055 = vmatprep.subr.bf16.mxu0 %v1864
        %2056 = vmatpush1.bf16.msra.mxu0 %v1863
        %2057 = vmatprep.subr.bf16.mxu0 %v1870
        %2058 = vmatpush1.bf16.msra.mxu0 %v1869
        %2059 = vmatprep.subr.bf16.mxu0 %v1876
        %2060 = vmatpush1.bf16.msra.mxu0 %v1875
        %2061 = vmatprep.subr.bf16.mxu0 %v1882
        %2062 = vmatpush1.bf16.msra.mxu0 %v1881
        %2063 = vmatprep.subr.bf16.mxu0 %v1888
        %2064 = vmatpush1.bf16.msra.mxu0 %v1887
        %2065 = vmatprep.subr.bf16.mxu0 %v1894
        %2066 = vmatpush1.bf16.msra.mxu0 %v1893
        %2067 = vmatprep.subr.bf16.mxu0 %v1900
        %2068 = vmatpush1.bf16.msra.mxu0 %v1899
        %2069 = vmatprep.subr.bf16.mxu0 %v1906
        %2070 = vmatpush1.bf16.msra.mxu0 %v1905
        %2071 = vmatprep.subr.bf16.mxu0 %v1912
        %2072 = vmatpush1.bf16.msra.mxu0 %v1911
        %2073 = vmatprep.subr.bf16.mxu0 %v1918
        %2074 = vmatpush1.bf16.msra.mxu0 %v1917
        %2075 = vmatprep.subr.bf16.mxu0 %v1924
        %2076 = vmatpush1.bf16.msra.mxu0 %v1923
        %2077 = vmatprep.subr.bf16.mxu0 %v1930
        %2078 = vmatpush1.bf16.msra.mxu0 %v1929
        %2079 = vmatprep.subr.bf16.mxu0 %v1936
        %2080 = vmatpush1.bf16.msra.mxu0 %v1935
        %2081 = vmatprep.subr.bf16.mxu0 %v1942
        %2082 = vmatpush1.bf16.msra.mxu0 %v1941
        %2083 = vmatprep.subr.bf16.mxu0 %v1948
        %2084 = vmatpush1.bf16.msra.mxu0 %v1947
        %2085 = vmatprep.subr.bf16.mxu0 %v1954
        %2086 = vmatpush1.bf16.msra.mxu0 %v1953
        %2087 = vmatprep.mubr.bf16.mxu0 %v1543
        %2088 = vmatmul.mubr.bf16.gmra.mrb[0].mxu0 %v1542
        %v2089 = vpop.f32.mrb[0].mxu0
        %v2090 = vadd.f32 %v1548, %v2089
        %v2091 = vpop.f32.mrb[0].mxu0
        %v2092 = vadd.f32 %v1552, %v2091
        %v2093 = vpop.f32.mrb[0].mxu0
        %v2094 = vpop.f32.mrb[0].mxu0
        %2095 = vdwg.mxu0
        %2096 = vmatprep.subr.bf16.mxu0 %v1866
        %2097 = vmatpush1.bf16.msra.mxu0 %v1865
        %2098 = vmatprep.subr.bf16.mxu0 %v1872
        %2099 = vmatpush1.bf16.msra.mxu0 %v1871
        %2100 = vmatprep.subr.bf16.mxu0 %v1878
        %2101 = vmatpush1.bf16.msra.mxu0 %v1877
        %2102 = vmatprep.subr.bf16.mxu0 %v1884
        %2103 = vmatpush1.bf16.msra.mxu0 %v1883
        %2104 = vmatprep.subr.bf16.mxu0 %v1890
        %2105 = vmatpush1.bf16.msra.mxu0 %v1889
        %2106 = vmatprep.subr.bf16.mxu0 %v1896
        %2107 = vmatpush1.bf16.msra.mxu0 %v1895
        %2108 = vmatprep.subr.bf16.mxu0 %v1902
        %2109 = vmatpush1.bf16.msra.mxu0 %v1901
        %2110 = vmatprep.subr.bf16.mxu0 %v1908
        %2111 = vmatpush1.bf16.msra.mxu0 %v1907
        %2112 = vmatprep.subr.bf16.mxu0 %v1914
        %2113 = vmatpush1.bf16.msra.mxu0 %v1913
        %2114 = vmatprep.subr.bf16.mxu0 %v1920
        %2115 = vmatpush1.bf16.msra.mxu0 %v1919
        %2116 = vmatprep.subr.bf16.mxu0 %v1926
        %2117 = vmatpush1.bf16.msra.mxu0 %v1925
        %2118 = vmatprep.subr.bf16.mxu0 %v1932
        %2119 = vmatpush1.bf16.msra.mxu0 %v1931
        %2120 = vmatprep.subr.bf16.mxu0 %v1938
        %2121 = vmatpush1.bf16.msra.mxu0 %v1937
        %2122 = vmatprep.subr.bf16.mxu0 %v1944
        %2123 = vmatpush1.bf16.msra.mxu0 %v1943
        %2124 = vmatprep.subr.bf16.mxu0 %v1950
        %2125 = vmatpush1.bf16.msra.mxu0 %v1949
        %2126 = vmatprep.subr.bf16.mxu0 %v1956
        %2127 = vmatpush1.bf16.msra.mxu0 %v1955
        %2128 = vmatprep.mubr.bf16.mxu0 %v1543
        %2129 = vmatmul.mubr.bf16.gmra.mrb[0].mxu0 %v1542
        %v2130 = vpop.f32.mrb[0].mxu0
        %v2131 = vadd.f32 %v1556, %v2130
        %v2132 = vpop.f32.mrb[0].mxu0
        %v2133 = vadd.f32 %v1560, %v2132
        %v2134 = vpop.f32.mrb[0].mxu0
        %v2135 = vpop.f32.mrb[0].mxu0
        %2136 = vdwg.mxu0
        %2137 = vmatprep.subr.bf16.mxu0 %v1868
        %2138 = vmatpush1.bf16.msra.mxu0 %v1867
        %2139 = vmatprep.subr.bf16.mxu0 %v1874
        %2140 = vmatpush1.bf16.msra.mxu0 %v1873
        %2141 = vmatprep.subr.bf16.mxu0 %v1880
        %2142 = vmatpush1.bf16.msra.mxu0 %v1879
        %2143 = vmatprep.subr.bf16.mxu0 %v1886
        %2144 = vmatpush1.bf16.msra.mxu0 %v1885
        %2145 = vmatprep.subr.bf16.mxu0 %v1892
        %2146 = vmatpush1.bf16.msra.mxu0 %v1891
        %2147 = vmatprep.subr.bf16.mxu0 %v1898
        %2148 = vmatpush1.bf16.msra.mxu0 %v1897
        %2149 = vmatprep.subr.bf16.mxu0 %v1904
        %2150 = vmatpush1.bf16.msra.mxu0 %v1903
        %2151 = vmatprep.subr.bf16.mxu0 %v1910
        %2152 = vmatpush1.bf16.msra.mxu0 %v1909
        %2153 = vmatprep.subr.bf16.mxu0 %v1916
        %2154 = vmatpush1.bf16.msra.mxu0 %v1915
        %2155 = vmatprep.subr.bf16.mxu0 %v1922
        %2156 = vmatpush1.bf16.msra.mxu0 %v1921
        %2157 = vmatprep.subr.bf16.mxu0 %v1928
        %2158 = vmatpush1.bf16.msra.mxu0 %v1927
        %2159 = vmatprep.subr.bf16.mxu0 %v1934
        %2160 = vmatpush1.bf16.msra.mxu0 %v1933
        %2161 = vmatprep.subr.bf16.mxu0 %v1940
        %2162 = vmatpush1.bf16.msra.mxu0 %v1939
        %2163 = vmatprep.subr.bf16.mxu0 %v1946
        %2164 = vmatpush1.bf16.msra.mxu0 %v1945
        %2165 = vmatprep.subr.bf16.mxu0 %v1952
        %2166 = vmatpush1.bf16.msra.mxu0 %v1951
        %2167 = vmatprep.subr.bf16.mxu0 %v1958
        %2168 = vmatpush1.bf16.msra.mxu0 %v1957
        %2169 = vmatprep.mubr.bf16.mxu0 %v1543
        %2170 = vmatmul.mubr.bf16.gmra.mrb[0].mxu0 %v1542
        %v2171 = vpop.f32.mrb[0].mxu0
        %v2172 = vadd.f32 %v1564, %v2171
        %v2173 = vpop.f32.mrb[0].mxu0
        %v2174 = vadd.f32 %v1568, %v2173
        %v2175 = vpop.f32.mrb[0].mxu0
        %v2176 = vpop.f32.mrb[0].mxu0
        %2177 = vdwg.mxu0
        %v2178 = vadd.f32 %v1533, %v2090
        %v2179 = vxor.u32 %v2178, 2147483648
        %v2180 = vmul.f32 %v2179, 1.442695
        %v2181 = vpow.pop %v2180
        %v2182 = vadd.f32 %v2181, 1.0
        %v2183 = vrcp.pop %v2182
        %v2184 = vmul.f32 1.0, %v2183
        %v2185 = vadd.f32 %v1534, %v2092
        %v2186 = vxor.u32 %v2185, 2147483648
        %v2187 = vmul.f32 %v2186, 1.442695
        %v2188 = vpow.pop %v2187
        %v2189 = vadd.f32 %v2188, 1.0
        %v2190 = vrcp.pop %v2189
        %v2191 = vmul.f32 1.0, %v2190
        %v2192 = vmul.f32 %v2184, %v2131
        %v2193 = vadd.f32 %v1535, %v2192
        %v2194 = vtanh.pop %v2193
        %v2195 = vsub.f32 %v1529, %v2194
        %v2196 = vmul.f32 %v2191, %v2195
        %v2197 = vadd.f32 %v2194, %v2196
        %v2198 = vadd.f32 %v1539, %v2133
        %v2199 = vxor.u32 %v2198, 2147483648
        %v2200 = vmul.f32 %v2199, 1.442695
        %v2201 = vpow.pop %v2200
        %v2202 = vadd.f32 %v2201, 1.0
        %v2203 = vrcp.pop %v2202
        %v2204 = vmul.f32 1.0, %v2203
        %v2205 = vadd.f32 %v1540, %v2172
        %v2206 = vxor.u32 %v2205, 2147483648
        %v2207 = vmul.f32 %v2206, 1.442695
        %v2208 = vpow.pop %v2207
        %v2209 = vadd.f32 %v2208, 1.0
        %v2210 = vrcp.pop %v2209
        %v2211 = vmul.f32 1.0, %v2210
        %v2212 = vmul.f32 %v2204, %v2174
        %v2213 = vadd.f32 %v1541, %v2212
        %v2214 = vtanh.pop %v2213
        %v2215 = vsub.f32 %v1530, %v2214
        %v2216 = vmul.f32 %v2211, %v2215
        %v2217 = vadd.f32 %v2214, %v2216
        %v2218 = vstv %s1526
        %vm2219 = vcmp.gt.s32.totalorder %v1525, %v2218
        %s2220 = sadd.s32 %s1528, 3
        %v2221 = vstv %s2220
        %vm2222 = vcmp.gt.s32.totalorder %v1525, %v2221
        %v2223 = vsel %vm2219, 1, 0
        %2224 = vset.pattern.permute.xlu0 0
        %2225 = vperm.xlu0 %2224, %v2223
        %v2226 = vpop.permute.xlu0 %2225
        %vm2227 = vcmp.eq.s32.totalorder %v2226, 1
        %v2228 = vsel %vm2227, %v2197, 0.0
        %2229 = vst [vmem:[%s641] sm:$0xff] %v2228
        %v2230 = vsel %vm2222, 1, 0
        %2231 = vset.pattern.permute.xlu0 0
        %2232 = vperm.xlu0 %2231, %v2230
        %v2233 = vpop.permute.xlu0 %2232
        %vm2234 = vcmp.eq.s32.totalorder %v2233, 1
        %v2235 = vsel %vm2234, %v2217, 0.0
        %s2236 = scalar_lea.vmem %s648, 24 [#allocation18]
        %2237 = vst [vmem:[%s2236] sm:$0xff] %v2235
        %v2238 = vsel %vm2227, %v2197, %v1529
        %v2239 = vsel %vm2234, %v2217, %v1530
        %s2240 = scalar_lea.vmem [#allocation2], 12
        %v2241 = vld [vmem:[%s2240] sm:$0xff]
        %v2242 = vld [vmem:[%s2240 + $0x8] sm:$0xf]
        %v2243 = vunpack.c.l.bf16 %v2241
        %v2244 = vunpack.c.h.bf16 %v2241
        %v2245 = vunpack.c.l.bf16 %v2242
        %s2246 = scalar_lea.vmem [#allocation3], 24
        %v2247 = vld [vmem:[%s2246] sm:$0xff]
        %v2248 = vld [vmem:[%s2246 + $0x8] sm:$0xf]
        %v2249 = vunpack.c.l.bf16 %v2247
        %v2250 = vunpack.c.h.bf16 %v2247
        %v2251 = vunpack.c.l.bf16 %v2248
        %v2252 = vpack.c.bf16 %v2238, %v2238
        %v2253 = vpack.c.bf16 %v2239, %v2239
        %2254 = vmatprep.subr.bf16.mxu0 %v1864
        %2255 = vmatpush1.bf16.msra.mxu0 %v1863
        %2256 = vmatprep.subr.bf16.mxu0 %v1870
        %2257 = vmatpush1.bf16.msra.mxu0 %v1869
        %2258 = vmatprep.subr.bf16.mxu0 %v1876
        %2259 = vmatpush1.bf16.msra.mxu0 %v1875
        %2260 = vmatprep.subr.bf16.mxu0 %v1882
        %2261 = vmatpush1.bf16.msra.mxu0 %v1881
        %2262 = vmatprep.subr.bf16.mxu0 %v1888
        %2263 = vmatpush1.bf16.msra.mxu0 %v1887
        %2264 = vmatprep.subr.bf16.mxu0 %v1894
        %2265 = vmatpush1.bf16.msra.mxu0 %v1893
        %2266 = vmatprep.subr.bf16.mxu0 %v1900
        %2267 = vmatpush1.bf16.msra.mxu0 %v1899
        %2268 = vmatprep.subr.bf16.mxu0 %v1906
        %2269 = vmatpush1.bf16.msra.mxu0 %v1905
        %2270 = vmatprep.subr.bf16.mxu0 %v1912
        %2271 = vmatpush1.bf16.msra.mxu0 %v1911
        %2272 = vmatprep.subr.bf16.mxu0 %v1918
        %2273 = vmatpush1.bf16.msra.mxu0 %v1917
        %2274 = vmatprep.subr.bf16.mxu0 %v1924
        %2275 = vmatpush1.bf16.msra.mxu0 %v1923
        %2276 = vmatprep.subr.bf16.mxu0 %v1930
        %2277 = vmatpush1.bf16.msra.mxu0 %v1929
        %2278 = vmatprep.subr.bf16.mxu0 %v1936
        %2279 = vmatpush1.bf16.msra.mxu0 %v1935
        %2280 = vmatprep.subr.bf16.mxu0 %v1942
        %2281 = vmatpush1.bf16.msra.mxu0 %v1941
        %2282 = vmatprep.subr.bf16.mxu0 %v1948
        %2283 = vmatpush1.bf16.msra.mxu0 %v1947
        %2284 = vmatprep.subr.bf16.mxu0 %v1954
        %2285 = vmatpush1.bf16.msra.mxu0 %v1953
        %2286 = vmatprep.mubr.bf16.mxu0 %v2253
        %2287 = vmatmul.mubr.bf16.gmra.mrb[0].mxu0 %v2252
        %v2288 = vpop.f32.mrb[0].mxu0
        %v2289 = vadd.f32 %v1548, %v2288
        %v2290 = vpop.f32.mrb[0].mxu0
        %v2291 = vadd.f32 %v1552, %v2290
        %v2292 = vpop.f32.mrb[0].mxu0
        %v2293 = vpop.f32.mrb[0].mxu0
        %2294 = vdwg.mxu0
        %2295 = vmatprep.subr.bf16.mxu0 %v1866
        %2296 = vmatpush1.bf16.msra.mxu0 %v1865
        %2297 = vmatprep.subr.bf16.mxu0 %v1872
        %2298 = vmatpush1.bf16.msra.mxu0 %v1871
        %2299 = vmatprep.subr.bf16.mxu0 %v1878
        %2300 = vmatpush1.bf16.msra.mxu0 %v1877
        %2301 = vmatprep.subr.bf16.mxu0 %v1884
        %2302 = vmatpush1.bf16.msra.mxu0 %v1883
        %2303 = vmatprep.subr.bf16.mxu0 %v1890
        %2304 = vmatpush1.bf16.msra.mxu0 %v1889
        %2305 = vmatprep.subr.bf16.mxu0 %v1896
        %2306 = vmatpush1.bf16.msra.mxu0 %v1895
        %2307 = vmatprep.subr.bf16.mxu0 %v1902
        %2308 = vmatpush1.bf16.msra.mxu0 %v1901
        %2309 = vmatprep.subr.bf16.mxu0 %v1908
        %2310 = vmatpush1.bf16.msra.mxu0 %v1907
        %2311 = vmatprep.subr.bf16.mxu0 %v1914
        %2312 = vmatpush1.bf16.msra.mxu0 %v1913
        %2313 = vmatprep.subr.bf16.mxu0 %v1920
        %2314 = vmatpush1.bf16.msra.mxu0 %v1919
        %2315 = vmatprep.subr.bf16.mxu0 %v1926
        %2316 = vmatpush1.bf16.msra.mxu0 %v1925
        %2317 = vmatprep.subr.bf16.mxu0 %v1932
        %2318 = vmatpush1.bf16.msra.mxu0 %v1931
        %2319 = vmatprep.subr.bf16.mxu0 %v1938
        %2320 = vmatpush1.bf16.msra.mxu0 %v1937
        %2321 = vmatprep.subr.bf16.mxu0 %v1944
        %2322 = vmatpush1.bf16.msra.mxu0 %v1943
        %2323 = vmatprep.subr.bf16.mxu0 %v1950
        %2324 = vmatpush1.bf16.msra.mxu0 %v1949
        %2325 = vmatprep.subr.bf16.mxu0 %v1956
        %2326 = vmatpush1.bf16.msra.mxu0 %v1955
        %2327 = vmatprep.mubr.bf16.mxu0 %v2253
        %2328 = vmatmul.mubr.bf16.gmra.mrb[0].mxu0 %v2252
        %v2329 = vpop.f32.mrb[0].mxu0
        %v2330 = vadd.f32 %v1556, %v2329
        %v2331 = vpop.f32.mrb[0].mxu0
        %v2332 = vadd.f32 %v1560, %v2331
        %v2333 = vpop.f32.mrb[0].mxu0
        %v2334 = vpop.f32.mrb[0].mxu0
        %2335 = vdwg.mxu0
        %2336 = vmatprep.subr.bf16.mxu0 %v1868
        %2337 = vmatpush1.bf16.msra.mxu0 %v1867
        %2338 = vmatprep.subr.bf16.mxu0 %v1874
        %2339 = vmatpush1.bf16.msra.mxu0 %v1873
        %2340 = vmatprep.subr.bf16.mxu0 %v1880
        %2341 = vmatpush1.bf16.msra.mxu0 %v1879
        %2342 = vmatprep.subr.bf16.mxu0 %v1886
        %2343 = vmatpush1.bf16.msra.mxu0 %v1885
        %2344 = vmatprep.subr.bf16.mxu0 %v1892
        %2345 = vmatpush1.bf16.msra.mxu0 %v1891
        %2346 = vmatprep.subr.bf16.mxu0 %v1898
        %2347 = vmatpush1.bf16.msra.mxu0 %v1897
        %2348 = vmatprep.subr.bf16.mxu0 %v1904
        %2349 = vmatpush1.bf16.msra.mxu0 %v1903
        %2350 = vmatprep.subr.bf16.mxu0 %v1910
        %2351 = vmatpush1.bf16.msra.mxu0 %v1909
        %2352 = vmatprep.subr.bf16.mxu0 %v1916
        %2353 = vmatpush1.bf16.msra.mxu0 %v1915
        %2354 = vmatprep.subr.bf16.mxu0 %v1922
        %2355 = vmatpush1.bf16.msra.mxu0 %v1921
        %2356 = vmatprep.subr.bf16.mxu0 %v1928
        %2357 = vmatpush1.bf16.msra.mxu0 %v1927
        %2358 = vmatprep.subr.bf16.mxu0 %v1934
        %2359 = vmatpush1.bf16.msra.mxu0 %v1933
        %2360 = vmatprep.subr.bf16.mxu0 %v1940
        %2361 = vmatpush1.bf16.msra.mxu0 %v1939
        %2362 = vmatprep.subr.bf16.mxu0 %v1946
        %2363 = vmatpush1.bf16.msra.mxu0 %v1945
        %2364 = vmatprep.subr.bf16.mxu0 %v1952
        %2365 = vmatpush1.bf16.msra.mxu0 %v1951
        %2366 = vmatprep.subr.bf16.mxu0 %v1958
        %2367 = vmatpush1.bf16.msra.mxu0 %v1957
        %2368 = vmatprep.mubr.bf16.mxu0 %v2253
        %2369 = vmatmul.mubr.bf16.gmra.mrb[0].mxu0 %v2252
        %v2370 = vpop.f32.mrb[0].mxu0
        %v2371 = vadd.f32 %v1564, %v2370
        %v2372 = vpop.f32.mrb[0].mxu0
        %v2373 = vadd.f32 %v1568, %v2372
        %v2374 = vpop.f32.mrb[0].mxu0
        %v2375 = vpop.f32.mrb[0].mxu0
        %2376 = vdwg.mxu0
        %v2377 = vadd.f32 %v2243, %v2289
        %v2378 = vxor.u32 %v2377, 2147483648
        %v2379 = vmul.f32 %v2378, 1.442695
        %v2380 = vpow.pop %v2379
        %v2381 = vadd.f32 %v2380, 1.0
        %v2382 = vrcp.pop %v2381
        %v2383 = vmul.f32 1.0, %v2382
        %v2384 = vadd.f32 %v2244, %v2291
        %v2385 = vxor.u32 %v2384, 2147483648
        %v2386 = vmul.f32 %v2385, 1.442695
        %v2387 = vpow.pop %v2386
        %v2388 = vadd.f32 %v2387, 1.0
        %v2389 = vrcp.pop %v2388
        %v2390 = vmul.f32 1.0, %v2389
        %v2391 = vmul.f32 %v2383, %v2330
        %v2392 = vadd.f32 %v2245, %v2391
        %v2393 = vtanh.pop %v2392
        %v2394 = vsub.f32 %v2238, %v2393
        %v2395 = vmul.f32 %v2390, %v2394
        %v2396 = vadd.f32 %v2393, %v2395
        %v2397 = vadd.f32 %v2249, %v2332
        %v2398 = vxor.u32 %v2397, 2147483648
        %v2399 = vmul.f32 %v2398, 1.442695
        %v2400 = vpow.pop %v2399
        %v2401 = vadd.f32 %v2400, 1.0
        %v2402 = vrcp.pop %v2401
        %v2403 = vmul.f32 1.0, %v2402
        %v2404 = vadd.f32 %v2250, %v2371
        %v2405 = vxor.u32 %v2404, 2147483648
        %v2406 = vmul.f32 %v2405, 1.442695
        %v2407 = vpow.pop %v2406
        %v2408 = vadd.f32 %v2407, 1.0
        %v2409 = vrcp.pop %v2408
        %v2410 = vmul.f32 1.0, %v2409
        %v2411 = vmul.f32 %v2403, %v2373
        %v2412 = vadd.f32 %v2251, %v2411
        %v2413 = vtanh.pop %v2412
        %v2414 = vsub.f32 %v2239, %v2413
        %v2415 = vmul.f32 %v2410, %v2414
        %v2416 = vadd.f32 %v2413, %v2415
        %s2417 = sadd.s32 %s1526, 1
        %v2418 = vstv %s2417
        %vm2419 = vcmp.gt.s32.totalorder %v1525, %v2418
        %s2420 = sadd.s32 %s1528, 2
        %v2421 = vstv %s2420
        %vm2422 = vcmp.gt.s32.totalorder %v1525, %v2421
        %v2423 = vsel %vm2419, 1, 0
        %2424 = vset.pattern.permute.xlu0 0
        %2425 = vperm.xlu0 %2424, %v2423
        %v2426 = vpop.permute.xlu0 %2425
        %vm2427 = vcmp.eq.s32.totalorder %v2426, 1
        %v2428 = vsel %vm2427, %v2396, 0.0
        %s2429 = scalar_lea.vmem %s641, 8 [#allocation17]
        %2430 = vst [vmem:[%s2429] sm:$0xff] %v2428
        %v2431 = vsel %vm2422, 1, 0
        %2432 = vset.pattern.permute.xlu0 0
        %2433 = vperm.xlu0 %2432, %v2431
        %v2434 = vpop.permute.xlu0 %2433
        %vm2435 = vcmp.eq.s32.totalorder %v2434, 1
        %v2436 = vsel %vm2435, %v2416, 0.0
        %s2437 = scalar_lea.vmem %s648, 16 [#allocation18]
        %2438 = vst [vmem:[%s2437] sm:$0xff] %v2436
        %v2439 = vsel %vm2427, %v2396, %v2238
        %v2440 = vsel %vm2435, %v2416, %v2239
        %s2441 = scalar_lea.vmem [#allocation2], 24
        %v2442 = vld [vmem:[%s2441] sm:$0xff]
        %v2443 = vld [vmem:[%s2441 + $0x8] sm:$0xf]
        %v2444 = vunpack.c.l.bf16 %v2442
        %v2445 = vunpack.c.h.bf16 %v2442
        %v2446 = vunpack.c.l.bf16 %v2443
        %s2447 = scalar_lea.vmem [#allocation3], 12
        %v2448 = vld [vmem:[%s2447] sm:$0xff]
        %v2449 = vld [vmem:[%s2447 + $0x8] sm:$0xf]
        %v2450 = vunpack.c.l.bf16 %v2448
        %v2451 = vunpack.c.h.bf16 %v2448
        %v2452 = vunpack.c.l.bf16 %v2449
        %v2453 = vpack.c.bf16 %v2439, %v2439
        %v2454 = vpack.c.bf16 %v2440, %v2440
        %2455 = vmatprep.subr.bf16.mxu0 %v1864
        %2456 = vmatpush1.bf16.msra.mxu0 %v1863
        %2457 = vmatprep.subr.bf16.mxu0 %v1870
        %2458 = vmatpush1.bf16.msra.mxu0 %v1869
        %2459 = vmatprep.subr.bf16.mxu0 %v1876
        %2460 = vmatpush1.bf16.msra.mxu0 %v1875
        %2461 = vmatprep.subr.bf16.mxu0 %v1882
        %2462 = vmatpush1.bf16.msra.mxu0 %v1881
        %2463 = vmatprep.subr.bf16.mxu0 %v1888
        %2464 = vmatpush1.bf16.msra.mxu0 %v1887
        %2465 = vmatprep.subr.bf16.mxu0 %v1894
        %2466 = vmatpush1.bf16.msra.mxu0 %v1893
        %2467 = vmatprep.subr.bf16.mxu0 %v1900
        %2468 = vmatpush1.bf16.msra.mxu0 %v1899
        %2469 = vmatprep.subr.bf16.mxu0 %v1906
        %2470 = vmatpush1.bf16.msra.mxu0 %v1905
        %2471 = vmatprep.subr.bf16.mxu0 %v1912
        %2472 = vmatpush1.bf16.msra.mxu0 %v1911
        %2473 = vmatprep.subr.bf16.mxu0 %v1918
        %2474 = vmatpush1.bf16.msra.mxu0 %v1917
        %2475 = vmatprep.subr.bf16.mxu0 %v1924
        %2476 = vmatpush1.bf16.msra.mxu0 %v1923
        %2477 = vmatprep.subr.bf16.mxu0 %v1930
        %2478 = vmatpush1.bf16.msra.mxu0 %v1929
        %2479 = vmatprep.subr.bf16.mxu0 %v1936
        %2480 = vmatpush1.bf16.msra.mxu0 %v1935
        %2481 = vmatprep.subr.bf16.mxu0 %v1942
        %2482 = vmatpush1.bf16.msra.mxu0 %v1941
        %2483 = vmatprep.subr.bf16.mxu0 %v1948
        %2484 = vmatpush1.bf16.msra.mxu0 %v1947
        %2485 = vmatprep.subr.bf16.mxu0 %v1954
        %2486 = vmatpush1.bf16.msra.mxu0 %v1953
        %2487 = vmatprep.mubr.bf16.mxu0 %v2454
        %2488 = vmatmul.mubr.bf16.gmra.mrb[0].mxu0 %v2453
        %v2489 = vpop.f32.mrb[0].mxu0
        %v2490 = vadd.f32 %v1548, %v2489
        %v2491 = vpop.f32.mrb[0].mxu0
        %v2492 = vadd.f32 %v1552, %v2491
        %v2493 = vpop.f32.mrb[0].mxu0
        %v2494 = vpop.f32.mrb[0].mxu0
        %2495 = vdwg.mxu0
        %2496 = vmatprep.subr.bf16.mxu0 %v1866
        %2497 = vmatpush1.bf16.msra.mxu0 %v1865
        %2498 = vmatprep.subr.bf16.mxu0 %v1872
        %2499 = vmatpush1.bf16.msra.mxu0 %v1871
        %2500 = vmatprep.subr.bf16.mxu0 %v1878
        %2501 = vmatpush1.bf16.msra.mxu0 %v1877
        %2502 = vmatprep.subr.bf16.mxu0 %v1884
        %2503 = vmatpush1.bf16.msra.mxu0 %v1883
        %2504 = vmatprep.subr.bf16.mxu0 %v1890
        %2505 = vmatpush1.bf16.msra.mxu0 %v1889
        %2506 = vmatprep.subr.bf16.mxu0 %v1896
        %2507 = vmatpush1.bf16.msra.mxu0 %v1895
        %2508 = vmatprep.subr.bf16.mxu0 %v1902
        %2509 = vmatpush1.bf16.msra.mxu0 %v1901
        %2510 = vmatprep.subr.bf16.mxu0 %v1908
        %2511 = vmatpush1.bf16.msra.mxu0 %v1907
        %2512 = vmatprep.subr.bf16.mxu0 %v1914
        %2513 = vmatpush1.bf16.msra.mxu0 %v1913
        %2514 = vmatprep.subr.bf16.mxu0 %v1920
        %2515 = vmatpush1.bf16.msra.mxu0 %v1919
        %2516 = vmatprep.subr.bf16.mxu0 %v1926
        %2517 = vmatpush1.bf16.msra.mxu0 %v1925
        %2518 = vmatprep.subr.bf16.mxu0 %v1932
        %2519 = vmatpush1.bf16.msra.mxu0 %v1931
        %2520 = vmatprep.subr.bf16.mxu0 %v1938
        %2521 = vmatpush1.bf16.msra.mxu0 %v1937
        %2522 = vmatprep.subr.bf16.mxu0 %v1944
        %2523 = vmatpush1.bf16.msra.mxu0 %v1943
        %2524 = vmatprep.subr.bf16.mxu0 %v1950
        %2525 = vmatpush1.bf16.msra.mxu0 %v1949
        %2526 = vmatprep.subr.bf16.mxu0 %v1956
        %2527 = vmatpush1.bf16.msra.mxu0 %v1955
        %2528 = vmatprep.mubr.bf16.mxu0 %v2454
        %2529 = vmatmul.mubr.bf16.gmra.mrb[0].mxu0 %v2453
        %v2530 = vpop.f32.mrb[0].mxu0
        %v2531 = vadd.f32 %v1556, %v2530
        %v2532 = vpop.f32.mrb[0].mxu0
        %v2533 = vadd.f32 %v1560, %v2532
        %v2534 = vpop.f32.mrb[0].mxu0
        %v2535 = vpop.f32.mrb[0].mxu0
        %2536 = vdwg.mxu0
        %2537 = vmatprep.subr.bf16.mxu0 %v1868
        %2538 = vmatpush1.bf16.msra.mxu0 %v1867
        %2539 = vmatprep.subr.bf16.mxu0 %v1874
        %2540 = vmatpush1.bf16.msra.mxu0 %v1873
        %2541 = vmatprep.subr.bf16.mxu0 %v1880
        %2542 = vmatpush1.bf16.msra.mxu0 %v1879
        %2543 = vmatprep.subr.bf16.mxu0 %v1886
        %2544 = vmatpush1.bf16.msra.mxu0 %v1885
        %2545 = vmatprep.subr.bf16.mxu0 %v1892
        %2546 = vmatpush1.bf16.msra.mxu0 %v1891
        %2547 = vmatprep.subr.bf16.mxu0 %v1898
        %2548 = vmatpush1.bf16.msra.mxu0 %v1897
        %2549 = vmatprep.subr.bf16.mxu0 %v1904
        %2550 = vmatpush1.bf16.msra.mxu0 %v1903
        %2551 = vmatprep.subr.bf16.mxu0 %v1910
        %2552 = vmatpush1.bf16.msra.mxu0 %v1909
        %2553 = vmatprep.subr.bf16.mxu0 %v1916
        %2554 = vmatpush1.bf16.msra.mxu0 %v1915
        %2555 = vmatprep.subr.bf16.mxu0 %v1922
        %2556 = vmatpush1.bf16.msra.mxu0 %v1921
        %2557 = vmatprep.subr.bf16.mxu0 %v1928
        %2558 = vmatpush1.bf16.msra.mxu0 %v1927
        %2559 = vmatprep.subr.bf16.mxu0 %v1934
        %2560 = vmatpush1.bf16.msra.mxu0 %v1933
        %2561 = vmatprep.subr.bf16.mxu0 %v1940
        %2562 = vmatpush1.bf16.msra.mxu0 %v1939
        %2563 = vmatprep.subr.bf16.mxu0 %v1946
        %2564 = vmatpush1.bf16.msra.mxu0 %v1945
        %2565 = vmatprep.subr.bf16.mxu0 %v1952
        %2566 = vmatpush1.bf16.msra.mxu0 %v1951
        %2567 = vmatprep.subr.bf16.mxu0 %v1958
        %2568 = vmatpush1.bf16.msra.mxu0 %v1957
        %2569 = vmatprep.mubr.bf16.mxu0 %v2454
        %2570 = vmatmul.mubr.bf16.gmra.mrb[0].mxu0 %v2453
        %v2571 = vpop.f32.mrb[0].mxu0
        %v2572 = vadd.f32 %v1564, %v2571
        %v2573 = vpop.f32.mrb[0].mxu0
        %v2574 = vadd.f32 %v1568, %v2573
        %v2575 = vpop.f32.mrb[0].mxu0
        %v2576 = vpop.f32.mrb[0].mxu0
        %2577 = vdwg.mxu0
        %v2578 = vadd.f32 %v2444, %v2490
        %v2579 = vxor.u32 %v2578, 2147483648
        %v2580 = vmul.f32 %v2579, 1.442695
        %v2581 = vpow.pop %v2580
        %v2582 = vadd.f32 %v2581, 1.0
        %v2583 = vrcp.pop %v2582
        %v2584 = vmul.f32 1.0, %v2583
        %v2585 = vadd.f32 %v2445, %v2492
        %v2586 = vxor.u32 %v2585, 2147483648
        %v2587 = vmul.f32 %v2586, 1.442695
        %v2588 = vpow.pop %v2587
        %v2589 = vadd.f32 %v2588, 1.0
        %v2590 = vrcp.pop %v2589
        %v2591 = vmul.f32 1.0, %v2590
        %v2592 = vmul.f32 %v2584, %v2531
        %v2593 = vadd.f32 %v2446, %v2592
        %v2594 = vtanh.pop %v2593
        %v2595 = vsub.f32 %v2439, %v2594
        %v2596 = vmul.f32 %v2591, %v2595
        %v2597 = vadd.f32 %v2594, %v2596
        %v2598 = vadd.f32 %v2450, %v2533
        %v2599 = vxor.u32 %v2598, 2147483648
        %v2600 = vmul.f32 %v2599, 1.442695
        %v2601 = vpow.pop %v2600
        %v2602 = vadd.f32 %v2601, 1.0
        %v2603 = vrcp.pop %v2602
        %v2604 = vmul.f32 1.0, %v2603
        %v2605 = vadd.f32 %v2451, %v2572
        %v2606 = vxor.u32 %v2605, 2147483648
        %v2607 = vmul.f32 %v2606, 1.442695
        %v2608 = vpow.pop %v2607
        %v2609 = vadd.f32 %v2608, 1.0
        %v2610 = vrcp.pop %v2609
        %v2611 = vmul.f32 1.0, %v2610
        %v2612 = vmul.f32 %v2604, %v2574
        %v2613 = vadd.f32 %v2452, %v2612
        %v2614 = vtanh.pop %v2613
        %v2615 = vsub.f32 %v2440, %v2614
        %v2616 = vmul.f32 %v2611, %v2615
        %v2617 = vadd.f32 %v2614, %v2616
        %s2618 = sadd.s32 %s1526, 2
        %v2619 = vstv %s2618
        %vm2620 = vcmp.gt.s32.totalorder %v1525, %v2619
        %s2621 = sadd.s32 %s1528, 1
        %v2622 = vstv %s2621
        %vm2623 = vcmp.gt.s32.totalorder %v1525, %v2622
        %v2624 = vsel %vm2620, 1, 0
        %2625 = vset.pattern.permute.xlu0 0
        %2626 = vperm.xlu0 %2625, %v2624
        %v2627 = vpop.permute.xlu0 %2626
        %vm2628 = vcmp.eq.s32.totalorder %v2627, 1
        %v2629 = vsel %vm2628, %v2597, 0.0
        %s2630 = scalar_lea.vmem %s641, 16 [#allocation17]
        %2631 = vst [vmem:[%s2630] sm:$0xff] %v2629
        %v2632 = vsel %vm2623, 1, 0
        %2633 = vset.pattern.permute.xlu0 0
        %2634 = vperm.xlu0 %2633, %v2632
        %v2635 = vpop.permute.xlu0 %2634
        %vm2636 = vcmp.eq.s32.totalorder %v2635, 1
        %v2637 = vsel %vm2636, %v2617, 0.0
        %s2638 = scalar_lea.vmem %s648, 8 [#allocation18]
        %2639 = vst [vmem:[%s2638] sm:$0xff] %v2637
        %v2640 = vsel %vm2628, %v2597, %v2439
        %v2641 = vsel %vm2636, %v2617, %v2440
        %s2642 = scalar_lea.vmem [#allocation2], 36
        %v2643 = vld [vmem:[%s2642] sm:$0xff]
        %v2644 = vld [vmem:[%s2642 + $0x8] sm:$0xf]
        %v2645 = vunpack.c.l.bf16 %v2643
        %v2646 = vunpack.c.h.bf16 %v2643
        %v2647 = vunpack.c.l.bf16 %v2644
        %v2648 = vld [vmem:[#allocation3] sm:$0xff]
        %v2649 = vld [vmem:[#allocation3 + $0x8] sm:$0xf]
        %v2650 = vunpack.c.l.bf16 %v2648
        %v2651 = vunpack.c.h.bf16 %v2648
        %v2652 = vunpack.c.l.bf16 %v2649
        %v2653 = vpack.c.bf16 %v2640, %v2640
        %v2654 = vpack.c.bf16 %v2641, %v2641
        %2655 = vmatprep.subr.bf16.mxu0 %v1864
        %2656 = vmatpush1.bf16.msra.mxu0 %v1863
        %2657 = vmatprep.subr.bf16.mxu0 %v1870
        %2658 = vmatpush1.bf16.msra.mxu0 %v1869
        %2659 = vmatprep.subr.bf16.mxu0 %v1876
        %2660 = vmatpush1.bf16.msra.mxu0 %v1875
        %2661 = vmatprep.subr.bf16.mxu0 %v1882
        %2662 = vmatpush1.bf16.msra.mxu0 %v1881
        %2663 = vmatprep.subr.bf16.mxu0 %v1888
        %2664 = vmatpush1.bf16.msra.mxu0 %v1887
        %2665 = vmatprep.subr.bf16.mxu0 %v1894
        %2666 = vmatpush1.bf16.msra.mxu0 %v1893
        %2667 = vmatprep.subr.bf16.mxu0 %v1900
        %2668 = vmatpush1.bf16.msra.mxu0 %v1899
        %2669 = vmatprep.subr.bf16.mxu0 %v1906
        %2670 = vmatpush1.bf16.msra.mxu0 %v1905
        %2671 = vmatprep.subr.bf16.mxu0 %v1912
        %2672 = vmatpush1.bf16.msra.mxu0 %v1911
        %2673 = vmatprep.subr.bf16.mxu0 %v1918
        %2674 = vmatpush1.bf16.msra.mxu0 %v1917
        %2675 = vmatprep.subr.bf16.mxu0 %v1924
        %2676 = vmatpush1.bf16.msra.mxu0 %v1923
        %2677 = vmatprep.subr.bf16.mxu0 %v1930
        %2678 = vmatpush1.bf16.msra.mxu0 %v1929
        %2679 = vmatprep.subr.bf16.mxu0 %v1936
        %2680 = vmatpush1.bf16.msra.mxu0 %v1935
        %2681 = vmatprep.subr.bf16.mxu0 %v1942
        %2682 = vmatpush1.bf16.msra.mxu0 %v1941
        %2683 = vmatprep.subr.bf16.mxu0 %v1948
        %2684 = vmatpush1.bf16.msra.mxu0 %v1947
        %2685 = vmatprep.subr.bf16.mxu0 %v1954
        %2686 = vmatpush1.bf16.msra.mxu0 %v1953
        %2687 = vmatprep.mubr.bf16.mxu0 %v2654
        %2688 = vmatmul.mubr.bf16.gmra.mrb[0].mxu0 %v2653
        %v2689 = vpop.f32.mrb[0].mxu0
        %v2690 = vadd.f32 %v1548, %v2689
        %v2691 = vpop.f32.mrb[0].mxu0
        %v2692 = vadd.f32 %v1552, %v2691
        %v2693 = vpop.f32.mrb[0].mxu0
        %v2694 = vpop.f32.mrb[0].mxu0
        %2695 = vdwg.mxu0
        %2696 = vmatprep.subr.bf16.mxu0 %v1866
        %2697 = vmatpush1.bf16.msra.mxu0 %v1865
        %2698 = vmatprep.subr.bf16.mxu0 %v1872
        %2699 = vmatpush1.bf16.msra.mxu0 %v1871
        %2700 = vmatprep.subr.bf16.mxu0 %v1878
        %2701 = vmatpush1.bf16.msra.mxu0 %v1877
        %2702 = vmatprep.subr.bf16.mxu0 %v1884
        %2703 = vmatpush1.bf16.msra.mxu0 %v1883
        %2704 = vmatprep.subr.bf16.mxu0 %v1890
        %2705 = vmatpush1.bf16.msra.mxu0 %v1889
        %2706 = vmatprep.subr.bf16.mxu0 %v1896
        %2707 = vmatpush1.bf16.msra.mxu0 %v1895
        %2708 = vmatprep.subr.bf16.mxu0 %v1902
        %2709 = vmatpush1.bf16.msra.mxu0 %v1901
        %2710 = vmatprep.subr.bf16.mxu0 %v1908
        %2711 = vmatpush1.bf16.msra.mxu0 %v1907
        %2712 = vmatprep.subr.bf16.mxu0 %v1914
        %2713 = vmatpush1.bf16.msra.mxu0 %v1913
        %2714 = vmatprep.subr.bf16.mxu0 %v1920
        %2715 = vmatpush1.bf16.msra.mxu0 %v1919
        %2716 = vmatprep.subr.bf16.mxu0 %v1926
        %2717 = vmatpush1.bf16.msra.mxu0 %v1925
        %2718 = vmatprep.subr.bf16.mxu0 %v1932
        %2719 = vmatpush1.bf16.msra.mxu0 %v1931
        %2720 = vmatprep.subr.bf16.mxu0 %v1938
        %2721 = vmatpush1.bf16.msra.mxu0 %v1937
        %2722 = vmatprep.subr.bf16.mxu0 %v1944
        %2723 = vmatpush1.bf16.msra.mxu0 %v1943
        %2724 = vmatprep.subr.bf16.mxu0 %v1950
        %2725 = vmatpush1.bf16.msra.mxu0 %v1949
        %2726 = vmatprep.subr.bf16.mxu0 %v1956
        %2727 = vmatpush1.bf16.msra.mxu0 %v1955
        %2728 = vmatprep.mubr.bf16.mxu0 %v2654
        %2729 = vmatmul.mubr.bf16.gmra.mrb[0].mxu0 %v2653
        %v2730 = vpop.f32.mrb[0].mxu0
        %v2731 = vadd.f32 %v1556, %v2730
        %v2732 = vpop.f32.mrb[0].mxu0
        %v2733 = vadd.f32 %v1560, %v2732
        %v2734 = vpop.f32.mrb[0].mxu0
        %v2735 = vpop.f32.mrb[0].mxu0
        %2736 = vdwg.mxu0
        %2737 = vmatprep.subr.bf16.mxu0 %v1868
        %2738 = vmatpush1.bf16.msra.mxu0 %v1867
        %2739 = vmatprep.subr.bf16.mxu0 %v1874
        %2740 = vmatpush1.bf16.msra.mxu0 %v1873
        %2741 = vmatprep.subr.bf16.mxu0 %v1880
        %2742 = vmatpush1.bf16.msra.mxu0 %v1879
        %2743 = vmatprep.subr.bf16.mxu0 %v1886
        %2744 = vmatpush1.bf16.msra.mxu0 %v1885
        %2745 = vmatprep.subr.bf16.mxu0 %v1892
        %2746 = vmatpush1.bf16.msra.mxu0 %v1891
        %2747 = vmatprep.subr.bf16.mxu0 %v1898
        %2748 = vmatpush1.bf16.msra.mxu0 %v1897
        %2749 = vmatprep.subr.bf16.mxu0 %v1904
        %2750 = vmatpush1.bf16.msra.mxu0 %v1903
        %2751 = vmatprep.subr.bf16.mxu0 %v1910
        %2752 = vmatpush1.bf16.msra.mxu0 %v1909
        %2753 = vmatprep.subr.bf16.mxu0 %v1916
        %2754 = vmatpush1.bf16.msra.mxu0 %v1915
        %2755 = vmatprep.subr.bf16.mxu0 %v1922
        %2756 = vmatpush1.bf16.msra.mxu0 %v1921
        %2757 = vmatprep.subr.bf16.mxu0 %v1928
        %2758 = vmatpush1.bf16.msra.mxu0 %v1927
        %2759 = vmatprep.subr.bf16.mxu0 %v1934
        %2760 = vmatpush1.bf16.msra.mxu0 %v1933
        %2761 = vmatprep.subr.bf16.mxu0 %v1940
        %2762 = vmatpush1.bf16.msra.mxu0 %v1939
        %2763 = vmatprep.subr.bf16.mxu0 %v1946
        %2764 = vmatpush1.bf16.msra.mxu0 %v1945
        %2765 = vmatprep.subr.bf16.mxu0 %v1952
        %2766 = vmatpush1.bf16.msra.mxu0 %v1951
        %2767 = vmatprep.subr.bf16.mxu0 %v1958
        %2768 = vmatpush1.bf16.msra.mxu0 %v1957
        %2769 = vmatprep.mubr.bf16.mxu0 %v2654
        %2770 = vmatmul.mubr.bf16.gmra.mrb[0].mxu0 %v2653
        %v2771 = vpop.f32.mrb[0].mxu0
        %v2772 = vadd.f32 %v1564, %v2771
        %v2773 = vpop.f32.mrb[0].mxu0
        %v2774 = vadd.f32 %v1568, %v2773
        %v2775 = vpop.f32.mrb[0].mxu0
        %v2776 = vpop.f32.mrb[0].mxu0
        %2777 = vdwg.mxu0
        %v2778 = vadd.f32 %v2645, %v2690
        %v2779 = vxor.u32 %v2778, 2147483648
        %v2780 = vmul.f32 %v2779, 1.442695
        %v2781 = vpow.pop %v2780
        %v2782 = vadd.f32 %v2781, 1.0
        %v2783 = vrcp.pop %v2782
        %v2784 = vmul.f32 1.0, %v2783
        %v2785 = vadd.f32 %v2646, %v2692
        %v2786 = vxor.u32 %v2785, 2147483648
        %v2787 = vmul.f32 %v2786, 1.442695
        %v2788 = vpow.pop %v2787
        %v2789 = vadd.f32 %v2788, 1.0
        %v2790 = vrcp.pop %v2789
        %v2791 = vmul.f32 1.0, %v2790
        %v2792 = vmul.f32 %v2784, %v2731
        %v2793 = vadd.f32 %v2647, %v2792
        %v2794 = vtanh.pop %v2793
        %v2795 = vsub.f32 %v2640, %v2794
        %v2796 = vmul.f32 %v2791, %v2795
        %v2797 = vadd.f32 %v2794, %v2796
        %v2798 = vadd.f32 %v2650, %v2733
        %v2799 = vxor.u32 %v2798, 2147483648
        %v2800 = vmul.f32 %v2799, 1.442695
        %v2801 = vpow.pop %v2800
        %v2802 = vadd.f32 %v2801, 1.0
        %v2803 = vrcp.pop %v2802
        %v2804 = vmul.f32 1.0, %v2803
        %v2805 = vadd.f32 %v2651, %v2772
        %v2806 = vxor.u32 %v2805, 2147483648
        %v2807 = vmul.f32 %v2806, 1.442695
        %v2808 = vpow.pop %v2807
        %v2809 = vadd.f32 %v2808, 1.0
        %v2810 = vrcp.pop %v2809
        %v2811 = vmul.f32 1.0, %v2810
        %v2812 = vmul.f32 %v2804, %v2774
        %v2813 = vadd.f32 %v2652, %v2812
        %v2814 = vtanh.pop %v2813
        %v2815 = vsub.f32 %v2641, %v2814
        %v2816 = vmul.f32 %v2811, %v2815
        %v2817 = vadd.f32 %v2814, %v2816
        %s2818 = sadd.s32 %s1526, 3
        %v2819 = vstv %s2818
        %vm2820 = vcmp.gt.s32.totalorder %v1525, %v2819
        %v2821 = vstv %s1528
        %vm2822 = vcmp.gt.s32.totalorder %v1525, %v2821
        %v2823 = vsel %vm2820, 1, 0
        %2824 = vset.pattern.permute.xlu0 0
        %2825 = vperm.xlu0 %2824, %v2823
        %v2826 = vpop.permute.xlu0 %2825
        %vm2827 = vcmp.eq.s32.totalorder %v2826, 1
        %v2828 = vsel %vm2827, %v2797, 0.0
        %s2829 = scalar_lea.vmem %s641, 24 [#allocation17]
        %2830 = vst [vmem:[%s2829] sm:$0xff] %v2828
        %v2831 = vsel %vm2822, 1, 0
        %2832 = vset.pattern.permute.xlu0 0
        %2833 = vperm.xlu0 %2832, %v2831
        %v2834 = vpop.permute.xlu0 %2833
        %vm2835 = vcmp.eq.s32.totalorder %v2834, 1
        %v2836 = vsel %vm2835, %v2817, 0.0
        %2837 = vst [vmem:[%s648] sm:$0xff] %v2836
        %v2838 = vsel %vm2827, %v2797, %v2640
        %v2839 = vsel %vm2835, %v2817, %v2641
        %2840 = vst [vmem:[#allocation4] sm:$0xff] %v2838
        %2841 = vst [vmem:[#allocation5] sm:$0xff] %v2839
        %2842 = vst [vmem:[#allocation20] sm:$0xff] %v2838
        %s2843 = scalar_lea.vmem [#allocation20], 8
        %2844 = vst [vmem:[%s2843] sm:$0xff] %v2839
        %s2845 = sand.u32 %s320, 1
        %s2846 = scalar_lea.sflag [#allocation8], %s2845
        %s2847 = sand.u32 %s320, 1
        %s2848 = smul.addr %s2847, 32
        %s2849 = scalar_lea.vmem [#allocation17], %s2848
        %s2850 = sand.u32 %s41, 1
        %s2851 = scalar_lea.sflag [#allocation19], %s2850
        %s2852 = sand.u32 %s350, 1
        %s2853 = smul.addr %s2852, 32
        %s2854 = scalar_lea.vmem [#allocation18], %s2853
        // Predicated region
        $region93: #{tpu_custom_call.1} parent=63 // pred_check
          %p2855 = pneg %p330
        $region94: #{tpu_custom_call.1} parent=63 // pred_check_branch
          %2857 = sbr.rel (%p2855) target = $region96
        $region95: #{tpu_custom_call.1} parent=63 // pred_region
          %s2858 = smul.u32 4, %s46
          %s2860 = ssub.s32 512, 512
          %2861 = vsyncadd %s2846, %s2860
          %s2862 = sadd.s32 %s45, %s2858
          %s2863 = smul.addr %s2862, 128
          %s2864 = scalar_lea.hbm %s11, %s2863
          %s2865 = sshll.u32 %s2849, 4
          %s2866 = int_to_ptr.vmem [resolvable:$true] %s2865
          %2871 = dma.vmem_to_hbm [thread:$0]  %s2866, 512, %s2864, %s2846, 128, 128, 8
        $region96: #{tpu_custom_call.1} parent=63 // pred_fallthru
          _
        // Predicated region
        $region97: #{tpu_custom_call.1} parent=63 // pred_check
          %p2872 = pneg %p360
        $region98: #{tpu_custom_call.1} parent=63 // pred_check_branch
          %2874 = sbr.rel (%p2872) target = $region100
        $region99: #{tpu_custom_call.1} parent=63 // pred_region
          %s2875 = ssub.s32 1, %s46
          %s2876 = smul.u32 4, %s2875
          %s2878 = ssub.s32 512, 512
          %2879 = vsyncadd %s2851, %s2878
          %s2880 = sadd.s32 %s45, %s2876
          %s2881 = smul.addr %s2880, 128
          %s2882 = scalar_lea.hbm %s12, %s2881
          %s2883 = sshll.u32 %s2854, 4
          %s2884 = int_to_ptr.vmem [resolvable:$true] %s2883
          %2889 = dma.vmem_to_hbm [thread:$0]  %s2884, 512, %s2882, %s2851, 128, 128, 8
        $region100: #{tpu_custom_call.1} parent=63 // pred_fallthru
          _
        // Predicated region
        $region101: #{tpu_custom_call.1} parent=63 // pred_check
          %p2890 = pneg %p386
        $region102: #{tpu_custom_call.1} parent=63 // pred_check_branch
          %2892 = sbr.rel (%p2890) target = $region104
        $region103: #{tpu_custom_call.1} parent=63 // pred_region
          %s2894 = ssub.s32 256, 256
          %2895 = vsyncadd [#allocation19], %s2894
          %s2896 = smul.addr %s45, 128
          %s2897 = scalar_lea.hbm %s13, %s2896
          %s2898 = sshll.u32 [#allocation20], 4
          %s2899 = int_to_ptr.vmem [resolvable:$true] %s2898
          %2904 = dma.vmem_to_hbm [thread:$0]  %s2899, 256, %s2897, [#allocation19], 128, 128, 8
        $region104: #{tpu_custom_call.1} parent=63 // pred_fallthru
          _
        // Predicated region
        $region105: #{tpu_custom_call.1} parent=63 // pred_check
          %p2905 = pneg %p412
        $region106: #{tpu_custom_call.1} parent=63 // pred_check_branch
          %2907 = sbr.rel (%p2905) target = $region108
        $region107: #{tpu_custom_call.1} parent=63 // pred_region
          %s2909 = ssub.s32 128, 128
          %2910 = vsyncadd [#allocation22], %s2909
          %s2911 = smul.addr %s45, 128
          %s2912 = scalar_lea.hbm %s14, %s2911
          %s2914 = sshll.u32 [#allocation21], 4
          %s2915 = int_to_ptr.vmem [resolvable:$true] %s2914
          %2917 = dma.vmem_to_hbm [thread:$0]  %s2915, 128, %s2912, [#allocation22]
        $region108: #{tpu_custom_call.1} parent=63 // pred_fallthru
          _
        // Predicated region
        $region109: #{tpu_custom_call.1} parent=63 // pred_check
          %p2918 = pneg %p386
        $region110: #{tpu_custom_call.1} parent=63 // pred_check_branch
          %2920 = sbr.rel (%p2918) target = $region112
        $region111: #{tpu_custom_call.1} parent=63 // pred_region
          %2921 = dma.done [#allocation19], 256
        $region112: #{tpu_custom_call.1} parent=63 // pred_fallthru
          _
        // Predicated region
        $region113: #{tpu_custom_call.1} parent=63 // pred_check
          %p2922 = pneg %p412
        $region114: #{tpu_custom_call.1} parent=63 // pred_check_branch
          %2924 = sbr.rel (%p2922) target = $region116
        $region115: #{tpu_custom_call.1} parent=63 // pred_region
          %2925 = dma.done [#allocation22], 128
        $region116: #{tpu_custom_call.1} parent=63 // pred_fallthru
          _
      $region64: #{tpu_custom_call.1} parent=5 // pred_fallthru
        _
      %p2926 = scmp.le.s32.totalorder 2, %s36
      // Predicated region
      $region117: #{tpu_custom_call.1} parent=5 // pred_check
        %p2927 = pneg %p2926
      $region118: #{tpu_custom_call.1} parent=5 // pred_check_branch
        %2929 = sbr.rel (%p2927) target = $region120
      $region119: #{tpu_custom_call.1} parent=5 // pred_region
        %s2930 = ssub.s32 %s36, 2
        // Predicated region
        $region121: #{tpu_custom_call.1} parent=119 // pred_check
          %p2931 = pneg %p336
        $region122: #{tpu_custom_call.1} parent=119 // pred_check_branch
          %2933 = sbr.rel (%p2931) target = $region124
        $region123: #{tpu_custom_call.1} parent=119 // pred_region
          %s2934 = sand.u32 %s321, 1
          %s2935 = scalar_lea.sflag [#allocation8], %s2934
          %s2936 = sand.u32 %s321, 1
          %s2937 = smul.addr %s2936, 32
          %s2938 = scalar_lea.vmem [#allocation17], %s2937
          %2939 = dma.done %s2935, 512
        $region124: #{tpu_custom_call.1} parent=119 // pred_fallthru
          _
        // Predicated region
        $region125: #{tpu_custom_call.1} parent=119 // pred_check
          %p2940 = pneg %p366
        $region126: #{tpu_custom_call.1} parent=119 // pred_check_branch
          %2942 = sbr.rel (%p2940) target = $region128
        $region127: #{tpu_custom_call.1} parent=119 // pred_region
          %s2943 = sand.u32 %s42, 1
          %s2944 = scalar_lea.sflag [#allocation19], %s2943
          %s2945 = sand.u32 %s351, 1
          %s2946 = smul.addr %s2945, 32
          %s2947 = scalar_lea.vmem [#allocation18], %s2946
          %2948 = dma.done %s2944, 512
        $region128: #{tpu_custom_call.1} parent=119 // pred_fallthru
          _
      $region120: #{tpu_custom_call.1} parent=5 // pred_fallthru
        _
    $region6: #{tpu_custom_call.1} parent=1 // loop_footer
      %s40 = sadd.s32 1, %s36
    $region7: #{tpu_custom_call.1} parent=1 // loop_footer_branch
      %35 = sbr.rel target = $region3
    $region8: #{tpu_custom_call.1} parent=1 // loop_exit
      _
    %2949 = vsyncpa [#allocation7], 1
    %s2950 = scalar_lea.sflag [#allocation7], 1
    %2951 = vsyncpa %s2950, 1
    %2952 = vsyncpa [#allocation10], 1
    %s2953 = scalar_lea.sflag [#allocation10], 1
    %2954 = vsyncpa %s2953, 1
    %2955 = vsyncpa [#allocation13], 1
    %2956 = vsyncpa [#allocation16], 1
    %2957 = vsyncpa [#allocation8], 1
    %s2958 = scalar_lea.sflag [#allocation8], 1
    %2959 = vsyncpa %s2958, 1
    %2960 = vsyncpa [#allocation19], 1
    %s2961 = scalar_lea.sflag [#allocation19], 1
    %2962 = vsyncpa %s2961, 1
    %2963 = vsyncpa [#allocation22], 1

</llo_original>
